<compile_context>
chip_gen: v6e
topology: v6e:2x2x1
jax: 0.10.0
libtpu: 0.0.40
codegen_flags: <defaults>
</compile_context>

<pallas_src>
import jax
import jax.numpy as jnp
from jax.experimental import pallas as pl
from jax.experimental.pallas import tpu as pltpu

# ---- model hyperparameters (small, consistent with the module) ----
B = 2            # batch
S_T = 8          # target sequence length (decoder input x)
S_M = 8          # source sequence length (encoder memory)
D = 32           # d_model (layer.size)
H = 4            # attention heads
DK = D // H      # per-head dim
DFF = 64         # feed-forward hidden dim
NLAYERS = 2      # Decoder N
EPS = 1e-6       # LayerNorm eps (added to std, not var)

R_T = B * S_T    # fused target rows   (16)
R_M = B * S_M    # fused memory rows   (16)

# rows of the packed per-layer vector slab
(LN1_A, LN1_B, LN2_A, LN2_B, LN3_A, LN3_B,
 B_SELF_O, B_CROSS_Q, B_CROSS_O, B_FF2) = range(10)


def decoder_kernel(x_ref, mem_ref, sbias_ref, cbias_ref, hmt_ref, hmm_ref,
                   wqkv_ref, wddd_ref, wkv_ref, w1_ref, w2_ref,
                   bqkv_ref, bkv_ref, b1_ref, vecs_ref, fnab_ref,
                   o_ref):
    x = x_ref[...]                               # (R_T, D) f32, batch-fused
    mem_bf = mem_ref[...].astype(jnp.bfloat16)   # (R_M, D) bf16 (MXU operand)
    sbias = sbias_ref[...]                       # (H*R_T, H*R_T) additive bias
    cbias = cbias_ref[...]                       # (H*R_T, H*R_M) additive bias
    hmt = hmt_ref[...]                           # (H*R_T, D) 0/1 head-col mask
    hmm = hmm_ref[...]                           # (H*R_M, D) 0/1 head-col mask
    scale = jnp.float32(1.0 / (DK ** 0.5))

    def layernorm(v, a, b):
        # matches torch: a*(v-mean)/(std+eps)+b, std with ddof=1; exact divide
        mean = jnp.mean(v, axis=-1, keepdims=True)
        var = jnp.sum((v - mean) ** 2, axis=-1, keepdims=True) * (1.0 / (D - 1))
        std = jnp.sqrt(var)
        return a * (v - mean) / (std + EPS) + b

    def mha(q, k, v, bias, hmask, wo, rq):
        # q: (rq, D) f32 already scaled; k/v: (rk, D) f32
        # bias: (H*rq, H*rk) additive (0 / -1e9), block-diag over batch & head
        # hmask: (H*rk, D) 0/1 — row block h keeps only columns of head h
        # wo: (D, D) bf16
        qp = jnp.concatenate([q] * H, axis=0).astype(jnp.bfloat16)            # (H*rq, D)
        kp = (jnp.concatenate([k] * H, axis=0) * hmask).astype(jnp.bfloat16)  # (H*rk, D)
        vp = (jnp.concatenate([v] * H, axis=0) * hmask).astype(jnp.bfloat16)  # (H*rk, D)
        # one score matmul for all heads; K fed transposed (no XLU transpose)
        s = jax.lax.dot_general(qp, kp, (((1,), (1,)), ((), ())),
                                preferred_element_type=jnp.float32) + bias
        m = jnp.max(s, axis=-1, keepdims=True)
        e = jnp.exp(s - m)                        # masked entries underflow to 0
        p = e * pl.reciprocal(jnp.sum(e, axis=-1, keepdims=True), approx=True)
        ctxw = jnp.dot(p.astype(jnp.bfloat16), vp,
                       preferred_element_type=jnp.float32)                    # (H*rq, D)
        # per-head context blocks are zero outside their head's columns ->
        # summing blocks reproduces the concat(heads) layout
        ctx = ctxw[0:rq]
        for h in range(1, H):
            ctx = ctx + ctxw[h * rq:(h + 1) * rq]
        return jnp.dot(ctx.astype(jnp.bfloat16), wo,
                       preferred_element_type=jnp.float32)                    # (rq, D)

    for l in range(NLAYERS):                      # static unroll over layers
        vl = vecs_ref[l]                          # (10, D) packed vectors

        # ---- sublayer 0: x + self_attn(norm(x), tgt_mask) ----
        xn = layernorm(x, vl[LN1_A:LN1_A + 1], vl[LN1_B:LN1_B + 1]).astype(jnp.bfloat16)
        qkv = jnp.dot(xn, wqkv_ref[l], preferred_element_type=jnp.float32) + bqkv_ref[l]
        q, k, v = qkv[:, :D], qkv[:, D:2 * D], qkv[:, 2 * D:]
        x = x + mha(q * scale, k, v, sbias, hmt, wddd_ref[l, 0], R_T) \
              + vl[B_SELF_O:B_SELF_O + 1]

        # ---- sublayer 1: x + src_attn(norm(x), memory, src_mask) ----
        xn = layernorm(x, vl[LN2_A:LN2_A + 1], vl[LN2_B:LN2_B + 1]).astype(jnp.bfloat16)
        qc = jnp.dot(xn, wddd_ref[l, 1], preferred_element_type=jnp.float32) \
             + vl[B_CROSS_Q:B_CROSS_Q + 1]
        kv = jnp.dot(mem_bf, wkv_ref[l], preferred_element_type=jnp.float32) + bkv_ref[l]
        kc, vc = kv[:, :D], kv[:, D:]
        x = x + mha(qc * scale, kc, vc, cbias, hmm, wddd_ref[l, 2], R_T) \
              + vl[B_CROSS_O:B_CROSS_O + 1]

        # ---- sublayer 2: x + ffn(norm(x)) ----
        xn = layernorm(x, vl[LN3_A:LN3_A + 1], vl[LN3_B:LN3_B + 1]).astype(jnp.bfloat16)
        h1 = jnp.dot(xn, w1_ref[l], preferred_element_type=jnp.float32) + b1_ref[l]
        h1 = jnp.maximum(h1, 0.0)                 # ReLU
        x = x + jnp.dot(h1.astype(jnp.bfloat16), w2_ref[l],
                        preferred_element_type=jnp.float32) + vl[B_FF2:B_FF2 + 1]

    # ---- final Decoder LayerNorm ----
    fnab = fnab_ref[...]                          # (2, D)
    o_ref[...] = layernorm(x, fnab[0:1], fnab[1:2])


def decoder_forward(x, memory, self_bias, cross_bias, hmask_t, hmask_m, params):
    """x: (B, S_T, D), memory: (B, S_M, D); biases/masks from build_attention_inputs."""
    xf = x.reshape(R_T, D)
    mf = memory.reshape(R_M, D)
    inputs = (xf, mf, self_bias, cross_bias, hmask_t, hmask_m, *params)
    # Single grid-less invocation; every operand pinned to VMEM explicitly.
    out = pl.pallas_call(
        decoder_kernel,
        out_shape=jax.ShapeDtypeStruct((R_T, D), jnp.float32),
        in_specs=[pl.BlockSpec(memory_space=pltpu.MemorySpace.VMEM)
                  for _ in range(len(inputs))],
        out_specs=pl.BlockSpec(memory_space=pltpu.MemorySpace.VMEM),
    )(*inputs)
    return out.reshape(B, S_T, D)


def build_attention_inputs(tgt_valid, src_valid):
    """Additive biases (block-diagonal over batch AND head) for the fused
    (head-major, batch-fused-row) layout, plus the 0/1 head-column masks
    applied to the replicated K/V operands.

    small self bias[i,j] = 0 if same batch & key_pos<=query_pos & key valid else -1e9
    small cross bias[i,j] = 0 if same batch & src key valid else -1e9
    (matches masked_fill(mask == 0, -1e9) with tgt_mask = pad & subsequent,
     src_mask = pad).
    """
    bt = jnp.repeat(jnp.arange(B), S_T)            # batch id per target row
    pt = jnp.tile(jnp.arange(S_T), B)              # position within batch
    bm = jnp.repeat(jnp.arange(B), S_M)            # batch id per memory row

    same_tt = bt[:, None] == bt[None, :]
    causal = pt[None, :] <= pt[:, None]
    key_valid_t = tgt_valid.reshape(-1)[None, :]
    self_small = jnp.where(same_tt & causal & key_valid_t, 0.0, -1e9
                           ).astype(jnp.float32)   # (R_T, R_T)

    same_tm = bt[:, None] == bm[None, :]
    key_valid_m = src_valid.reshape(-1)[None, :]
    cross_small = jnp.where(same_tm & key_valid_m, 0.0, -1e9
                            ).astype(jnp.float32)  # (R_T, R_M)

    head_eye = jnp.eye(H, dtype=bool)              # block-diag over heads
    self_bias = jnp.where(head_eye[:, None, :, None],
                          self_small[None, :, None, :],
                          jnp.float32(-1e9)).reshape(H * R_T, H * R_T)
    cross_bias = jnp.where(head_eye[:, None, :, None],
                           cross_small[None, :, None, :],
                           jnp.float32(-1e9)).reshape(H * R_T, H * R_M)

    # head-column masks: row block h keeps only columns [h*DK, (h+1)*DK)
    head_of_col = jnp.arange(D) // DK              # (D,)
    hm = (jnp.arange(H)[:, None] == head_of_col[None, :]).astype(jnp.float32)  # (H, D)
    hmask_t = jnp.repeat(hm, R_T, axis=0)          # (H*R_T, D) for self-attn keys
    hmask_m = jnp.repeat(hm, R_M, axis=0)          # (H*R_M, D) for cross-attn keys
    return self_bias, cross_bias, hmask_t, hmask_m


def init_params(key):
    """Deterministic synthetic weights packed into a few slabs.
    Linear weights are stored (in, out) so the kernel computes x @ W + b
    (equivalent to torch's x @ W.T + b).  Weight matrices are pre-cast to
    bfloat16 so every MXU push is a single-pass bf16 matmul (f32 accumulate)."""
    ks = jax.random.split(key, 8)
    nrm = lambda k, shp: jax.random.normal(k, shp, jnp.float32) * 0.02
    bf = jnp.bfloat16

    w_qkv = nrm(ks[0], (NLAYERS, D, 3 * D)).astype(bf)   # fused self-attn Q|K|V
    w_ddd = nrm(ks[1], (NLAYERS, 3, D, D)).astype(bf)    # [self W_o, cross W_q, cross W_o]
    w_kv = nrm(ks[2], (NLAYERS, D, 2 * D)).astype(bf)    # fused cross-attn K|V
    w_ff1 = nrm(ks[3], (NLAYERS, D, DFF)).astype(bf)
    w_ff2 = nrm(ks[4], (NLAYERS, DFF, D)).astype(bf)
    b_qkv = nrm(ks[5], (NLAYERS, 1, 3 * D))
    b_kv = nrm(ks[6], (NLAYERS, 1, 2 * D))
    b_ff1 = nrm(ks[7], (NLAYERS, 1, DFF))

    ones = jnp.ones((NLAYERS, 1, D), jnp.float32)
    zeros = jnp.zeros((NLAYERS, 1, D), jnp.float32)
    # rows: ln1_a, ln1_b, ln2_a, ln2_b, ln3_a, ln3_b, b_self_o, b_cross_q, b_cross_o, b_ff2
    vecs = jnp.concatenate([ones, zeros, ones, zeros, ones, zeros,
                            zeros, zeros, zeros, zeros], axis=1)   # (NL, 10, D)
    fn_ab = jnp.concatenate([jnp.ones((1, D), jnp.float32),
                             jnp.zeros((1, D), jnp.float32)], axis=0)  # (2, D)

    return [w_qkv, w_ddd, w_kv, w_ff1, w_ff2, b_qkv, b_kv, b_ff1, vecs, fn_ab]


if __name__ == "__main__":
    key = jax.random.PRNGKey(0)
    k_x, k_m, k_p = jax.random.split(key, 3)

    x = jax.random.normal(k_x, (B, S_T, D), jnp.float32)
    memory = jax.random.normal(k_m, (B, S_M, D), jnp.float32)

    # deterministic valid lengths: tgt lengths (6, 8), src lengths (5, 8)
    tgt_len = jnp.array([6, 8], jnp.int32)
    src_len = jnp.array([5, 8], jnp.int32)
    tgt_valid = jnp.arange(S_T)[None, :] < tgt_len[:, None]   # (B, S_T) bool
    src_valid = jnp.arange(S_M)[None, :] < src_len[:, None]   # (B, S_M) bool

    self_bias, cross_bias, hmask_t, hmask_m = build_attention_inputs(tgt_valid, src_valid)
    params = init_params(k_p)

    out = decoder_forward(x, memory, self_bias, cross_bias, hmask_t, hmask_m, params)
    jax.block_until_ready(out)
    assert out.shape == (B, S_T, D)
    print("KERNEL_OK")
</pallas_src>

<mosaic_0001>
module attributes {stable_mosaic.version = 11 : i64} {
  func.func @decoder_kernel(%arg0: memref<16x32xf32, #tpu.memory_space<vmem>>, %arg1: memref<16x32xf32, #tpu.memory_space<vmem>>, %arg2: memref<64x64xf32, #tpu.memory_space<vmem>>, %arg3: memref<64x64xf32, #tpu.memory_space<vmem>>, %arg4: memref<64x32xf32, #tpu.memory_space<vmem>>, %arg5: memref<64x32xf32, #tpu.memory_space<vmem>>, %arg6: memref<2x32x96xbf16, #tpu.memory_space<vmem>>, %arg7: memref<2x3x32x32xbf16, #tpu.memory_space<vmem>>, %arg8: memref<2x32x64xbf16, #tpu.memory_space<vmem>>, %arg9: memref<2x32x64xbf16, #tpu.memory_space<vmem>>, %arg10: memref<2x64x32xbf16, #tpu.memory_space<vmem>>, %arg11: memref<2x1x96xf32, #tpu.memory_space<vmem>>, %arg12: memref<2x1x64xf32, #tpu.memory_space<vmem>>, %arg13: memref<2x1x64xf32, #tpu.memory_space<vmem>>, %arg14: memref<2x10x32xf32, #tpu.memory_space<vmem>>, %arg15: memref<2x32xf32, #tpu.memory_space<vmem>>, %arg16: memref<16x32xf32, #tpu.memory_space<vmem>>) attributes {dimension_semantics = [], scalar_prefetch = 0 : i64, scratch_operands = 0 : i64, tpu.core_type = #tpu.core_type<tc>} {
    %c0 = arith.constant 0 : index
    %c0_0 = arith.constant 0 : index
    %0 = vector.load %arg0[%c0, %c0_0] : memref<16x32xf32, #tpu.memory_space<vmem>>, vector<16x32xf32>
    %c0_1 = arith.constant 0 : index
    %c0_2 = arith.constant 0 : index
    %1 = vector.load %arg1[%c0_1, %c0_2] : memref<16x32xf32, #tpu.memory_space<vmem>>, vector<16x32xf32>
    %2 = arith.truncf %1 : vector<16x32xf32> to vector<16x32xbf16>
    %c0_3 = arith.constant 0 : index
    %c0_4 = arith.constant 0 : index
    %3 = vector.load %arg2[%c0_3, %c0_4] : memref<64x64xf32, #tpu.memory_space<vmem>>, vector<64x64xf32>
    %c0_5 = arith.constant 0 : index
    %c0_6 = arith.constant 0 : index
    %4 = vector.load %arg3[%c0_5, %c0_6] : memref<64x64xf32, #tpu.memory_space<vmem>>, vector<64x64xf32>
    %c0_7 = arith.constant 0 : index
    %c0_8 = arith.constant 0 : index
    %5 = vector.load %arg4[%c0_7, %c0_8] : memref<64x32xf32, #tpu.memory_space<vmem>>, vector<64x32xf32>
    %c0_9 = arith.constant 0 : index
    %c0_10 = arith.constant 0 : index
    %6 = vector.load %arg5[%c0_9, %c0_10] : memref<64x32xf32, #tpu.memory_space<vmem>>, vector<64x32xf32>
    %c0_11 = arith.constant 0 : index
    %c0_12 = arith.constant 0 : index
    %c0_13 = arith.constant 0 : index
    %7 = vector.load %arg14[%c0_11, %c0_12, %c0_13] : memref<2x10x32xf32, #tpu.memory_space<vmem>>, vector<1x10x32xf32>
    %8 = vector.shape_cast %7 : vector<1x10x32xf32> to vector<10x32xf32>
    %9 = vector.extract_strided_slice %8 {offsets = [0, 0], sizes = [1, 32], strides = [1, 1]} : vector<10x32xf32> to vector<1x32xf32>
    %10 = vector.extract_strided_slice %8 {offsets = [1, 0], sizes = [1, 32], strides = [1, 1]} : vector<10x32xf32> to vector<1x32xf32>
    %cst = arith.constant dense<0.000000e+00> : vector<16xf32>
    %11 = vector.multi_reduction <add>, %0, %cst [1] : vector<16x32xf32> to vector<16xf32>
    %12 = vector.shape_cast %11 : vector<16xf32> to vector<16x1xf32>
    %cst_14 = arith.constant 3.200000e+01 : f32
    %13 = vector.broadcast %cst_14 : f32 to vector<16x1xf32>
    %14 = arith.divf %12, %13 : vector<16x1xf32>
    %15 = vector.broadcast %14 : vector<16x1xf32> to vector<16x32xf32>
    %16 = arith.subf %0, %15 : vector<16x32xf32>
    %17 = arith.mulf %16, %16 : vector<16x32xf32>
    %cst_15 = arith.constant dense<0.000000e+00> : vector<16xf32>
    %18 = vector.multi_reduction <add>, %17, %cst_15 [1] : vector<16x32xf32> to vector<16xf32>
    %19 = vector.shape_cast %18 : vector<16xf32> to vector<16x1xf32>
    %cst_16 = arith.constant 0.0322580636 : f32
    %20 = vector.broadcast %cst_16 : f32 to vector<16x1xf32>
    %21 = arith.mulf %19, %20 : vector<16x1xf32>
    %22 = math.sqrt %21 : vector<16x1xf32>
    %23 = vector.broadcast %14 : vector<16x1xf32> to vector<16x32xf32>
    %24 = arith.subf %0, %23 : vector<16x32xf32>
    %25 = vector.broadcast %9 : vector<1x32xf32> to vector<16x32xf32>
    %26 = arith.mulf %25, %24 : vector<16x32xf32>
    %cst_17 = arith.constant 9.99999997E-7 : f32
    %27 = vector.broadcast %cst_17 : f32 to vector<16x1xf32>
    %28 = arith.addf %22, %27 : vector<16x1xf32>
    %29 = vector.broadcast %28 : vector<16x1xf32> to vector<16x32xf32>
    %30 = arith.divf %26, %29 : vector<16x32xf32>
    %31 = vector.broadcast %10 : vector<1x32xf32> to vector<16x32xf32>
    %32 = arith.addf %30, %31 : vector<16x32xf32>
    %33 = arith.truncf %32 : vector<16x32xf32> to vector<16x32xbf16>
    %c0_18 = arith.constant 0 : index
    %c0_19 = arith.constant 0 : index
    %c0_20 = arith.constant 0 : index
    %34 = vector.load %arg6[%c0_18, %c0_19, %c0_20] : memref<2x32x96xbf16, #tpu.memory_space<vmem>>, vector<1x32x96xbf16>
    %35 = vector.shape_cast %34 : vector<1x32x96xbf16> to vector<32x96xbf16>
    %cst_21 = arith.constant dense<0.000000e+00> : vector<16x96xf32>
    %36 = tpu.matmul %33, %35, %cst_21 {dimension_numbers = #tpu.dot_dimension_numbers<[1], [0], [0], [1], [0, 0, 1, 1], [], []>} : vector<16x32xbf16>, vector<32x96xbf16>, vector<16x96xf32> -> vector<16x96xf32>
    %c0_22 = arith.constant 0 : index
    %c0_23 = arith.constant 0 : index
    %c0_24 = arith.constant 0 : index
    %37 = vector.load %arg11[%c0_22, %c0_23, %c0_24] : memref<2x1x96xf32, #tpu.memory_space<vmem>>, vector<1x1x96xf32>
    %38 = vector.shape_cast %37 : vector<1x1x96xf32> to vector<1x96xf32>
    %39 = vector.broadcast %38 : vector<1x96xf32> to vector<16x96xf32>
    %40 = arith.addf %36, %39 : vector<16x96xf32>
    %41 = vector.extract_strided_slice %40 {offsets = [0, 0], sizes = [16, 32], strides = [1, 1]} : vector<16x96xf32> to vector<16x32xf32>
    %42 = vector.extract_strided_slice %40 {offsets = [0, 32], sizes = [16, 32], strides = [1, 1]} : vector<16x96xf32> to vector<16x32xf32>
    %43 = vector.extract_strided_slice %40 {offsets = [0, 64], sizes = [16, 32], strides = [1, 1]} : vector<16x96xf32> to vector<16x32xf32>
    %cst_25 = arith.constant 0.353553385 : f32
    %44 = vector.broadcast %cst_25 : f32 to vector<16x32xf32>
    %45 = arith.mulf %41, %44 : vector<16x32xf32>
    %c0_26 = arith.constant 0 : index
    %c0_27 = arith.constant 0 : index
    %c0_28 = arith.constant 0 : index
    %c0_29 = arith.constant 0 : index
    %46 = vector.load %arg7[%c0_26, %c0_27, %c0_28, %c0_29] : memref<2x3x32x32xbf16, #tpu.memory_space<vmem>>, vector<1x1x32x32xbf16>
    %47 = vector.shape_cast %46 : vector<1x1x32x32xbf16> to vector<32x32xbf16>
    %48 = tpu.concatenate %45, %45, %45, %45 in 0 : vector<16x32xf32>, vector<16x32xf32>, vector<16x32xf32>, vector<16x32xf32> -> vector<64x32xf32>
    %49 = arith.truncf %48 : vector<64x32xf32> to vector<64x32xbf16>
    %50 = tpu.concatenate %42, %42, %42, %42 in 0 : vector<16x32xf32>, vector<16x32xf32>, vector<16x32xf32>, vector<16x32xf32> -> vector<64x32xf32>
    %51 = arith.mulf %50, %5 : vector<64x32xf32>
    %52 = arith.truncf %51 : vector<64x32xf32> to vector<64x32xbf16>
    %53 = tpu.concatenate %43, %43, %43, %43 in 0 : vector<16x32xf32>, vector<16x32xf32>, vector<16x32xf32>, vector<16x32xf32> -> vector<64x32xf32>
    %54 = arith.mulf %53, %5 : vector<64x32xf32>
    %55 = arith.truncf %54 : vector<64x32xf32> to vector<64x32xbf16>
    %cst_30 = arith.constant dense<0.000000e+00> : vector<64x64xf32>
    %56 = tpu.matmul %49, %52, %cst_30 {dimension_numbers = #tpu.dot_dimension_numbers<[1], [1], [0], [0], [0, 0, 1, 0], [], []>} : vector<64x32xbf16>, vector<64x32xbf16>, vector<64x64xf32> -> vector<64x64xf32>
    %57 = arith.addf %56, %3 : vector<64x64xf32>
    %cst_31 = arith.constant dense<0xFF800000> : vector<64xf32>
    %58 = vector.multi_reduction <maximumf>, %57, %cst_31 [1] : vector<64x64xf32> to vector<64xf32>
    %59 = vector.shape_cast %58 : vector<64xf32> to vector<64x1xf32>
    %60 = vector.broadcast %59 : vector<64x1xf32> to vector<64x64xf32>
    %61 = arith.subf %57, %60 : vector<64x64xf32>
    %62 = math.exp %61 : vector<64x64xf32>
    %cst_32 = arith.constant dense<0.000000e+00> : vector<64xf32>
    %63 = vector.multi_reduction <add>, %62, %cst_32 [1] : vector<64x64xf32> to vector<64xf32>
    %64 = vector.shape_cast %63 : vector<64xf32> to vector<64x1xf32>
    %65 = tpu.reciprocal %64 {approx = true} : vector<64x1xf32> -> vector<64x1xf32>
    %66 = vector.broadcast %65 : vector<64x1xf32> to vector<64x64xf32>
    %67 = arith.mulf %62, %66 : vector<64x64xf32>
    %68 = arith.truncf %67 : vector<64x64xf32> to vector<64x64xbf16>
    %cst_33 = arith.constant dense<0.000000e+00> : vector<64x32xf32>
    %69 = tpu.matmul %68, %55, %cst_33 {dimension_numbers = #tpu.dot_dimension_numbers<[1], [0], [0], [1], [0, 0, 1, 1], [], []>} : vector<64x64xbf16>, vector<64x32xbf16>, vector<64x32xf32> -> vector<64x32xf32>
    %70 = vector.extract_strided_slice %69 {offsets = [0, 0], sizes = [16, 32], strides = [1, 1]} : vector<64x32xf32> to vector<16x32xf32>
    %71 = vector.extract_strided_slice %69 {offsets = [16, 0], sizes = [16, 32], strides = [1, 1]} : vector<64x32xf32> to vector<16x32xf32>
    %72 = arith.addf %70, %71 : vector<16x32xf32>
    %73 = vector.extract_strided_slice %69 {offsets = [32, 0], sizes = [16, 32], strides = [1, 1]} : vector<64x32xf32> to vector<16x32xf32>
    %74 = arith.addf %72, %73 : vector<16x32xf32>
    %75 = vector.extract_strided_slice %69 {offsets = [48, 0], sizes = [16, 32], strides = [1, 1]} : vector<64x32xf32> to vector<16x32xf32>
    %76 = arith.addf %74, %75 : vector<16x32xf32>
    %77 = arith.truncf %76 : vector<16x32xf32> to vector<16x32xbf16>
    %cst_34 = arith.constant dense<0.000000e+00> : vector<16x32xf32>
    %78 = tpu.matmul %77, %47, %cst_34 {dimension_numbers = #tpu.dot_dimension_numbers<[1], [0], [0], [1], [0, 0, 1, 1], [], []>} : vector<16x32xbf16>, vector<32x32xbf16>, vector<16x32xf32> -> vector<16x32xf32>
    %79 = arith.addf %0, %78 : vector<16x32xf32>
    %80 = vector.extract_strided_slice %8 {offsets = [6, 0], sizes = [1, 32], strides = [1, 1]} : vector<10x32xf32> to vector<1x32xf32>
    %81 = vector.broadcast %80 : vector<1x32xf32> to vector<16x32xf32>
    %82 = arith.addf %79, %81 : vector<16x32xf32>
    %83 = vector.extract_strided_slice %8 {offsets = [2, 0], sizes = [1, 32], strides = [1, 1]} : vector<10x32xf32> to vector<1x32xf32>
    %84 = vector.extract_strided_slice %8 {offsets = [3, 0], sizes = [1, 32], strides = [1, 1]} : vector<10x32xf32> to vector<1x32xf32>
    %cst_35 = arith.constant dense<0.000000e+00> : vector<16xf32>
    %85 = vector.multi_reduction <add>, %82, %cst_35 [1] : vector<16x32xf32> to vector<16xf32>
    %86 = vector.shape_cast %85 : vector<16xf32> to vector<16x1xf32>
    %cst_36 = arith.constant 3.200000e+01 : f32
    %87 = vector.broadcast %cst_36 : f32 to vector<16x1xf32>
    %88 = arith.divf %86, %87 : vector<16x1xf32>
    %89 = vector.broadcast %88 : vector<16x1xf32> to vector<16x32xf32>
    %90 = arith.subf %82, %89 : vector<16x32xf32>
    %91 = arith.mulf %90, %90 : vector<16x32xf32>
    %cst_37 = arith.constant dense<0.000000e+00> : vector<16xf32>
    %92 = vector.multi_reduction <add>, %91, %cst_37 [1] : vector<16x32xf32> to vector<16xf32>
    %93 = vector.shape_cast %92 : vector<16xf32> to vector<16x1xf32>
    %cst_38 = arith.constant 0.0322580636 : f32
    %94 = vector.broadcast %cst_38 : f32 to vector<16x1xf32>
    %95 = arith.mulf %93, %94 : vector<16x1xf32>
    %96 = math.sqrt %95 : vector<16x1xf32>
    %97 = vector.broadcast %88 : vector<16x1xf32> to vector<16x32xf32>
    %98 = arith.subf %82, %97 : vector<16x32xf32>
    %99 = vector.broadcast %83 : vector<1x32xf32> to vector<16x32xf32>
    %100 = arith.mulf %99, %98 : vector<16x32xf32>
    %cst_39 = arith.constant 9.99999997E-7 : f32
    %101 = vector.broadcast %cst_39 : f32 to vector<16x1xf32>
    %102 = arith.addf %96, %101 : vector<16x1xf32>
    %103 = vector.broadcast %102 : vector<16x1xf32> to vector<16x32xf32>
    %104 = arith.divf %100, %103 : vector<16x32xf32>
    %105 = vector.broadcast %84 : vector<1x32xf32> to vector<16x32xf32>
    %106 = arith.addf %104, %105 : vector<16x32xf32>
    %107 = arith.truncf %106 : vector<16x32xf32> to vector<16x32xbf16>
    %c0_40 = arith.constant 0 : index
    %c1 = arith.constant 1 : index
    %c0_41 = arith.constant 0 : index
    %c0_42 = arith.constant 0 : index
    %108 = vector.load %arg7[%c0_40, %c1, %c0_41, %c0_42] : memref<2x3x32x32xbf16, #tpu.memory_space<vmem>>, vector<1x1x32x32xbf16>
    %109 = vector.shape_cast %108 : vector<1x1x32x32xbf16> to vector<32x32xbf16>
    %cst_43 = arith.constant dense<0.000000e+00> : vector<16x32xf32>
    %110 = tpu.matmul %107, %109, %cst_43 {dimension_numbers = #tpu.dot_dimension_numbers<[1], [0], [0], [1], [0, 0, 1, 1], [], []>} : vector<16x32xbf16>, vector<32x32xbf16>, vector<16x32xf32> -> vector<16x32xf32>
    %111 = vector.extract_strided_slice %8 {offsets = [7, 0], sizes = [1, 32], strides = [1, 1]} : vector<10x32xf32> to vector<1x32xf32>
    %112 = vector.broadcast %111 : vector<1x32xf32> to vector<16x32xf32>
    %113 = arith.addf %110, %112 : vector<16x32xf32>
    %c0_44 = arith.constant 0 : index
    %c0_45 = arith.constant 0 : index
    %c0_46 = arith.constant 0 : index
    %114 = vector.load %arg8[%c0_44, %c0_45, %c0_46] : memref<2x32x64xbf16, #tpu.memory_space<vmem>>, vector<1x32x64xbf16>
    %115 = vector.shape_cast %114 : vector<1x32x64xbf16> to vector<32x64xbf16>
    %cst_47 = arith.constant dense<0.000000e+00> : vector<16x64xf32>
    %116 = tpu.matmul %2, %115, %cst_47 {dimension_numbers = #tpu.dot_dimension_numbers<[1], [0], [0], [1], [0, 0, 1, 1], [], []>} : vector<16x32xbf16>, vector<32x64xbf16>, vector<16x64xf32> -> vector<16x64xf32>
    %c0_48 = arith.constant 0 : index
    %c0_49 = arith.constant 0 : index
    %c0_50 = arith.constant 0 : index
    %117 = vector.load %arg12[%c0_48, %c0_49, %c0_50] : memref<2x1x64xf32, #tpu.memory_space<vmem>>, vector<1x1x64xf32>
    %118 = vector.shape_cast %117 : vector<1x1x64xf32> to vector<1x64xf32>
    %119 = vector.broadcast %118 : vector<1x64xf32> to vector<16x64xf32>
    %120 = arith.addf %116, %119 : vector<16x64xf32>
    %121 = vector.extract_strided_slice %120 {offsets = [0, 0], sizes = [16, 32], strides = [1, 1]} : vector<16x64xf32> to vector<16x32xf32>
    %122 = vector.extract_strided_slice %120 {offsets = [0, 32], sizes = [16, 32], strides = [1, 1]} : vector<16x64xf32> to vector<16x32xf32>
    %cst_51 = arith.constant 0.353553385 : f32
    %123 = vector.broadcast %cst_51 : f32 to vector<16x32xf32>
    %124 = arith.mulf %113, %123 : vector<16x32xf32>
    %c0_52 = arith.constant 0 : index
    %c2 = arith.constant 2 : index
    %c0_53 = arith.constant 0 : index
    %c0_54 = arith.constant 0 : index
    %125 = vector.load %arg7[%c0_52, %c2, %c0_53, %c0_54] : memref<2x3x32x32xbf16, #tpu.memory_space<vmem>>, vector<1x1x32x32xbf16>
    %126 = vector.shape_cast %125 : vector<1x1x32x32xbf16> to vector<32x32xbf16>
    %127 = tpu.concatenate %124, %124, %124, %124 in 0 : vector<16x32xf32>, vector<16x32xf32>, vector<16x32xf32>, vector<16x32xf32> -> vector<64x32xf32>
    %128 = arith.truncf %127 : vector<64x32xf32> to vector<64x32xbf16>
    %129 = tpu.concatenate %121, %121, %121, %121 in 0 : vector<16x32xf32>, vector<16x32xf32>, vector<16x32xf32>, vector<16x32xf32> -> vector<64x32xf32>
    %130 = arith.mulf %129, %6 : vector<64x32xf32>
    %131 = arith.truncf %130 : vector<64x32xf32> to vector<64x32xbf16>
    %132 = tpu.concatenate %122, %122, %122, %122 in 0 : vector<16x32xf32>, vector<16x32xf32>, vector<16x32xf32>, vector<16x32xf32> -> vector<64x32xf32>
    %133 = arith.mulf %132, %6 : vector<64x32xf32>
    %134 = arith.truncf %133 : vector<64x32xf32> to vector<64x32xbf16>
    %cst_55 = arith.constant dense<0.000000e+00> : vector<64x64xf32>
    %135 = tpu.matmul %128, %131, %cst_55 {dimension_numbers = #tpu.dot_dimension_numbers<[1], [1], [0], [0], [0, 0, 1, 0], [], []>} : vector<64x32xbf16>, vector<64x32xbf16>, vector<64x64xf32> -> vector<64x64xf32>
    %136 = arith.addf %135, %4 : vector<64x64xf32>
    %cst_56 = arith.constant dense<0xFF800000> : vector<64xf32>
    %137 = vector.multi_reduction <maximumf>, %136, %cst_56 [1] : vector<64x64xf32> to vector<64xf32>
    %138 = vector.shape_cast %137 : vector<64xf32> to vector<64x1xf32>
    %139 = vector.broadcast %138 : vector<64x1xf32> to vector<64x64xf32>
    %140 = arith.subf %136, %139 : vector<64x64xf32>
    %141 = math.exp %140 : vector<64x64xf32>
    %cst_57 = arith.constant dense<0.000000e+00> : vector<64xf32>
    %142 = vector.multi_reduction <add>, %141, %cst_57 [1] : vector<64x64xf32> to vector<64xf32>
    %143 = vector.shape_cast %142 : vector<64xf32> to vector<64x1xf32>
    %144 = tpu.reciprocal %143 {approx = true} : vector<64x1xf32> -> vector<64x1xf32>
    %145 = vector.broadcast %144 : vector<64x1xf32> to vector<64x64xf32>
    %146 = arith.mulf %141, %145 : vector<64x64xf32>
    %147 = arith.truncf %146 : vector<64x64xf32> to vector<64x64xbf16>
    %cst_58 = arith.constant dense<0.000000e+00> : vector<64x32xf32>
    %148 = tpu.matmul %147, %134, %cst_58 {dimension_numbers = #tpu.dot_dimension_numbers<[1], [0], [0], [1], [0, 0, 1, 1], [], []>} : vector<64x64xbf16>, vector<64x32xbf16>, vector<64x32xf32> -> vector<64x32xf32>
    %149 = vector.extract_strided_slice %148 {offsets = [0, 0], sizes = [16, 32], strides = [1, 1]} : vector<64x32xf32> to vector<16x32xf32>
    %150 = vector.extract_strided_slice %148 {offsets = [16, 0], sizes = [16, 32], strides = [1, 1]} : vector<64x32xf32> to vector<16x32xf32>
    %151 = arith.addf %149, %150 : vector<16x32xf32>
    %152 = vector.extract_strided_slice %148 {offsets = [32, 0], sizes = [16, 32], strides = [1, 1]} : vector<64x32xf32> to vector<16x32xf32>
    %153 = arith.addf %151, %152 : vector<16x32xf32>
    %154 = vector.extract_strided_slice %148 {offsets = [48, 0], sizes = [16, 32], strides = [1, 1]} : vector<64x32xf32> to vector<16x32xf32>
    %155 = arith.addf %153, %154 : vector<16x32xf32>
    %156 = arith.truncf %155 : vector<16x32xf32> to vector<16x32xbf16>
    %cst_59 = arith.constant dense<0.000000e+00> : vector<16x32xf32>
    %157 = tpu.matmul %156, %126, %cst_59 {dimension_numbers = #tpu.dot_dimension_numbers<[1], [0], [0], [1], [0, 0, 1, 1], [], []>} : vector<16x32xbf16>, vector<32x32xbf16>, vector<16x32xf32> -> vector<16x32xf32>
    %158 = arith.addf %82, %157 : vector<16x32xf32>
    %159 = vector.extract_strided_slice %8 {offsets = [8, 0], sizes = [1, 32], strides = [1, 1]} : vector<10x32xf32> to vector<1x32xf32>
    %160 = vector.broadcast %159 : vector<1x32xf32> to vector<16x32xf32>
    %161 = arith.addf %158, %160 : vector<16x32xf32>
    %162 = vector.extract_strided_slice %8 {offsets = [4, 0], sizes = [1, 32], strides = [1, 1]} : vector<10x32xf32> to vector<1x32xf32>
    %163 = vector.extract_strided_slice %8 {offsets = [5, 0], sizes = [1, 32], strides = [1, 1]} : vector<10x32xf32> to vector<1x32xf32>
    %cst_60 = arith.constant dense<0.000000e+00> : vector<16xf32>
    %164 = vector.multi_reduction <add>, %161, %cst_60 [1] : vector<16x32xf32> to vector<16xf32>
    %165 = vector.shape_cast %164 : vector<16xf32> to vector<16x1xf32>
    %cst_61 = arith.constant 3.200000e+01 : f32
    %166 = vector.broadcast %cst_61 : f32 to vector<16x1xf32>
    %167 = arith.divf %165, %166 : vector<16x1xf32>
    %168 = vector.broadcast %167 : vector<16x1xf32> to vector<16x32xf32>
    %169 = arith.subf %161, %168 : vector<16x32xf32>
    %170 = arith.mulf %169, %169 : vector<16x32xf32>
    %cst_62 = arith.constant dense<0.000000e+00> : vector<16xf32>
    %171 = vector.multi_reduction <add>, %170, %cst_62 [1] : vector<16x32xf32> to vector<16xf32>
    %172 = vector.shape_cast %171 : vector<16xf32> to vector<16x1xf32>
    %cst_63 = arith.constant 0.0322580636 : f32
    %173 = vector.broadcast %cst_63 : f32 to vector<16x1xf32>
    %174 = arith.mulf %172, %173 : vector<16x1xf32>
    %175 = math.sqrt %174 : vector<16x1xf32>
    %176 = vector.broadcast %167 : vector<16x1xf32> to vector<16x32xf32>
    %177 = arith.subf %161, %176 : vector<16x32xf32>
    %178 = vector.broadcast %162 : vector<1x32xf32> to vector<16x32xf32>
    %179 = arith.mulf %178, %177 : vector<16x32xf32>
    %cst_64 = arith.constant 9.99999997E-7 : f32
    %180 = vector.broadcast %cst_64 : f32 to vector<16x1xf32>
    %181 = arith.addf %175, %180 : vector<16x1xf32>
    %182 = vector.broadcast %181 : vector<16x1xf32> to vector<16x32xf32>
    %183 = arith.divf %179, %182 : vector<16x32xf32>
    %184 = vector.broadcast %163 : vector<1x32xf32> to vector<16x32xf32>
    %185 = arith.addf %183, %184 : vector<16x32xf32>
    %186 = arith.truncf %185 : vector<16x32xf32> to vector<16x32xbf16>
    %c0_65 = arith.constant 0 : index
    %c0_66 = arith.constant 0 : index
    %c0_67 = arith.constant 0 : index
    %187 = vector.load %arg9[%c0_65, %c0_66, %c0_67] : memref<2x32x64xbf16, #tpu.memory_space<vmem>>, vector<1x32x64xbf16>
    %188 = vector.shape_cast %187 : vector<1x32x64xbf16> to vector<32x64xbf16>
    %cst_68 = arith.constant dense<0.000000e+00> : vector<16x64xf32>
    %189 = tpu.matmul %186, %188, %cst_68 {dimension_numbers = #tpu.dot_dimension_numbers<[1], [0], [0], [1], [0, 0, 1, 1], [], []>} : vector<16x32xbf16>, vector<32x64xbf16>, vector<16x64xf32> -> vector<16x64xf32>
    %c0_69 = arith.constant 0 : index
    %c0_70 = arith.constant 0 : index
    %c0_71 = arith.constant 0 : index
    %190 = vector.load %arg13[%c0_69, %c0_70, %c0_71] : memref<2x1x64xf32, #tpu.memory_space<vmem>>, vector<1x1x64xf32>
    %191 = vector.shape_cast %190 : vector<1x1x64xf32> to vector<1x64xf32>
    %192 = vector.broadcast %191 : vector<1x64xf32> to vector<16x64xf32>
    %193 = arith.addf %189, %192 : vector<16x64xf32>
    %cst_72 = arith.constant 0.000000e+00 : f32
    %194 = vector.broadcast %cst_72 : f32 to vector<16x64xf32>
    %195 = arith.maximumf %193, %194 : vector<16x64xf32>
    %196 = arith.truncf %195 : vector<16x64xf32> to vector<16x64xbf16>
    %c0_73 = arith.constant 0 : index
    %c0_74 = arith.constant 0 : index
    %c0_75 = arith.constant 0 : index
    %197 = vector.load %arg10[%c0_73, %c0_74, %c0_75] : memref<2x64x32xbf16, #tpu.memory_space<vmem>>, vector<1x64x32xbf16>
    %198 = vector.shape_cast %197 : vector<1x64x32xbf16> to vector<64x32xbf16>
    %cst_76 = arith.constant dense<0.000000e+00> : vector<16x32xf32>
    %199 = tpu.matmul %196, %198, %cst_76 {dimension_numbers = #tpu.dot_dimension_numbers<[1], [0], [0], [1], [0, 0, 1, 1], [], []>} : vector<16x64xbf16>, vector<64x32xbf16>, vector<16x32xf32> -> vector<16x32xf32>
    %200 = arith.addf %161, %199 : vector<16x32xf32>
    %201 = vector.extract_strided_slice %8 {offsets = [9, 0], sizes = [1, 32], strides = [1, 1]} : vector<10x32xf32> to vector<1x32xf32>
    %202 = vector.broadcast %201 : vector<1x32xf32> to vector<16x32xf32>
    %203 = arith.addf %200, %202 : vector<16x32xf32>
    %c1_77 = arith.constant 1 : index
    %c0_78 = arith.constant 0 : index
    %c0_79 = arith.constant 0 : index
    %204 = vector.load %arg14[%c1_77, %c0_78, %c0_79] : memref<2x10x32xf32, #tpu.memory_space<vmem>>, vector<1x10x32xf32>
    %205 = vector.shape_cast %204 : vector<1x10x32xf32> to vector<10x32xf32>
    %206 = vector.extract_strided_slice %205 {offsets = [0, 0], sizes = [1, 32], strides = [1, 1]} : vector<10x32xf32> to vector<1x32xf32>
    %207 = vector.extract_strided_slice %205 {offsets = [1, 0], sizes = [1, 32], strides = [1, 1]} : vector<10x32xf32> to vector<1x32xf32>
    %cst_80 = arith.constant dense<0.000000e+00> : vector<16xf32>
    %208 = vector.multi_reduction <add>, %203, %cst_80 [1] : vector<16x32xf32> to vector<16xf32>
    %209 = vector.shape_cast %208 : vector<16xf32> to vector<16x1xf32>
    %cst_81 = arith.constant 3.200000e+01 : f32
    %210 = vector.broadcast %cst_81 : f32 to vector<16x1xf32>
    %211 = arith.divf %209, %210 : vector<16x1xf32>
    %212 = vector.broadcast %211 : vector<16x1xf32> to vector<16x32xf32>
    %213 = arith.subf %203, %212 : vector<16x32xf32>
    %214 = arith.mulf %213, %213 : vector<16x32xf32>
    %cst_82 = arith.constant dense<0.000000e+00> : vector<16xf32>
    %215 = vector.multi_reduction <add>, %214, %cst_82 [1] : vector<16x32xf32> to vector<16xf32>
    %216 = vector.shape_cast %215 : vector<16xf32> to vector<16x1xf32>
    %cst_83 = arith.constant 0.0322580636 : f32
    %217 = vector.broadcast %cst_83 : f32 to vector<16x1xf32>
    %218 = arith.mulf %216, %217 : vector<16x1xf32>
    %219 = math.sqrt %218 : vector<16x1xf32>
    %220 = vector.broadcast %211 : vector<16x1xf32> to vector<16x32xf32>
    %221 = arith.subf %203, %220 : vector<16x32xf32>
    %222 = vector.broadcast %206 : vector<1x32xf32> to vector<16x32xf32>
    %223 = arith.mulf %222, %221 : vector<16x32xf32>
    %cst_84 = arith.constant 9.99999997E-7 : f32
    %224 = vector.broadcast %cst_84 : f32 to vector<16x1xf32>
    %225 = arith.addf %219, %224 : vector<16x1xf32>
    %226 = vector.broadcast %225 : vector<16x1xf32> to vector<16x32xf32>
    %227 = arith.divf %223, %226 : vector<16x32xf32>
    %228 = vector.broadcast %207 : vector<1x32xf32> to vector<16x32xf32>
    %229 = arith.addf %227, %228 : vector<16x32xf32>
    %230 = arith.truncf %229 : vector<16x32xf32> to vector<16x32xbf16>
    %c1_85 = arith.constant 1 : index
    %c0_86 = arith.constant 0 : index
    %c0_87 = arith.constant 0 : index
    %231 = vector.load %arg6[%c1_85, %c0_86, %c0_87] : memref<2x32x96xbf16, #tpu.memory_space<vmem>>, vector<1x32x96xbf16>
    %232 = vector.shape_cast %231 : vector<1x32x96xbf16> to vector<32x96xbf16>
    %cst_88 = arith.constant dense<0.000000e+00> : vector<16x96xf32>
    %233 = tpu.matmul %230, %232, %cst_88 {dimension_numbers = #tpu.dot_dimension_numbers<[1], [0], [0], [1], [0, 0, 1, 1], [], []>} : vector<16x32xbf16>, vector<32x96xbf16>, vector<16x96xf32> -> vector<16x96xf32>
    %c1_89 = arith.constant 1 : index
    %c0_90 = arith.constant 0 : index
    %c0_91 = arith.constant 0 : index
    %234 = vector.load %arg11[%c1_89, %c0_90, %c0_91] : memref<2x1x96xf32, #tpu.memory_space<vmem>>, vector<1x1x96xf32>
    %235 = vector.shape_cast %234 : vector<1x1x96xf32> to vector<1x96xf32>
    %236 = vector.broadcast %235 : vector<1x96xf32> to vector<16x96xf32>
    %237 = arith.addf %233, %236 : vector<16x96xf32>
    %238 = vector.extract_strided_slice %237 {offsets = [0, 0], sizes = [16, 32], strides = [1, 1]} : vector<16x96xf32> to vector<16x32xf32>
    %239 = vector.extract_strided_slice %237 {offsets = [0, 32], sizes = [16, 32], strides = [1, 1]} : vector<16x96xf32> to vector<16x32xf32>
    %240 = vector.extract_strided_slice %237 {offsets = [0, 64], sizes = [16, 32], strides = [1, 1]} : vector<16x96xf32> to vector<16x32xf32>
    %cst_92 = arith.constant 0.353553385 : f32
    %241 = vector.broadcast %cst_92 : f32 to vector<16x32xf32>
    %242 = arith.mulf %238, %241 : vector<16x32xf32>
    %c1_93 = arith.constant 1 : index
    %c0_94 = arith.constant 0 : index
    %c0_95 = arith.constant 0 : index
    %c0_96 = arith.constant 0 : index
    %243 = vector.load %arg7[%c1_93, %c0_94, %c0_95, %c0_96] : memref<2x3x32x32xbf16, #tpu.memory_space<vmem>>, vector<1x1x32x32xbf16>
    %244 = vector.shape_cast %243 : vector<1x1x32x32xbf16> to vector<32x32xbf16>
    %245 = tpu.concatenate %242, %242, %242, %242 in 0 : vector<16x32xf32>, vector<16x32xf32>, vector<16x32xf32>, vector<16x32xf32> -> vector<64x32xf32>
    %246 = arith.truncf %245 : vector<64x32xf32> to vector<64x32xbf16>
    %247 = tpu.concatenate %239, %239, %239, %239 in 0 : vector<16x32xf32>, vector<16x32xf32>, vector<16x32xf32>, vector<16x32xf32> -> vector<64x32xf32>
    %248 = arith.mulf %247, %5 : vector<64x32xf32>
    %249 = arith.truncf %248 : vector<64x32xf32> to vector<64x32xbf16>
    %250 = tpu.concatenate %240, %240, %240, %240 in 0 : vector<16x32xf32>, vector<16x32xf32>, vector<16x32xf32>, vector<16x32xf32> -> vector<64x32xf32>
    %251 = arith.mulf %250, %5 : vector<64x32xf32>
    %252 = arith.truncf %251 : vector<64x32xf32> to vector<64x32xbf16>
    %cst_97 = arith.constant dense<0.000000e+00> : vector<64x64xf32>
    %253 = tpu.matmul %246, %249, %cst_97 {dimension_numbers = #tpu.dot_dimension_numbers<[1], [1], [0], [0], [0, 0, 1, 0], [], []>} : vector<64x32xbf16>, vector<64x32xbf16>, vector<64x64xf32> -> vector<64x64xf32>
    %254 = arith.addf %253, %3 : vector<64x64xf32>
    %cst_98 = arith.constant dense<0xFF800000> : vector<64xf32>
    %255 = vector.multi_reduction <maximumf>, %254, %cst_98 [1] : vector<64x64xf32> to vector<64xf32>
    %256 = vector.shape_cast %255 : vector<64xf32> to vector<64x1xf32>
    %257 = vector.broadcast %256 : vector<64x1xf32> to vector<64x64xf32>
    %258 = arith.subf %254, %257 : vector<64x64xf32>
    %259 = math.exp %258 : vector<64x64xf32>
    %cst_99 = arith.constant dense<0.000000e+00> : vector<64xf32>
    %260 = vector.multi_reduction <add>, %259, %cst_99 [1] : vector<64x64xf32> to vector<64xf32>
    %261 = vector.shape_cast %260 : vector<64xf32> to vector<64x1xf32>
    %262 = tpu.reciprocal %261 {approx = true} : vector<64x1xf32> -> vector<64x1xf32>
    %263 = vector.broadcast %262 : vector<64x1xf32> to vector<64x64xf32>
    %264 = arith.mulf %259, %263 : vector<64x64xf32>
    %265 = arith.truncf %264 : vector<64x64xf32> to vector<64x64xbf16>
    %cst_100 = arith.constant dense<0.000000e+00> : vector<64x32xf32>
    %266 = tpu.matmul %265, %252, %cst_100 {dimension_numbers = #tpu.dot_dimension_numbers<[1], [0], [0], [1], [0, 0, 1, 1], [], []>} : vector<64x64xbf16>, vector<64x32xbf16>, vector<64x32xf32> -> vector<64x32xf32>
    %267 = vector.extract_strided_slice %266 {offsets = [0, 0], sizes = [16, 32], strides = [1, 1]} : vector<64x32xf32> to vector<16x32xf32>
    %268 = vector.extract_strided_slice %266 {offsets = [16, 0], sizes = [16, 32], strides = [1, 1]} : vector<64x32xf32> to vector<16x32xf32>
    %269 = arith.addf %267, %268 : vector<16x32xf32>
    %270 = vector.extract_strided_slice %266 {offsets = [32, 0], sizes = [16, 32], strides = [1, 1]} : vector<64x32xf32> to vector<16x32xf32>
    %271 = arith.addf %269, %270 : vector<16x32xf32>
    %272 = vector.extract_strided_slice %266 {offsets = [48, 0], sizes = [16, 32], strides = [1, 1]} : vector<64x32xf32> to vector<16x32xf32>
    %273 = arith.addf %271, %272 : vector<16x32xf32>
    %274 = arith.truncf %273 : vector<16x32xf32> to vector<16x32xbf16>
    %cst_101 = arith.constant dense<0.000000e+00> : vector<16x32xf32>
    %275 = tpu.matmul %274, %244, %cst_101 {dimension_numbers = #tpu.dot_dimension_numbers<[1], [0], [0], [1], [0, 0, 1, 1], [], []>} : vector<16x32xbf16>, vector<32x32xbf16>, vector<16x32xf32> -> vector<16x32xf32>
    %276 = arith.addf %203, %275 : vector<16x32xf32>
    %277 = vector.extract_strided_slice %205 {offsets = [6, 0], sizes = [1, 32], strides = [1, 1]} : vector<10x32xf32> to vector<1x32xf32>
    %278 = vector.broadcast %277 : vector<1x32xf32> to vector<16x32xf32>
    %279 = arith.addf %276, %278 : vector<16x32xf32>
    %280 = vector.extract_strided_slice %205 {offsets = [2, 0], sizes = [1, 32], strides = [1, 1]} : vector<10x32xf32> to vector<1x32xf32>
    %281 = vector.extract_strided_slice %205 {offsets = [3, 0], sizes = [1, 32], strides = [1, 1]} : vector<10x32xf32> to vector<1x32xf32>
    %cst_102 = arith.constant dense<0.000000e+00> : vector<16xf32>
    %282 = vector.multi_reduction <add>, %279, %cst_102 [1] : vector<16x32xf32> to vector<16xf32>
    %283 = vector.shape_cast %282 : vector<16xf32> to vector<16x1xf32>
    %cst_103 = arith.constant 3.200000e+01 : f32
    %284 = vector.broadcast %cst_103 : f32 to vector<16x1xf32>
    %285 = arith.divf %283, %284 : vector<16x1xf32>
    %286 = vector.broadcast %285 : vector<16x1xf32> to vector<16x32xf32>
    %287 = arith.subf %279, %286 : vector<16x32xf32>
    %288 = arith.mulf %287, %287 : vector<16x32xf32>
    %cst_104 = arith.constant dense<0.000000e+00> : vector<16xf32>
    %289 = vector.multi_reduction <add>, %288, %cst_104 [1] : vector<16x32xf32> to vector<16xf32>
    %290 = vector.shape_cast %289 : vector<16xf32> to vector<16x1xf32>
    %cst_105 = arith.constant 0.0322580636 : f32
    %291 = vector.broadcast %cst_105 : f32 to vector<16x1xf32>
    %292 = arith.mulf %290, %291 : vector<16x1xf32>
    %293 = math.sqrt %292 : vector<16x1xf32>
    %294 = vector.broadcast %285 : vector<16x1xf32> to vector<16x32xf32>
    %295 = arith.subf %279, %294 : vector<16x32xf32>
    %296 = vector.broadcast %280 : vector<1x32xf32> to vector<16x32xf32>
    %297 = arith.mulf %296, %295 : vector<16x32xf32>
    %cst_106 = arith.constant 9.99999997E-7 : f32
    %298 = vector.broadcast %cst_106 : f32 to vector<16x1xf32>
    %299 = arith.addf %293, %298 : vector<16x1xf32>
    %300 = vector.broadcast %299 : vector<16x1xf32> to vector<16x32xf32>
    %301 = arith.divf %297, %300 : vector<16x32xf32>
    %302 = vector.broadcast %281 : vector<1x32xf32> to vector<16x32xf32>
    %303 = arith.addf %301, %302 : vector<16x32xf32>
    %304 = arith.truncf %303 : vector<16x32xf32> to vector<16x32xbf16>
    %c1_107 = arith.constant 1 : index
    %c1_108 = arith.constant 1 : index
    %c0_109 = arith.constant 0 : index
    %c0_110 = arith.constant 0 : index
    %305 = vector.load %arg7[%c1_107, %c1_108, %c0_109, %c0_110] : memref<2x3x32x32xbf16, #tpu.memory_space<vmem>>, vector<1x1x32x32xbf16>
    %306 = vector.shape_cast %305 : vector<1x1x32x32xbf16> to vector<32x32xbf16>
    %cst_111 = arith.constant dense<0.000000e+00> : vector<16x32xf32>
    %307 = tpu.matmul %304, %306, %cst_111 {dimension_numbers = #tpu.dot_dimension_numbers<[1], [0], [0], [1], [0, 0, 1, 1], [], []>} : vector<16x32xbf16>, vector<32x32xbf16>, vector<16x32xf32> -> vector<16x32xf32>
    %308 = vector.extract_strided_slice %205 {offsets = [7, 0], sizes = [1, 32], strides = [1, 1]} : vector<10x32xf32> to vector<1x32xf32>
    %309 = vector.broadcast %308 : vector<1x32xf32> to vector<16x32xf32>
    %310 = arith.addf %307, %309 : vector<16x32xf32>
    %c1_112 = arith.constant 1 : index
    %c0_113 = arith.constant 0 : index
    %c0_114 = arith.constant 0 : index
    %311 = vector.load %arg8[%c1_112, %c0_113, %c0_114] : memref<2x32x64xbf16, #tpu.memory_space<vmem>>, vector<1x32x64xbf16>
    %312 = vector.shape_cast %311 : vector<1x32x64xbf16> to vector<32x64xbf16>
    %cst_115 = arith.constant dense<0.000000e+00> : vector<16x64xf32>
    %313 = tpu.matmul %2, %312, %cst_115 {dimension_numbers = #tpu.dot_dimension_numbers<[1], [0], [0], [1], [0, 0, 1, 1], [], []>} : vector<16x32xbf16>, vector<32x64xbf16>, vector<16x64xf32> -> vector<16x64xf32>
    %c1_116 = arith.constant 1 : index
    %c0_117 = arith.constant 0 : index
    %c0_118 = arith.constant 0 : index
    %314 = vector.load %arg12[%c1_116, %c0_117, %c0_118] : memref<2x1x64xf32, #tpu.memory_space<vmem>>, vector<1x1x64xf32>
    %315 = vector.shape_cast %314 : vector<1x1x64xf32> to vector<1x64xf32>
    %316 = vector.broadcast %315 : vector<1x64xf32> to vector<16x64xf32>
    %317 = arith.addf %313, %316 : vector<16x64xf32>
    %318 = vector.extract_strided_slice %317 {offsets = [0, 0], sizes = [16, 32], strides = [1, 1]} : vector<16x64xf32> to vector<16x32xf32>
    %319 = vector.extract_strided_slice %317 {offsets = [0, 32], sizes = [16, 32], strides = [1, 1]} : vector<16x64xf32> to vector<16x32xf32>
    %cst_119 = arith.constant 0.353553385 : f32
    %320 = vector.broadcast %cst_119 : f32 to vector<16x32xf32>
    %321 = arith.mulf %310, %320 : vector<16x32xf32>
    %c1_120 = arith.constant 1 : index
    %c2_121 = arith.constant 2 : index
    %c0_122 = arith.constant 0 : index
    %c0_123 = arith.constant 0 : index
    %322 = vector.load %arg7[%c1_120, %c2_121, %c0_122, %c0_123] : memref<2x3x32x32xbf16, #tpu.memory_space<vmem>>, vector<1x1x32x32xbf16>
    %323 = vector.shape_cast %322 : vector<1x1x32x32xbf16> to vector<32x32xbf16>
    %324 = tpu.concatenate %321, %321, %321, %321 in 0 : vector<16x32xf32>, vector<16x32xf32>, vector<16x32xf32>, vector<16x32xf32> -> vector<64x32xf32>
    %325 = arith.truncf %324 : vector<64x32xf32> to vector<64x32xbf16>
    %326 = tpu.concatenate %318, %318, %318, %318 in 0 : vector<16x32xf32>, vector<16x32xf32>, vector<16x32xf32>, vector<16x32xf32> -> vector<64x32xf32>
    %327 = arith.mulf %326, %6 : vector<64x32xf32>
    %328 = arith.truncf %327 : vector<64x32xf32> to vector<64x32xbf16>
    %329 = tpu.concatenate %319, %319, %319, %319 in 0 : vector<16x32xf32>, vector<16x32xf32>, vector<16x32xf32>, vector<16x32xf32> -> vector<64x32xf32>
    %330 = arith.mulf %329, %6 : vector<64x32xf32>
    %331 = arith.truncf %330 : vector<64x32xf32> to vector<64x32xbf16>
    %cst_124 = arith.constant dense<0.000000e+00> : vector<64x64xf32>
    %332 = tpu.matmul %325, %328, %cst_124 {dimension_numbers = #tpu.dot_dimension_numbers<[1], [1], [0], [0], [0, 0, 1, 0], [], []>} : vector<64x32xbf16>, vector<64x32xbf16>, vector<64x64xf32> -> vector<64x64xf32>
    %333 = arith.addf %332, %4 : vector<64x64xf32>
    %cst_125 = arith.constant dense<0xFF800000> : vector<64xf32>
    %334 = vector.multi_reduction <maximumf>, %333, %cst_125 [1] : vector<64x64xf32> to vector<64xf32>
    %335 = vector.shape_cast %334 : vector<64xf32> to vector<64x1xf32>
    %336 = vector.broadcast %335 : vector<64x1xf32> to vector<64x64xf32>
    %337 = arith.subf %333, %336 : vector<64x64xf32>
    %338 = math.exp %337 : vector<64x64xf32>
    %cst_126 = arith.constant dense<0.000000e+00> : vector<64xf32>
    %339 = vector.multi_reduction <add>, %338, %cst_126 [1] : vector<64x64xf32> to vector<64xf32>
    %340 = vector.shape_cast %339 : vector<64xf32> to vector<64x1xf32>
    %341 = tpu.reciprocal %340 {approx = true} : vector<64x1xf32> -> vector<64x1xf32>
    %342 = vector.broadcast %341 : vector<64x1xf32> to vector<64x64xf32>
    %343 = arith.mulf %338, %342 : vector<64x64xf32>
    %344 = arith.truncf %343 : vector<64x64xf32> to vector<64x64xbf16>
    %cst_127 = arith.constant dense<0.000000e+00> : vector<64x32xf32>
    %345 = tpu.matmul %344, %331, %cst_127 {dimension_numbers = #tpu.dot_dimension_numbers<[1], [0], [0], [1], [0, 0, 1, 1], [], []>} : vector<64x64xbf16>, vector<64x32xbf16>, vector<64x32xf32> -> vector<64x32xf32>
    %346 = vector.extract_strided_slice %345 {offsets = [0, 0], sizes = [16, 32], strides = [1, 1]} : vector<64x32xf32> to vector<16x32xf32>
    %347 = vector.extract_strided_slice %345 {offsets = [16, 0], sizes = [16, 32], strides = [1, 1]} : vector<64x32xf32> to vector<16x32xf32>
    %348 = arith.addf %346, %347 : vector<16x32xf32>
    %349 = vector.extract_strided_slice %345 {offsets = [32, 0], sizes = [16, 32], strides = [1, 1]} : vector<64x32xf32> to vector<16x32xf32>
    %350 = arith.addf %348, %349 : vector<16x32xf32>
    %351 = vector.extract_strided_slice %345 {offsets = [48, 0], sizes = [16, 32], strides = [1, 1]} : vector<64x32xf32> to vector<16x32xf32>
    %352 = arith.addf %350, %351 : vector<16x32xf32>
    %353 = arith.truncf %352 : vector<16x32xf32> to vector<16x32xbf16>
    %cst_128 = arith.constant dense<0.000000e+00> : vector<16x32xf32>
    %354 = tpu.matmul %353, %323, %cst_128 {dimension_numbers = #tpu.dot_dimension_numbers<[1], [0], [0], [1], [0, 0, 1, 1], [], []>} : vector<16x32xbf16>, vector<32x32xbf16>, vector<16x32xf32> -> vector<16x32xf32>
    %355 = arith.addf %279, %354 : vector<16x32xf32>
    %356 = vector.extract_strided_slice %205 {offsets = [8, 0], sizes = [1, 32], strides = [1, 1]} : vector<10x32xf32> to vector<1x32xf32>
    %357 = vector.broadcast %356 : vector<1x32xf32> to vector<16x32xf32>
    %358 = arith.addf %355, %357 : vector<16x32xf32>
    %359 = vector.extract_strided_slice %205 {offsets = [4, 0], sizes = [1, 32], strides = [1, 1]} : vector<10x32xf32> to vector<1x32xf32>
    %360 = vector.extract_strided_slice %205 {offsets = [5, 0], sizes = [1, 32], strides = [1, 1]} : vector<10x32xf32> to vector<1x32xf32>
    %cst_129 = arith.constant dense<0.000000e+00> : vector<16xf32>
    %361 = vector.multi_reduction <add>, %358, %cst_129 [1] : vector<16x32xf32> to vector<16xf32>
    %362 = vector.shape_cast %361 : vector<16xf32> to vector<16x1xf32>
    %cst_130 = arith.constant 3.200000e+01 : f32
    %363 = vector.broadcast %cst_130 : f32 to vector<16x1xf32>
    %364 = arith.divf %362, %363 : vector<16x1xf32>
    %365 = vector.broadcast %364 : vector<16x1xf32> to vector<16x32xf32>
    %366 = arith.subf %358, %365 : vector<16x32xf32>
    %367 = arith.mulf %366, %366 : vector<16x32xf32>
    %cst_131 = arith.constant dense<0.000000e+00> : vector<16xf32>
    %368 = vector.multi_reduction <add>, %367, %cst_131 [1] : vector<16x32xf32> to vector<16xf32>
    %369 = vector.shape_cast %368 : vector<16xf32> to vector<16x1xf32>
    %cst_132 = arith.constant 0.0322580636 : f32
    %370 = vector.broadcast %cst_132 : f32 to vector<16x1xf32>
    %371 = arith.mulf %369, %370 : vector<16x1xf32>
    %372 = math.sqrt %371 : vector<16x1xf32>
    %373 = vector.broadcast %364 : vector<16x1xf32> to vector<16x32xf32>
    %374 = arith.subf %358, %373 : vector<16x32xf32>
    %375 = vector.broadcast %359 : vector<1x32xf32> to vector<16x32xf32>
    %376 = arith.mulf %375, %374 : vector<16x32xf32>
    %cst_133 = arith.constant 9.99999997E-7 : f32
    %377 = vector.broadcast %cst_133 : f32 to vector<16x1xf32>
    %378 = arith.addf %372, %377 : vector<16x1xf32>
    %379 = vector.broadcast %378 : vector<16x1xf32> to vector<16x32xf32>
    %380 = arith.divf %376, %379 : vector<16x32xf32>
    %381 = vector.broadcast %360 : vector<1x32xf32> to vector<16x32xf32>
    %382 = arith.addf %380, %381 : vector<16x32xf32>
    %383 = arith.truncf %382 : vector<16x32xf32> to vector<16x32xbf16>
    %c1_134 = arith.constant 1 : index
    %c0_135 = arith.constant 0 : index
    %c0_136 = arith.constant 0 : index
    %384 = vector.load %arg9[%c1_134, %c0_135, %c0_136] : memref<2x32x64xbf16, #tpu.memory_space<vmem>>, vector<1x32x64xbf16>
    %385 = vector.shape_cast %384 : vector<1x32x64xbf16> to vector<32x64xbf16>
    %cst_137 = arith.constant dense<0.000000e+00> : vector<16x64xf32>
    %386 = tpu.matmul %383, %385, %cst_137 {dimension_numbers = #tpu.dot_dimension_numbers<[1], [0], [0], [1], [0, 0, 1, 1], [], []>} : vector<16x32xbf16>, vector<32x64xbf16>, vector<16x64xf32> -> vector<16x64xf32>
    %c1_138 = arith.constant 1 : index
    %c0_139 = arith.constant 0 : index
    %c0_140 = arith.constant 0 : index
    %387 = vector.load %arg13[%c1_138, %c0_139, %c0_140] : memref<2x1x64xf32, #tpu.memory_space<vmem>>, vector<1x1x64xf32>
    %388 = vector.shape_cast %387 : vector<1x1x64xf32> to vector<1x64xf32>
    %389 = vector.broadcast %388 : vector<1x64xf32> to vector<16x64xf32>
    %390 = arith.addf %386, %389 : vector<16x64xf32>
    %cst_141 = arith.constant 0.000000e+00 : f32
    %391 = vector.broadcast %cst_141 : f32 to vector<16x64xf32>
    %392 = arith.maximumf %390, %391 : vector<16x64xf32>
    %393 = arith.truncf %392 : vector<16x64xf32> to vector<16x64xbf16>
    %c1_142 = arith.constant 1 : index
    %c0_143 = arith.constant 0 : index
    %c0_144 = arith.constant 0 : index
    %394 = vector.load %arg10[%c1_142, %c0_143, %c0_144] : memref<2x64x32xbf16, #tpu.memory_space<vmem>>, vector<1x64x32xbf16>
    %395 = vector.shape_cast %394 : vector<1x64x32xbf16> to vector<64x32xbf16>
    %cst_145 = arith.constant dense<0.000000e+00> : vector<16x32xf32>
    %396 = tpu.matmul %393, %395, %cst_145 {dimension_numbers = #tpu.dot_dimension_numbers<[1], [0], [0], [1], [0, 0, 1, 1], [], []>} : vector<16x64xbf16>, vector<64x32xbf16>, vector<16x32xf32> -> vector<16x32xf32>
    %397 = arith.addf %358, %396 : vector<16x32xf32>
    %398 = vector.extract_strided_slice %205 {offsets = [9, 0], sizes = [1, 32], strides = [1, 1]} : vector<10x32xf32> to vector<1x32xf32>
    %399 = vector.broadcast %398 : vector<1x32xf32> to vector<16x32xf32>
    %400 = arith.addf %397, %399 : vector<16x32xf32>
    %c0_146 = arith.constant 0 : index
    %c0_147 = arith.constant 0 : index
    %401 = vector.load %arg15[%c0_146, %c0_147] : memref<2x32xf32, #tpu.memory_space<vmem>>, vector<2x32xf32>
    %402 = vector.extract_strided_slice %401 {offsets = [0, 0], sizes = [1, 32], strides = [1, 1]} : vector<2x32xf32> to vector<1x32xf32>
    %403 = vector.extract_strided_slice %401 {offsets = [1, 0], sizes = [1, 32], strides = [1, 1]} : vector<2x32xf32> to vector<1x32xf32>
    %cst_148 = arith.constant dense<0.000000e+00> : vector<16xf32>
    %404 = vector.multi_reduction <add>, %400, %cst_148 [1] : vector<16x32xf32> to vector<16xf32>
    %405 = vector.shape_cast %404 : vector<16xf32> to vector<16x1xf32>
    %cst_149 = arith.constant 3.200000e+01 : f32
    %406 = vector.broadcast %cst_149 : f32 to vector<16x1xf32>
    %407 = arith.divf %405, %406 : vector<16x1xf32>
    %408 = vector.broadcast %407 : vector<16x1xf32> to vector<16x32xf32>
    %409 = arith.subf %400, %408 : vector<16x32xf32>
    %410 = arith.mulf %409, %409 : vector<16x32xf32>
    %cst_150 = arith.constant dense<0.000000e+00> : vector<16xf32>
    %411 = vector.multi_reduction <add>, %410, %cst_150 [1] : vector<16x32xf32> to vector<16xf32>
    %412 = vector.shape_cast %411 : vector<16xf32> to vector<16x1xf32>
    %cst_151 = arith.constant 0.0322580636 : f32
    %413 = vector.broadcast %cst_151 : f32 to vector<16x1xf32>
    %414 = arith.mulf %412, %413 : vector<16x1xf32>
    %415 = math.sqrt %414 : vector<16x1xf32>
    %416 = vector.broadcast %407 : vector<16x1xf32> to vector<16x32xf32>
    %417 = arith.subf %400, %416 : vector<16x32xf32>
    %418 = vector.broadcast %402 : vector<1x32xf32> to vector<16x32xf32>
    %419 = arith.mulf %418, %417 : vector<16x32xf32>
    %cst_152 = arith.constant 9.99999997E-7 : f32
    %420 = vector.broadcast %cst_152 : f32 to vector<16x1xf32>
    %421 = arith.addf %415, %420 : vector<16x1xf32>
    %422 = vector.broadcast %421 : vector<16x1xf32> to vector<16x32xf32>
    %423 = arith.divf %419, %422 : vector<16x32xf32>
    %424 = vector.broadcast %403 : vector<1x32xf32> to vector<16x32xf32>
    %425 = arith.addf %423, %424 : vector<16x32xf32>
    %c0_153 = arith.constant 0 : index
    %c0_154 = arith.constant 0 : index
    %426 = vector.load %arg16[%c0_153, %c0_154] : memref<16x32xf32, #tpu.memory_space<vmem>>, vector<16x32xf32>
    tpu.vector_store %arg16[%c0_153, %c0_154], %425 {strides = array<i32>} : memref<16x32xf32, #tpu.memory_space<vmem>>, vector<16x32xf32>,
    return
  }
}

</mosaic_0001>

<llo_original>
// kernel: tpu_custom_call.1
$region0: #{tpu_custom_call.1}
  #allocation0 [shape = 'u32[]', space=smem, size = 0x4, offset = 0x4, fixed_abs, tag = 'smem constant byte address 0x4 - core index']
  #allocation1 [shape = 'u32[144,128]{1,0:T(1,128)}', space=vmem, size = 0x12000, scoped, tag = 'internal scratch']
  %s0 = inlined_call_operand.hbm [shape: f32[16,32], index: 0, kind: input, shape index: {}]
  %s1 = inlined_call_operand.hbm [shape: f32[16,32], index: 1, kind: input, shape index: {}]
  %s2 = inlined_call_operand.vmem [shape: f32[64,64], index: 2, kind: input, shape index: {}]
  %s3 = inlined_call_operand.vmem [shape: f32[64,64], index: 3, kind: input, shape index: {}]
  %s4 = inlined_call_operand.vmem [shape: f32[64,32], index: 4, kind: input, shape index: {}]
  %s5 = inlined_call_operand.vmem [shape: f32[64,32], index: 5, kind: input, shape index: {}]
  %s6 = inlined_call_operand.vmem [shape: bf16[2,32,96], index: 6, kind: input, shape index: {}]
  %s7 = inlined_call_operand.vmem [shape: bf16[2,3,32,32], index: 7, kind: input, shape index: {}]
  %s8 = inlined_call_operand.vmem [shape: bf16[2,32,64], index: 8, kind: input, shape index: {}]
  %s9 = inlined_call_operand.vmem [shape: bf16[2,32,64], index: 9, kind: input, shape index: {}]
  %s10 = inlined_call_operand.vmem [shape: bf16[2,64,32], index: 10, kind: input, shape index: {}]
  %s11 = inlined_call_operand.vmem [shape: f32[2,1,96], index: 11, kind: input, shape index: {}]
  %s12 = inlined_call_operand.vmem [shape: f32[2,1,64], index: 12, kind: input, shape index: {}]
  %s13 = inlined_call_operand.vmem [shape: f32[2,1,64], index: 13, kind: input, shape index: {}]
  %s14 = inlined_call_operand.vmem [shape: f32[2,10,32], index: 14, kind: input, shape index: {}]
  %s15 = inlined_call_operand.vmem [shape: f32[2,32], index: 15, kind: input, shape index: {}]
  %s16 = inlined_call_operand.hbm [shape: f32[16,32], index: 16, kind: output, shape index: {}]
  %s17 = sld [smem:[#allocation0]]
  $region82: #{tpu_custom_call.1} parent=0
    _
  %s19 = ssub.s32 1, %s17
  %s20 = scalar_select 0, %s19, %s17
  $region1: #{tpu_custom_call.1} parent=0
    #allocation2 [shape = 'u8[8192]{0}', space=vmem, size = 0x2000, scoped, tag = 'input window, operand 0, single buffered']
    #allocation3 [shape = 's32[1]{0}', space=sflag, size = 0x4, scoped, tag = 'scoped memory for tpu_custom_call.1']
    #allocation4 [shape = 's32[1]{0}', space=sflag, size = 0x4, scoped, tag = 'scoped memory for tpu_custom_call.1']
    #allocation5 [shape = 'u8[8192]{0}', space=vmem, size = 0x2000, scoped, tag = 'input window, operand 1, single buffered']
    #allocation6 [shape = 's32[1]{0}', space=sflag, size = 0x4, scoped, tag = 'scoped memory for tpu_custom_call.1']
    #allocation7 [shape = 'u8[8192]{0}', space=vmem, size = 0x2000, scoped, tag = 'output window, operand 0, single buffered']
    %21 = vsyncpa [#allocation3], 0
    %22 = vsyncpa [#allocation6], 0
    %23 = vsyncpa [#allocation4], 0
    // Predicated region
    $region2: #{tpu_custom_call.1} parent=1 // pred_check
      _
    $region3: #{tpu_custom_call.1} parent=1 // pred_check_branch
      %25 = sbr.rel (0) target = $region5
    $region4: #{tpu_custom_call.1} parent=1 // pred_region
      %s27 = ssub.s32 256, 256
      %28 = vsyncadd [#allocation3], %s27
      %s29 = sshll.u32 [#allocation2], 4
      %s30 = int_to_ptr.vmem [resolvable:$true] %s29
      %35 = dma.hbm_to_vmem [thread:$0]  %s0, 256, %s30, [#allocation3], 128, 128, 8
    $region5: #{tpu_custom_call.1} parent=1 // pred_fallthru
      _
    // Predicated region
    $region6: #{tpu_custom_call.1} parent=1 // pred_check
      _
    $region7: #{tpu_custom_call.1} parent=1 // pred_check_branch
      %37 = sbr.rel (0) target = $region9
    $region8: #{tpu_custom_call.1} parent=1 // pred_region
      %s39 = ssub.s32 256, 256
      %40 = vsyncadd [#allocation6], %s39
      %s41 = sshll.u32 [#allocation5], 4
      %s42 = int_to_ptr.vmem [resolvable:$true] %s41
      %47 = dma.hbm_to_vmem [thread:$0]  %s1, 256, %s42, [#allocation6], 128, 128, 8
    $region9: #{tpu_custom_call.1} parent=1 // pred_fallthru
      _
    // Predicated region
    $region10: #{tpu_custom_call.1} parent=1 // pred_check
      _
    $region11: #{tpu_custom_call.1} parent=1 // pred_check_branch
      %49 = sbr.rel (0) target = $region13
    $region12: #{tpu_custom_call.1} parent=1 // pred_region
      _
    $region13: #{tpu_custom_call.1} parent=1 // pred_fallthru
      _
    // Predicated region
    $region14: #{tpu_custom_call.1} parent=1 // pred_check
      _
    $region15: #{tpu_custom_call.1} parent=1 // pred_check_branch
      %51 = sbr.rel (0) target = $region17
    $region16: #{tpu_custom_call.1} parent=1 // pred_region
      _
    $region17: #{tpu_custom_call.1} parent=1 // pred_fallthru
      _
    // Predicated region
    $region18: #{tpu_custom_call.1} parent=1 // pred_check
      _
    $region19: #{tpu_custom_call.1} parent=1 // pred_check_branch
      %53 = sbr.rel (0) target = $region21
    $region20: #{tpu_custom_call.1} parent=1 // pred_region
      _
    $region21: #{tpu_custom_call.1} parent=1 // pred_fallthru
      _
    // Predicated region
    $region22: #{tpu_custom_call.1} parent=1 // pred_check
      _
    $region23: #{tpu_custom_call.1} parent=1 // pred_check_branch
      %55 = sbr.rel (0) target = $region25
    $region24: #{tpu_custom_call.1} parent=1 // pred_region
      _
    $region25: #{tpu_custom_call.1} parent=1 // pred_fallthru
      _
    // Predicated region
    $region26: #{tpu_custom_call.1} parent=1 // pred_check
      _
    $region27: #{tpu_custom_call.1} parent=1 // pred_check_branch
      %57 = sbr.rel (0) target = $region29
    $region28: #{tpu_custom_call.1} parent=1 // pred_region
      _
    $region29: #{tpu_custom_call.1} parent=1 // pred_fallthru
      _
    // Predicated region
    $region30: #{tpu_custom_call.1} parent=1 // pred_check
      _
    $region31: #{tpu_custom_call.1} parent=1 // pred_check_branch
      %59 = sbr.rel (0) target = $region33
    $region32: #{tpu_custom_call.1} parent=1 // pred_region
      _
    $region33: #{tpu_custom_call.1} parent=1 // pred_fallthru
      _
    // Predicated region
    $region34: #{tpu_custom_call.1} parent=1 // pred_check
      _
    $region35: #{tpu_custom_call.1} parent=1 // pred_check_branch
      %61 = sbr.rel (0) target = $region37
    $region36: #{tpu_custom_call.1} parent=1 // pred_region
      _
    $region37: #{tpu_custom_call.1} parent=1 // pred_fallthru
      _
    // Predicated region
    $region38: #{tpu_custom_call.1} parent=1 // pred_check
      _
    $region39: #{tpu_custom_call.1} parent=1 // pred_check_branch
      %63 = sbr.rel (0) target = $region41
    $region40: #{tpu_custom_call.1} parent=1 // pred_region
      _
    $region41: #{tpu_custom_call.1} parent=1 // pred_fallthru
      _
    // Predicated region
    $region42: #{tpu_custom_call.1} parent=1 // pred_check
      _
    $region43: #{tpu_custom_call.1} parent=1 // pred_check_branch
      %65 = sbr.rel (0) target = $region45
    $region44: #{tpu_custom_call.1} parent=1 // pred_region
      _
    $region45: #{tpu_custom_call.1} parent=1 // pred_fallthru
      _
    // Predicated region
    $region46: #{tpu_custom_call.1} parent=1 // pred_check
      _
    $region47: #{tpu_custom_call.1} parent=1 // pred_check_branch
      %67 = sbr.rel (0) target = $region49
    $region48: #{tpu_custom_call.1} parent=1 // pred_region
      _
    $region49: #{tpu_custom_call.1} parent=1 // pred_fallthru
      _
    // Predicated region
    $region50: #{tpu_custom_call.1} parent=1 // pred_check
      _
    $region51: #{tpu_custom_call.1} parent=1 // pred_check_branch
      %69 = sbr.rel (0) target = $region53
    $region52: #{tpu_custom_call.1} parent=1 // pred_region
      _
    $region53: #{tpu_custom_call.1} parent=1 // pred_fallthru
      _
    // Predicated region
    $region54: #{tpu_custom_call.1} parent=1 // pred_check
      _
    $region55: #{tpu_custom_call.1} parent=1 // pred_check_branch
      %71 = sbr.rel (0) target = $region57
    $region56: #{tpu_custom_call.1} parent=1 // pred_region
      _
    $region57: #{tpu_custom_call.1} parent=1 // pred_fallthru
      _
    // Predicated region
    $region58: #{tpu_custom_call.1} parent=1 // pred_check
      _
    $region59: #{tpu_custom_call.1} parent=1 // pred_check_branch
      %73 = sbr.rel (0) target = $region61
    $region60: #{tpu_custom_call.1} parent=1 // pred_region
      _
    $region61: #{tpu_custom_call.1} parent=1 // pred_fallthru
      _
    // Predicated region
    $region62: #{tpu_custom_call.1} parent=1 // pred_check
      _
    $region63: #{tpu_custom_call.1} parent=1 // pred_check_branch
      %75 = sbr.rel (0) target = $region65
    $region64: #{tpu_custom_call.1} parent=1 // pred_region
      _
    $region65: #{tpu_custom_call.1} parent=1 // pred_fallthru
      _
    // Predicated region
    $region66: #{tpu_custom_call.1} parent=1 // pred_check
      _
    $region67: #{tpu_custom_call.1} parent=1 // pred_check_branch
      %77 = sbr.rel (0) target = $region69
    $region68: #{tpu_custom_call.1} parent=1 // pred_region
      %78 = dma.done [#allocation3], 256
    $region69: #{tpu_custom_call.1} parent=1 // pred_fallthru
      _
    // Predicated region
    $region70: #{tpu_custom_call.1} parent=1 // pred_check
      _
    $region71: #{tpu_custom_call.1} parent=1 // pred_check_branch
      %80 = sbr.rel (0) target = $region73
    $region72: #{tpu_custom_call.1} parent=1 // pred_region
      %81 = dma.done [#allocation6], 256
    $region73: #{tpu_custom_call.1} parent=1 // pred_fallthru
      _
    %v83 = vld [vmem:[#allocation2] sm:$0xff]
    %v84 = vld [vmem:[#allocation2 + $0x8] sm:$0xff]
    %v85 = vld [vmem:[#allocation5] sm:$0xff]
    %v86 = vld [vmem:[#allocation5 + $0x8] sm:$0xff]
    %v87 = vpack.c.bf16 %v86, %v85
    %v88 = vld [vmem:[%s2] sm:$0xff]
    %v89 = vld [vmem:[%s2 + $0x8] sm:$0xff]
    %v90 = vld [vmem:[%s2 + $0x10] sm:$0xff]
    %v91 = vld [vmem:[%s2 + $0x18] sm:$0xff]
    %v92 = vld [vmem:[%s2 + $0x20] sm:$0xff]
    %v93 = vld [vmem:[%s2 + $0x28] sm:$0xff]
    %v94 = vld [vmem:[%s2 + $0x30] sm:$0xff]
    %v95 = vld [vmem:[%s2 + $0x38] sm:$0xff]
    %v96 = vld [vmem:[%s3] sm:$0xff]
    %v97 = vld [vmem:[%s3 + $0x8] sm:$0xff]
    %v98 = vld [vmem:[%s3 + $0x10] sm:$0xff]
    %v99 = vld [vmem:[%s3 + $0x18] sm:$0xff]
    %v100 = vld [vmem:[%s3 + $0x20] sm:$0xff]
    %v101 = vld [vmem:[%s3 + $0x28] sm:$0xff]
    %v102 = vld [vmem:[%s3 + $0x30] sm:$0xff]
    %v103 = vld [vmem:[%s3 + $0x38] sm:$0xff]
    %v104 = vld [vmem:[%s4] sm:$0xff]
    %v105 = vld [vmem:[%s4 + $0x8] sm:$0xff]
    %v106 = vld [vmem:[%s4 + $0x10] sm:$0xff]
    %v107 = vld [vmem:[%s4 + $0x18] sm:$0xff]
    %v108 = vld [vmem:[%s4 + $0x20] sm:$0xff]
    %v109 = vld [vmem:[%s4 + $0x28] sm:$0xff]
    %v110 = vld [vmem:[%s4 + $0x30] sm:$0xff]
    %v111 = vld [vmem:[%s4 + $0x38] sm:$0xff]
    %v112 = vld [vmem:[%s5] sm:$0xff]
    %v113 = vld [vmem:[%s5 + $0x8] sm:$0xff]
    %v114 = vld [vmem:[%s5 + $0x10] sm:$0xff]
    %v115 = vld [vmem:[%s5 + $0x18] sm:$0xff]
    %v116 = vld [vmem:[%s5 + $0x20] sm:$0xff]
    %v117 = vld [vmem:[%s5 + $0x28] sm:$0xff]
    %v118 = vld [vmem:[%s5 + $0x30] sm:$0xff]
    %v119 = vld [vmem:[%s5 + $0x38] sm:$0xff]
    %v120 = vld [vmem:[%s14] sm:$0xff]
    %v121 = vld [vmem:[%s14 + $0x8] sm:$0x3]
    %vm122 = vcmask 261120
    %v123 = vsel %vm122, %v83, 0.0
    %124 = vadd.xlane.f32.xlu0 %v123
    %v125 = vpop.xlane.xlu0 %124
    %v126 = vsel %vm122, %v84, 0.0
    %127 = vadd.xlane.f32.xlu0 %v126
    %v128 = vpop.xlane.xlu0 %127
    %v129 = vrcp.pop 32.0
    %v130 = vmul.f32 %v125, %v129
    %v131 = vmul.f32 %v128, %v129
    %v132 = vsub.f32 %v83, %v130
    %v133 = vsub.f32 %v84, %v131
    %v134 = vmul.f32 %v132, %v132
    %v135 = vmul.f32 %v133, %v133
    %v136 = vsel %vm122, %v134, 0.0
    %137 = vadd.xlane.f32.xlu0 %v136
    %v138 = vpop.xlane.xlu0 %137
    %v139 = vsel %vm122, %v135, 0.0
    %140 = vadd.xlane.f32.xlu0 %v139
    %v141 = vpop.xlane.xlu0 %140
    %v142 = vmul.f32 %v138, 0.032258064
    %v143 = vmul.f32 %v141, 0.032258064
    %v144 = vrsqrt.pop %v142
    %v145 = vmul.f32 %v142, %v144
    %vm146 = vcmp.eq.f32.partialorder %v142, inf
    %v147 = vsel %vm146, %v142, %v145
    %vm148 = vcmp.eq.f32.partialorder %v142, 0.0
    %v149 = vand.u32 %v142, 2147483648
    %v150 = vsel %vm148, %v149, %v147
    %v151 = vrsqrt.pop %v143
    %v152 = vmul.f32 %v143, %v151
    %vm153 = vcmp.eq.f32.partialorder %v143, inf
    %v154 = vsel %vm153, %v143, %v152
    %vm155 = vcmp.eq.f32.partialorder %v143, 0.0
    %v156 = vand.u32 %v143, 2147483648
    %v157 = vsel %vm155, %v156, %v154
    %v158 = vlaneseq
    %v159 = vshrl.u32 %v158, 7
    %v160 = vsub.s32 0, %v159
    %v161 = vrot.slane %v120, %v160
    %v162 = vmul.f32 %v161, %v132
    %v163 = vmul.f32 %v161, %v133
    %v164 = vadd.f32 %v150, 1e-06
    %v165 = vadd.f32 %v157, 1e-06
    %v166 = vrcp.pop %v164
    %v167 = vmul.f32 %v162, %v166
    %v168 = vrcp.pop %v165
    %v169 = vmul.f32 %v163, %v168
    %v170 = vlaneseq
    %v171 = vshrl.u32 %v170, 7
    %v172 = vsub.s32 1, %v171
    %v173 = vrot.slane %v120, %v172
    %v174 = vadd.f32 %v167, %v173
    %v175 = vadd.f32 %v169, %v173
    %v176 = vpack.c.bf16 %v175, %v174
    %v177 = vld [vmem:[%s6] sm:$0xf]
    %v178 = vld [vmem:[%s6 + $0x4] sm:$0xf]
    %v179 = vld [vmem:[%s6 + $0x8] sm:$0xf]
    %v180 = vld [vmem:[%s6 + $0xc] sm:$0xf]
    %v181 = vld [vmem:[%s11] sm:$0x1]
    %v183 = vlaneseq
    %v184 = vshrl.u32 %v183, 7
    %v185 = vsub.s32 0, %v184
    %v186 = vrot.slane %v181, %v185
    %v192 = vunpack.c.l.b16 %v177
    %v193 = vunpack.c.l.b16 %v178
    %v194 = vunpack.c.l.b16 %v179
    %v195 = vunpack.c.l.b16 %v180
    %v196 = vpack.c.b16 %v193, %v192
    %v197 = vpack.c.b16 %v195, %v194
    %v201 = vsel %vm122, %v176, 0
    %203 = vmatprep.subr.bf16.mxu0 0
    %204 = vmatpush1.bf16.msra.mxu0 0
    %205 = vmatprep.subr.bf16.mxu0 0
    %206 = vmatpush1.bf16.msra.mxu0 0
    %207 = vmatprep.subr.bf16.mxu0 0
    %208 = vmatpush1.bf16.msra.mxu0 0
    %209 = vmatprep.subr.bf16.mxu0 0
    %210 = vmatpush1.bf16.msra.mxu0 0
    %211 = vmatprep.subr.bf16.mxu0 0
    %212 = vmatpush1.bf16.msra.mxu0 0
    %213 = vmatprep.subr.bf16.mxu0 0
    %214 = vmatpush1.bf16.msra.mxu0 0
    %215 = vmatprep.subr.bf16.mxu0 0
    %216 = vmatpush1.bf16.msra.mxu0 %v197
    %217 = vmatprep.subr.bf16.mxu0 0
    %218 = vmatpush1.bf16.msra.mxu0 %v196
    %219 = vmatprep.subr.bf16.mxu0 0
    %220 = vmatpush2.bf16.msra.mxu0 0
    %221 = vmatprep.subr.bf16.mxu0 0
    %222 = vmatpush2.bf16.msra.mxu0 0
    %223 = vmatprep.subr.bf16.mxu0 0
    %224 = vmatpush2.bf16.msra.mxu0 0
    %225 = vmatprep.subr.bf16.mxu0 0
    %226 = vmatpush2.bf16.msra.mxu0 0
    %227 = vmatprep.subr.bf16.mxu0 0
    %228 = vmatpush2.bf16.msra.mxu0 0
    %229 = vmatprep.subr.bf16.mxu0 0
    %230 = vmatpush2.bf16.msra.mxu0 0
    %231 = vmatprep.subr.bf16.mxu0 0
    %232 = vmatpush2.bf16.msra.mxu0 0
    %233 = vmatprep.subr.bf16.mxu0 0
    %234 = vmatpush2.bf16.msra.mxu0 0
    %235 = vmatprep.mubr.bf16.mxu0 0
    %236 = vmatmul.mubr.bf16.gmra.mxu0 %v201
    %v237 = vpop.f32.mrf.mxu0
    %v238 = vadd.f32 %v186, %v237
    %v239 = vpop.f32.mrf.mxu0
    %v240 = vpop.f32.mrf.mxu0
    %v241 = vadd.f32 %v186, %v240
    %v242 = vpop.f32.mrf.mxu0
    %243 = vdwg.mxu0
    %v244 = vmul.f32 %v238, 0.35355338
    %v245 = vmul.f32 %v241, 0.35355338
    %v246 = vld [vmem:[%s7] sm:$0xf]
    %v247 = vld [vmem:[%s7 + $0x4] sm:$0xf]
    %v248 = vld [vmem:[%s7 + $0x8] sm:$0xf]
    %v249 = vld [vmem:[%s7 + $0xc] sm:$0xf]
    %v250 = vpack.c.bf16 %v245, %v244
    %259 = vrot.lane.b32.xlu0 %v104, 32
    %v260 = vpop.permute.xlu0 %259
    %261 = vrot.lane.b32.xlu0 %v105, 32
    %v262 = vpop.permute.xlu0 %261
    %263 = vrot.lane.b32.xlu0 %v106, 32
    %v264 = vpop.permute.xlu0 %263
    %265 = vrot.lane.b32.xlu0 %v107, 32
    %v266 = vpop.permute.xlu0 %265
    %267 = vrot.lane.b32.xlu0 %v108, 32
    %v268 = vpop.permute.xlu0 %267
    %269 = vrot.lane.b32.xlu0 %v109, 32
    %v270 = vpop.permute.xlu0 %269
    %271 = vrot.lane.b32.xlu0 %v110, 32
    %v272 = vpop.permute.xlu0 %271
    %273 = vrot.lane.b32.xlu0 %v111, 32
    %v274 = vpop.permute.xlu0 %273
    %v283 = vmul.f32 %v238, %v260
    %v284 = vmul.f32 %v241, %v262
    %v285 = vmul.f32 %v238, %v264
    %v286 = vmul.f32 %v241, %v266
    %v287 = vmul.f32 %v238, %v268
    %v288 = vmul.f32 %v241, %v270
    %v289 = vmul.f32 %v238, %v272
    %v290 = vmul.f32 %v241, %v274
    %v291 = vpack.c.bf16 %v284, %v283
    %v292 = vpack.c.bf16 %v286, %v285
    %v293 = vpack.c.bf16 %v288, %v287
    %v294 = vpack.c.bf16 %v290, %v289
    %295 = vrot.lane.b32.xlu0 %v104, 64
    %v296 = vpop.permute.xlu0 %295
    %297 = vrot.lane.b32.xlu0 %v105, 64
    %v298 = vpop.permute.xlu0 %297
    %299 = vrot.lane.b32.xlu0 %v106, 64
    %v300 = vpop.permute.xlu0 %299
    %301 = vrot.lane.b32.xlu0 %v107, 64
    %v302 = vpop.permute.xlu0 %301
    %303 = vrot.lane.b32.xlu0 %v108, 64
    %v304 = vpop.permute.xlu0 %303
    %305 = vrot.lane.b32.xlu0 %v109, 64
    %v306 = vpop.permute.xlu0 %305
    %307 = vrot.lane.b32.xlu0 %v110, 64
    %v308 = vpop.permute.xlu0 %307
    %309 = vrot.lane.b32.xlu0 %v111, 64
    %v310 = vpop.permute.xlu0 %309
    %v319 = vmul.f32 %v238, %v296
    %v320 = vmul.f32 %v241, %v298
    %v321 = vmul.f32 %v238, %v300
    %v322 = vmul.f32 %v241, %v302
    %v323 = vmul.f32 %v238, %v304
    %v324 = vmul.f32 %v241, %v306
    %v325 = vmul.f32 %v238, %v308
    %v326 = vmul.f32 %v241, %v310
    %v327 = vpack.c.bf16 %v320, %v319
    %v328 = vpack.c.bf16 %v322, %v321
    %v329 = vpack.c.bf16 %v324, %v323
    %v330 = vpack.c.bf16 %v326, %v325
    %335 = vrot.lane.b32.xlu0 %v291, 96
    %v336 = vpop.permute.xlu0 %335
    %337 = vrot.lane.b32.xlu0 %v292, 96
    %v338 = vpop.permute.xlu0 %337
    %339 = vrot.lane.b32.xlu0 %v293, 96
    %v340 = vpop.permute.xlu0 %339
    %341 = vrot.lane.b32.xlu0 %v294, 96
    %v342 = vpop.permute.xlu0 %341
    %v344 = vsel %vm122, %v250, 0
    %v347 = vsel %vm122, %v336, 0
    %v350 = vsel %vm122, %v338, 0
    %v353 = vsel %vm122, %v340, 0
    %v356 = vsel %vm122, %v342, 0
    %358 = vmatprep.subr.bf16.mxu0 0
    %359 = vmatpush1.bf16.xpose.msra.mxu0 0
    %360 = vmatprep.subr.bf16.mxu0 0
    %361 = vmatpush1.bf16.xpose.msra.mxu0 0
    %362 = vmatprep.subr.bf16.mxu0 0
    %363 = vmatpush1.bf16.xpose.msra.mxu0 0
    %364 = vmatprep.subr.bf16.mxu0 0
    %365 = vmatpush1.bf16.xpose.msra.mxu0 0
    %366 = vmatprep.subr.bf16.mxu0 0
    %367 = vmatpush1.bf16.xpose.msra.mxu0 %v356
    %368 = vmatprep.subr.bf16.mxu0 0
    %369 = vmatpush1.bf16.xpose.msra.mxu0 %v353
    %370 = vmatprep.subr.bf16.mxu0 0
    %371 = vmatpush1.bf16.xpose.msra.mxu0 %v350
    %372 = vmatprep.subr.bf16.mxu0 0
    %373 = vmatpush1.bf16.xpose.msra.mxu0 %v347
    %374 = vmatprep.subr.bf16.mxu0 0
    %375 = vmatpush2.bf16.xpose.msra.mxu0 0
    %376 = vmatprep.subr.bf16.mxu0 0
    %377 = vmatpush2.bf16.xpose.msra.mxu0 0
    %378 = vmatprep.subr.bf16.mxu0 0
    %379 = vmatpush2.bf16.xpose.msra.mxu0 0
    %380 = vmatprep.subr.bf16.mxu0 0
    %381 = vmatpush2.bf16.xpose.msra.mxu0 0
    %382 = vmatprep.subr.bf16.mxu0 0
    %383 = vmatpush2.bf16.xpose.msra.mxu0 0
    %384 = vmatprep.subr.bf16.mxu0 0
    %385 = vmatpush2.bf16.xpose.msra.mxu0 0
    %386 = vmatprep.subr.bf16.mxu0 0
    %387 = vmatpush2.bf16.xpose.msra.mxu0 0
    %388 = vmatprep.subr.bf16.mxu0 0
    %389 = vmatpush2.bf16.xpose.msra.mxu0 0
    %390 = vmatprep.mubr.bf16.mxu0 0
    %391 = vmatmul.mubr.bf16.gmra.mxu0 %v344
    %v392 = vpop.f32.mrf.mxu0
    %v393 = vadd.f32 %v88, %v392
    %v394 = vpop.f32.mrf.mxu0
    %v395 = vpop.f32.mrf.mxu0
    %v396 = vadd.f32 %v89, %v395
    %v397 = vpop.f32.mrf.mxu0
    %398 = vmatprep.mubr.bf16.mxu0 0
    %399 = vmatmul.mubr.bf16.gmra.mxu0 %v344
    %v400 = vpop.f32.mrf.mxu0
    %v401 = vadd.f32 %v90, %v400
    %v402 = vpop.f32.mrf.mxu0
    %v403 = vpop.f32.mrf.mxu0
    %v404 = vadd.f32 %v91, %v403
    %v405 = vpop.f32.mrf.mxu0
    %406 = vmatprep.mubr.bf16.mxu0 0
    %407 = vmatmul.mubr.bf16.gmra.mxu0 %v344
    %v408 = vpop.f32.mrf.mxu0
    %v409 = vadd.f32 %v92, %v408
    %v410 = vpop.f32.mrf.mxu0
    %v411 = vpop.f32.mrf.mxu0
    %v412 = vadd.f32 %v93, %v411
    %v413 = vpop.f32.mrf.mxu0
    %414 = vmatprep.mubr.bf16.mxu0 0
    %415 = vmatmul.mubr.bf16.gmra.mxu0 %v344
    %v416 = vpop.f32.mrf.mxu0
    %v417 = vadd.f32 %v94, %v416
    %v418 = vpop.f32.mrf.mxu0
    %v419 = vpop.f32.mrf.mxu0
    %v420 = vadd.f32 %v95, %v419
    %v421 = vpop.f32.mrf.mxu0
    %422 = vdwg.mxu0
    %vm423 = vcmask 523264
    %v424 = vsel %vm423, %v393, -inf
    %425 = vmax.xlane.f32.xlu0 %v424
    %v426 = vpop.xlane.xlu0 %425
    %v427 = vsel %vm423, %v396, -inf
    %428 = vmax.xlane.f32.xlu0 %v427
    %v429 = vpop.xlane.xlu0 %428
    %v430 = vsel %vm423, %v401, -inf
    %431 = vmax.xlane.f32.xlu0 %v430
    %v432 = vpop.xlane.xlu0 %431
    %v433 = vsel %vm423, %v404, -inf
    %434 = vmax.xlane.f32.xlu0 %v433
    %v435 = vpop.xlane.xlu0 %434
    %v436 = vsel %vm423, %v409, -inf
    %437 = vmax.xlane.f32.xlu0 %v436
    %v438 = vpop.xlane.xlu0 %437
    %v439 = vsel %vm423, %v412, -inf
    %440 = vmax.xlane.f32.xlu0 %v439
    %v441 = vpop.xlane.xlu0 %440
    %v442 = vsel %vm423, %v417, -inf
    %443 = vmax.xlane.f32.xlu0 %v442
    %v444 = vpop.xlane.xlu0 %443
    %v445 = vsel %vm423, %v420, -inf
    %446 = vmax.xlane.f32.xlu0 %v445
    %v447 = vpop.xlane.xlu0 %446
    %v448 = vsub.f32 %v393, %v426
    %v449 = vsub.f32 %v396, %v429
    %v450 = vsub.f32 %v401, %v432
    %v451 = vsub.f32 %v404, %v435
    %v452 = vsub.f32 %v409, %v438
    %v453 = vsub.f32 %v412, %v441
    %v454 = vsub.f32 %v417, %v444
    %v455 = vsub.f32 %v420, %v447
    %v456 = vmul.f32 %v448, 1.442695
    %v457 = vpow.pop %v456
    %v458 = vmul.f32 %v449, 1.442695
    %v459 = vpow.pop %v458
    %v460 = vmul.f32 %v450, 1.442695
    %v461 = vpow.pop %v460
    %v462 = vmul.f32 %v451, 1.442695
    %v463 = vpow.pop %v462
    %v464 = vmul.f32 %v452, 1.442695
    %v465 = vpow.pop %v464
    %v466 = vmul.f32 %v453, 1.442695
    %v467 = vpow.pop %v466
    %v468 = vmul.f32 %v454, 1.442695
    %v469 = vpow.pop %v468
    %v470 = vmul.f32 %v455, 1.442695
    %v471 = vpow.pop %v470
    %v472 = vsel %vm423, %v457, 0.0
    %473 = vadd.xlane.f32.xlu0 %v472
    %v474 = vpop.xlane.xlu0 %473
    %v475 = vsel %vm423, %v459, 0.0
    %476 = vadd.xlane.f32.xlu0 %v475
    %v477 = vpop.xlane.xlu0 %476
    %v478 = vsel %vm423, %v461, 0.0
    %479 = vadd.xlane.f32.xlu0 %v478
    %v480 = vpop.xlane.xlu0 %479
    %v481 = vsel %vm423, %v463, 0.0
    %482 = vadd.xlane.f32.xlu0 %v481
    %v483 = vpop.xlane.xlu0 %482
    %v484 = vsel %vm423, %v465, 0.0
    %485 = vadd.xlane.f32.xlu0 %v484
    %v486 = vpop.xlane.xlu0 %485
    %v487 = vsel %vm423, %v467, 0.0
    %488 = vadd.xlane.f32.xlu0 %v487
    %v489 = vpop.xlane.xlu0 %488
    %v490 = vsel %vm423, %v469, 0.0
    %491 = vadd.xlane.f32.xlu0 %v490
    %v492 = vpop.xlane.xlu0 %491
    %v493 = vsel %vm423, %v471, 0.0
    %494 = vadd.xlane.f32.xlu0 %v493
    %v495 = vpop.xlane.xlu0 %494
    %v496 = vrcp.pop %v474
    %v497 = vrcp.pop %v477
    %v498 = vrcp.pop %v480
    %v499 = vrcp.pop %v483
    %v500 = vrcp.pop %v486
    %v501 = vrcp.pop %v489
    %v502 = vrcp.pop %v492
    %v503 = vrcp.pop %v495
    %v504 = vmul.f32 %v457, %v496
    %v505 = vmul.f32 %v459, %v497
    %v506 = vmul.f32 %v461, %v498
    %v507 = vmul.f32 %v463, %v499
    %v508 = vmul.f32 %v465, %v500
    %v509 = vmul.f32 %v467, %v501
    %v510 = vmul.f32 %v469, %v502
    %v511 = vmul.f32 %v471, %v503
    %v512 = vpack.c.bf16 %v505, %v504
    %v513 = vpack.c.bf16 %v507, %v506
    %v514 = vpack.c.bf16 %v509, %v508
    %v515 = vpack.c.bf16 %v511, %v510
    %520 = vrot.lane.b32.xlu0 %v327, 64
    %v521 = vpop.permute.xlu0 %520
    %522 = vrot.lane.b32.xlu0 %v328, 64
    %v523 = vpop.permute.xlu0 %522
    %524 = vrot.lane.b32.xlu0 %v329, 64
    %v525 = vpop.permute.xlu0 %524
    %526 = vrot.lane.b32.xlu0 %v330, 64
    %v527 = vpop.permute.xlu0 %526
    %v533 = vsel %vm423, %v512, 0
    %v536 = vsel %vm423, %v513, 0
    %v539 = vsel %vm423, %v514, 0
    %v542 = vsel %vm423, %v515, 0
    %544 = vmatprep.subr.bf16.mxu0 0
    %545 = vmatpush1.bf16.msra.mxu0 0
    %546 = vmatprep.subr.bf16.mxu0 0
    %547 = vmatpush1.bf16.msra.mxu0 0
    %548 = vmatprep.subr.bf16.mxu0 0
    %549 = vmatpush1.bf16.msra.mxu0 0
    %550 = vmatprep.subr.bf16.mxu0 0
    %551 = vmatpush1.bf16.msra.mxu0 0
    %552 = vmatprep.subr.bf16.mxu0 0
    %553 = vmatpush1.bf16.msra.mxu0 %v527
    %554 = vmatprep.subr.bf16.mxu0 0
    %555 = vmatpush1.bf16.msra.mxu0 %v525
    %556 = vmatprep.subr.bf16.mxu0 0
    %557 = vmatpush1.bf16.msra.mxu0 %v523
    %558 = vmatprep.subr.bf16.mxu0 0
    %559 = vmatpush1.bf16.msra.mxu0 %v521
    %560 = vmatprep.subr.bf16.mxu0 0
    %561 = vmatpush2.bf16.msra.mxu0 0
    %562 = vmatprep.subr.bf16.mxu0 0
    %563 = vmatpush2.bf16.msra.mxu0 0
    %564 = vmatprep.subr.bf16.mxu0 0
    %565 = vmatpush2.bf16.msra.mxu0 0
    %566 = vmatprep.subr.bf16.mxu0 0
    %567 = vmatpush2.bf16.msra.mxu0 0
    %568 = vmatprep.subr.bf16.mxu0 0
    %569 = vmatpush2.bf16.msra.mxu0 0
    %570 = vmatprep.subr.bf16.mxu0 0
    %571 = vmatpush2.bf16.msra.mxu0 0
    %572 = vmatprep.subr.bf16.mxu0 0
    %573 = vmatpush2.bf16.msra.mxu0 0
    %574 = vmatprep.subr.bf16.mxu0 0
    %575 = vmatpush2.bf16.msra.mxu0 0
    %576 = vmatprep.mubr.bf16.mxu0 0
    %577 = vmatmul.mubr.bf16.gmra.mxu0 %v533
    %v578 = vpop.f32.mrf.mxu0
    %v579 = vadd.f32 0.0, %v578
    %v580 = vpop.f32.mrf.mxu0
    %v581 = vpop.f32.mrf.mxu0
    %v582 = vadd.f32 0.0, %v581
    %v583 = vpop.f32.mrf.mxu0
    %584 = vmatprep.mubr.bf16.mxu0 0
    %585 = vmatmul.mubr.bf16.gmra.mxu0 %v536
    %v586 = vpop.f32.mrf.mxu0
    %v587 = vadd.f32 0.0, %v586
    %v588 = vpop.f32.mrf.mxu0
    %v589 = vpop.f32.mrf.mxu0
    %v590 = vadd.f32 0.0, %v589
    %v591 = vpop.f32.mrf.mxu0
    %592 = vmatprep.mubr.bf16.mxu0 0
    %593 = vmatmul.mubr.bf16.gmra.mxu0 %v539
    %v594 = vpop.f32.mrf.mxu0
    %v595 = vadd.f32 0.0, %v594
    %v596 = vpop.f32.mrf.mxu0
    %v597 = vpop.f32.mrf.mxu0
    %v598 = vadd.f32 0.0, %v597
    %v599 = vpop.f32.mrf.mxu0
    %600 = vmatprep.mubr.bf16.mxu0 0
    %601 = vmatmul.mubr.bf16.gmra.mxu0 %v542
    %v602 = vpop.f32.mrf.mxu0
    %v603 = vadd.f32 0.0, %v602
    %v604 = vpop.f32.mrf.mxu0
    %v605 = vpop.f32.mrf.mxu0
    %v606 = vadd.f32 0.0, %v605
    %v607 = vpop.f32.mrf.mxu0
    %608 = vdwg.mxu0
    %v609 = vadd.f32 %v579, %v587
    %v610 = vadd.f32 %v582, %v590
    %v611 = vadd.f32 %v609, %v595
    %v612 = vadd.f32 %v610, %v598
    %v613 = vadd.f32 %v611, %v603
    %v614 = vadd.f32 %v612, %v606
    %v615 = vpack.c.bf16 %v614, %v613
    %v620 = vunpack.c.l.b16 %v246
    %v621 = vunpack.c.l.b16 %v247
    %v622 = vunpack.c.l.b16 %v248
    %v623 = vunpack.c.l.b16 %v249
    %v624 = vpack.c.b16 %v621, %v620
    %v625 = vpack.c.b16 %v623, %v622
    %v629 = vsel %vm122, %v615, 0
    %631 = vmatprep.subr.bf16.mxu0 0
    %632 = vmatpush1.bf16.msra.mxu0 0
    %633 = vmatprep.subr.bf16.mxu0 0
    %634 = vmatpush1.bf16.msra.mxu0 0
    %635 = vmatprep.subr.bf16.mxu0 0
    %636 = vmatpush1.bf16.msra.mxu0 0
    %637 = vmatprep.subr.bf16.mxu0 0
    %638 = vmatpush1.bf16.msra.mxu0 0
    %639 = vmatprep.subr.bf16.mxu0 0
    %640 = vmatpush1.bf16.msra.mxu0 0
    %641 = vmatprep.subr.bf16.mxu0 0
    %642 = vmatpush1.bf16.msra.mxu0 0
    %643 = vmatprep.subr.bf16.mxu0 0
    %644 = vmatpush1.bf16.msra.mxu0 %v625
    %645 = vmatprep.subr.bf16.mxu0 0
    %646 = vmatpush1.bf16.msra.mxu0 %v624
    %647 = vmatprep.subr.bf16.mxu0 0
    %648 = vmatpush2.bf16.msra.mxu0 0
    %649 = vmatprep.subr.bf16.mxu0 0
    %650 = vmatpush2.bf16.msra.mxu0 0
    %651 = vmatprep.subr.bf16.mxu0 0
    %652 = vmatpush2.bf16.msra.mxu0 0
    %653 = vmatprep.subr.bf16.mxu0 0
    %654 = vmatpush2.bf16.msra.mxu0 0
    %655 = vmatprep.subr.bf16.mxu0 0
    %656 = vmatpush2.bf16.msra.mxu0 0
    %657 = vmatprep.subr.bf16.mxu0 0
    %658 = vmatpush2.bf16.msra.mxu0 0
    %659 = vmatprep.subr.bf16.mxu0 0
    %660 = vmatpush2.bf16.msra.mxu0 0
    %661 = vmatprep.subr.bf16.mxu0 0
    %662 = vmatpush2.bf16.msra.mxu0 0
    %663 = vmatprep.mubr.bf16.mxu0 0
    %664 = vmatmul.mubr.bf16.gmra.mxu0 %v629
    %v665 = vpop.f32.mrf.mxu0
    %v666 = vadd.f32 0.0, %v665
    %v667 = vpop.f32.mrf.mxu0
    %v668 = vpop.f32.mrf.mxu0
    %v669 = vadd.f32 0.0, %v668
    %v670 = vpop.f32.mrf.mxu0
    %671 = vdwg.mxu0
    %v672 = vadd.f32 %v83, %v666
    %v673 = vadd.f32 %v84, %v669
    %v674 = vlaneseq
    %v675 = vshrl.u32 %v674, 7
    %v676 = vsub.s32 6, %v675
    %v677 = vrot.slane %v120, %v676
    %v678 = vadd.f32 %v672, %v677
    %v679 = vadd.f32 %v673, %v677
    %v680 = vsel %vm122, %v678, 0.0
    %681 = vadd.xlane.f32.xlu0 %v680
    %v682 = vpop.xlane.xlu0 %681
    %v683 = vsel %vm122, %v679, 0.0
    %684 = vadd.xlane.f32.xlu0 %v683
    %v685 = vpop.xlane.xlu0 %684
    %v686 = vmul.f32 %v682, %v129
    %v687 = vmul.f32 %v685, %v129
    %v688 = vsub.f32 %v678, %v686
    %v689 = vsub.f32 %v679, %v687
    %v690 = vmul.f32 %v688, %v688
    %v691 = vmul.f32 %v689, %v689
    %v692 = vsel %vm122, %v690, 0.0
    %693 = vadd.xlane.f32.xlu0 %v692
    %v694 = vpop.xlane.xlu0 %693
    %v695 = vsel %vm122, %v691, 0.0
    %696 = vadd.xlane.f32.xlu0 %v695
    %v697 = vpop.xlane.xlu0 %696
    %v698 = vmul.f32 %v694, 0.032258064
    %v699 = vmul.f32 %v697, 0.032258064
    %v700 = vrsqrt.pop %v698
    %v701 = vmul.f32 %v698, %v700
    %vm702 = vcmp.eq.f32.partialorder %v698, inf
    %v703 = vsel %vm702, %v698, %v701
    %vm704 = vcmp.eq.f32.partialorder %v698, 0.0
    %v705 = vand.u32 %v698, 2147483648
    %v706 = vsel %vm704, %v705, %v703
    %v707 = vrsqrt.pop %v699
    %v708 = vmul.f32 %v699, %v707
    %vm709 = vcmp.eq.f32.partialorder %v699, inf
    %v710 = vsel %vm709, %v699, %v708
    %vm711 = vcmp.eq.f32.partialorder %v699, 0.0
    %v712 = vand.u32 %v699, 2147483648
    %v713 = vsel %vm711, %v712, %v710
    %v714 = vlaneseq
    %v715 = vshrl.u32 %v714, 7
    %v716 = vsub.s32 2, %v715
    %v717 = vrot.slane %v120, %v716
    %v718 = vmul.f32 %v717, %v688
    %v719 = vmul.f32 %v717, %v689
    %v720 = vadd.f32 %v706, 1e-06
    %v721 = vadd.f32 %v713, 1e-06
    %v722 = vrcp.pop %v720
    %v723 = vmul.f32 %v718, %v722
    %v724 = vrcp.pop %v721
    %v725 = vmul.f32 %v719, %v724
    %v726 = vlaneseq
    %v727 = vshrl.u32 %v726, 7
    %v728 = vsub.s32 3, %v727
    %v729 = vrot.slane %v120, %v728
    %v730 = vadd.f32 %v723, %v729
    %v731 = vadd.f32 %v725, %v729
    %v732 = vpack.c.bf16 %v731, %v730
    %s733 = scalar_lea.vmem %s7, 16
    %v734 = vld [vmem:[%s733] sm:$0xf]
    %v735 = vld [vmem:[%s733 + $0x4] sm:$0xf]
    %v736 = vld [vmem:[%s733 + $0x8] sm:$0xf]
    %v737 = vld [vmem:[%s733 + $0xc] sm:$0xf]
    %v738 = vlaneseq
    %v739 = vshrl.u32 %v738, 7
    %v740 = vsub.s32 7, %v739
    %v741 = vrot.slane %v120, %v740
    %v746 = vunpack.c.l.b16 %v734
    %v747 = vunpack.c.l.b16 %v735
    %v748 = vunpack.c.l.b16 %v736
    %v749 = vunpack.c.l.b16 %v737
    %v750 = vpack.c.b16 %v747, %v746
    %v751 = vpack.c.b16 %v749, %v748
    %v755 = vsel %vm122, %v732, 0
    %757 = vmatprep.subr.bf16.mxu0 0
    %758 = vmatpush1.bf16.msra.mxu0 0
    %759 = vmatprep.subr.bf16.mxu0 0
    %760 = vmatpush1.bf16.msra.mxu0 0
    %761 = vmatprep.subr.bf16.mxu0 0
    %762 = vmatpush1.bf16.msra.mxu0 0
    %763 = vmatprep.subr.bf16.mxu0 0
    %764 = vmatpush1.bf16.msra.mxu0 0
    %765 = vmatprep.subr.bf16.mxu0 0
    %766 = vmatpush1.bf16.msra.mxu0 0
    %767 = vmatprep.subr.bf16.mxu0 0
    %768 = vmatpush1.bf16.msra.mxu0 0
    %769 = vmatprep.subr.bf16.mxu0 0
    %770 = vmatpush1.bf16.msra.mxu0 %v751
    %771 = vmatprep.subr.bf16.mxu0 0
    %772 = vmatpush1.bf16.msra.mxu0 %v750
    %773 = vmatprep.subr.bf16.mxu0 0
    %774 = vmatpush2.bf16.msra.mxu0 0
    %775 = vmatprep.subr.bf16.mxu0 0
    %776 = vmatpush2.bf16.msra.mxu0 0
    %777 = vmatprep.subr.bf16.mxu0 0
    %778 = vmatpush2.bf16.msra.mxu0 0
    %779 = vmatprep.subr.bf16.mxu0 0
    %780 = vmatpush2.bf16.msra.mxu0 0
    %781 = vmatprep.subr.bf16.mxu0 0
    %782 = vmatpush2.bf16.msra.mxu0 0
    %783 = vmatprep.subr.bf16.mxu0 0
    %784 = vmatpush2.bf16.msra.mxu0 0
    %785 = vmatprep.subr.bf16.mxu0 0
    %786 = vmatpush2.bf16.msra.mxu0 0
    %787 = vmatprep.subr.bf16.mxu0 0
    %788 = vmatpush2.bf16.msra.mxu0 0
    %789 = vmatprep.mubr.bf16.mxu0 0
    %790 = vmatmul.mubr.bf16.gmra.mxu0 %v755
    %v791 = vpop.f32.mrf.mxu0
    %v792 = vadd.f32 %v741, %v791
    %v793 = vpop.f32.mrf.mxu0
    %v794 = vpop.f32.mrf.mxu0
    %v795 = vadd.f32 %v741, %v794
    %v796 = vpop.f32.mrf.mxu0
    %797 = vdwg.mxu0
    %v798 = vld [vmem:[%s8] sm:$0xf]
    %v799 = vld [vmem:[%s8 + $0x4] sm:$0xf]
    %v800 = vld [vmem:[%s8 + $0x8] sm:$0xf]
    %v801 = vld [vmem:[%s8 + $0xc] sm:$0xf]
    %v802 = vld [vmem:[%s12] sm:$0x1]
    %v804 = vlaneseq
    %v805 = vshrl.u32 %v804, 7
    %v806 = vsub.s32 0, %v805
    %v807 = vrot.slane %v802, %v806
    %v813 = vunpack.c.l.b16 %v798
    %v814 = vunpack.c.l.b16 %v799
    %v815 = vunpack.c.l.b16 %v800
    %v816 = vunpack.c.l.b16 %v801
    %v817 = vpack.c.b16 %v814, %v813
    %v818 = vpack.c.b16 %v816, %v815
    %v822 = vsel %vm122, %v87, 0
    %824 = vmatprep.subr.bf16.mxu0 0
    %825 = vmatpush1.bf16.msra.mxu0 0
    %826 = vmatprep.subr.bf16.mxu0 0
    %827 = vmatpush1.bf16.msra.mxu0 0
    %828 = vmatprep.subr.bf16.mxu0 0
    %829 = vmatpush1.bf16.msra.mxu0 0
    %830 = vmatprep.subr.bf16.mxu0 0
    %831 = vmatpush1.bf16.msra.mxu0 0
    %832 = vmatprep.subr.bf16.mxu0 0
    %833 = vmatpush1.bf16.msra.mxu0 0
    %834 = vmatprep.subr.bf16.mxu0 0
    %835 = vmatpush1.bf16.msra.mxu0 0
    %836 = vmatprep.subr.bf16.mxu0 0
    %837 = vmatpush1.bf16.msra.mxu0 %v818
    %838 = vmatprep.subr.bf16.mxu0 0
    %839 = vmatpush1.bf16.msra.mxu0 %v817
    %840 = vmatprep.subr.bf16.mxu0 0
    %841 = vmatpush2.bf16.msra.mxu0 0
    %842 = vmatprep.subr.bf16.mxu0 0
    %843 = vmatpush2.bf16.msra.mxu0 0
    %844 = vmatprep.subr.bf16.mxu0 0
    %845 = vmatpush2.bf16.msra.mxu0 0
    %846 = vmatprep.subr.bf16.mxu0 0
    %847 = vmatpush2.bf16.msra.mxu0 0
    %848 = vmatprep.subr.bf16.mxu0 0
    %849 = vmatpush2.bf16.msra.mxu0 0
    %850 = vmatprep.subr.bf16.mxu0 0
    %851 = vmatpush2.bf16.msra.mxu0 0
    %852 = vmatprep.subr.bf16.mxu0 0
    %853 = vmatpush2.bf16.msra.mxu0 0
    %854 = vmatprep.subr.bf16.mxu0 0
    %855 = vmatpush2.bf16.msra.mxu0 0
    %856 = vmatprep.mubr.bf16.mxu0 0
    %857 = vmatmul.mubr.bf16.gmra.mxu0 %v822
    %v858 = vpop.f32.mrf.mxu0
    %v859 = vadd.f32 %v807, %v858
    %v860 = vpop.f32.mrf.mxu0
    %v861 = vpop.f32.mrf.mxu0
    %v862 = vadd.f32 %v807, %v861
    %v863 = vpop.f32.mrf.mxu0
    %864 = vdwg.mxu0
    %v865 = vmul.f32 %v792, 0.35355338
    %v866 = vmul.f32 %v795, 0.35355338
    %s867 = scalar_lea.vmem %s7, 32
    %v868 = vld [vmem:[%s867] sm:$0xf]
    %v869 = vld [vmem:[%s867 + $0x4] sm:$0xf]
    %v870 = vld [vmem:[%s867 + $0x8] sm:$0xf]
    %v871 = vld [vmem:[%s867 + $0xc] sm:$0xf]
    %v872 = vpack.c.bf16 %v866, %v865
    %v873 = vmul.f32 %v859, %v112
    %v874 = vmul.f32 %v862, %v113
    %v875 = vmul.f32 %v859, %v114
    %v876 = vmul.f32 %v862, %v115
    %v877 = vmul.f32 %v859, %v116
    %v878 = vmul.f32 %v862, %v117
    %v879 = vmul.f32 %v859, %v118
    %v880 = vmul.f32 %v862, %v119
    %v881 = vpack.c.bf16 %v874, %v873
    %v882 = vpack.c.bf16 %v876, %v875
    %v883 = vpack.c.bf16 %v878, %v877
    %v884 = vpack.c.bf16 %v880, %v879
    %893 = vrot.lane.b32.xlu0 %v112, 32
    %v894 = vpop.permute.xlu0 %893
    %895 = vrot.lane.b32.xlu0 %v113, 32
    %v896 = vpop.permute.xlu0 %895
    %897 = vrot.lane.b32.xlu0 %v114, 32
    %v898 = vpop.permute.xlu0 %897
    %899 = vrot.lane.b32.xlu0 %v115, 32
    %v900 = vpop.permute.xlu0 %899
    %901 = vrot.lane.b32.xlu0 %v116, 32
    %v902 = vpop.permute.xlu0 %901
    %903 = vrot.lane.b32.xlu0 %v117, 32
    %v904 = vpop.permute.xlu0 %903
    %905 = vrot.lane.b32.xlu0 %v118, 32
    %v906 = vpop.permute.xlu0 %905
    %907 = vrot.lane.b32.xlu0 %v119, 32
    %v908 = vpop.permute.xlu0 %907
    %v917 = vmul.f32 %v859, %v894
    %v918 = vmul.f32 %v862, %v896
    %v919 = vmul.f32 %v859, %v898
    %v920 = vmul.f32 %v862, %v900
    %v921 = vmul.f32 %v859, %v902
    %v922 = vmul.f32 %v862, %v904
    %v923 = vmul.f32 %v859, %v906
    %v924 = vmul.f32 %v862, %v908
    %v925 = vpack.c.bf16 %v918, %v917
    %v926 = vpack.c.bf16 %v920, %v919
    %v927 = vpack.c.bf16 %v922, %v921
    %v928 = vpack.c.bf16 %v924, %v923
    %v930 = vsel %vm122, %v872, 0
    %v933 = vsel %vm122, %v881, 0
    %v936 = vsel %vm122, %v882, 0
    %v939 = vsel %vm122, %v883, 0
    %v942 = vsel %vm122, %v884, 0
    %944 = vmatprep.subr.bf16.mxu0 0
    %945 = vmatpush1.bf16.xpose.msra.mxu0 0
    %946 = vmatprep.subr.bf16.mxu0 0
    %947 = vmatpush1.bf16.xpose.msra.mxu0 0
    %948 = vmatprep.subr.bf16.mxu0 0
    %949 = vmatpush1.bf16.xpose.msra.mxu0 0
    %950 = vmatprep.subr.bf16.mxu0 0
    %951 = vmatpush1.bf16.xpose.msra.mxu0 0
    %952 = vmatprep.subr.bf16.mxu0 0
    %953 = vmatpush1.bf16.xpose.msra.mxu0 %v942
    %954 = vmatprep.subr.bf16.mxu0 0
    %955 = vmatpush1.bf16.xpose.msra.mxu0 %v939
    %956 = vmatprep.subr.bf16.mxu0 0
    %957 = vmatpush1.bf16.xpose.msra.mxu0 %v936
    %958 = vmatprep.subr.bf16.mxu0 0
    %959 = vmatpush1.bf16.xpose.msra.mxu0 %v933
    %960 = vmatprep.subr.bf16.mxu0 0
    %961 = vmatpush2.bf16.xpose.msra.mxu0 0
    %962 = vmatprep.subr.bf16.mxu0 0
    %963 = vmatpush2.bf16.xpose.msra.mxu0 0
    %964 = vmatprep.subr.bf16.mxu0 0
    %965 = vmatpush2.bf16.xpose.msra.mxu0 0
    %966 = vmatprep.subr.bf16.mxu0 0
    %967 = vmatpush2.bf16.xpose.msra.mxu0 0
    %968 = vmatprep.subr.bf16.mxu0 0
    %969 = vmatpush2.bf16.xpose.msra.mxu0 0
    %970 = vmatprep.subr.bf16.mxu0 0
    %971 = vmatpush2.bf16.xpose.msra.mxu0 0
    %972 = vmatprep.subr.bf16.mxu0 0
    %973 = vmatpush2.bf16.xpose.msra.mxu0 0
    %974 = vmatprep.subr.bf16.mxu0 0
    %975 = vmatpush2.bf16.xpose.msra.mxu0 0
    %976 = vmatprep.mubr.bf16.mxu0 0
    %977 = vmatmul.mubr.bf16.gmra.mxu0 %v930
    %v978 = vpop.f32.mrf.mxu0
    %v979 = vadd.f32 %v96, %v978
    %v980 = vpop.f32.mrf.mxu0
    %v981 = vpop.f32.mrf.mxu0
    %v982 = vadd.f32 %v97, %v981
    %v983 = vpop.f32.mrf.mxu0
    %984 = vmatprep.mubr.bf16.mxu0 0
    %985 = vmatmul.mubr.bf16.gmra.mxu0 %v930
    %v986 = vpop.f32.mrf.mxu0
    %v987 = vadd.f32 %v98, %v986
    %v988 = vpop.f32.mrf.mxu0
    %v989 = vpop.f32.mrf.mxu0
    %v990 = vadd.f32 %v99, %v989
    %v991 = vpop.f32.mrf.mxu0
    %992 = vmatprep.mubr.bf16.mxu0 0
    %993 = vmatmul.mubr.bf16.gmra.mxu0 %v930
    %v994 = vpop.f32.mrf.mxu0
    %v995 = vadd.f32 %v100, %v994
    %v996 = vpop.f32.mrf.mxu0
    %v997 = vpop.f32.mrf.mxu0
    %v998 = vadd.f32 %v101, %v997
    %v999 = vpop.f32.mrf.mxu0
    %1000 = vmatprep.mubr.bf16.mxu0 0
    %1001 = vmatmul.mubr.bf16.gmra.mxu0 %v930
    %v1002 = vpop.f32.mrf.mxu0
    %v1003 = vadd.f32 %v102, %v1002
    %v1004 = vpop.f32.mrf.mxu0
    %v1005 = vpop.f32.mrf.mxu0
    %v1006 = vadd.f32 %v103, %v1005
    %v1007 = vpop.f32.mrf.mxu0
    %1008 = vdwg.mxu0
    %v1009 = vsel %vm423, %v979, -inf
    %1010 = vmax.xlane.f32.xlu0 %v1009
    %v1011 = vpop.xlane.xlu0 %1010
    %v1012 = vsel %vm423, %v982, -inf
    %1013 = vmax.xlane.f32.xlu0 %v1012
    %v1014 = vpop.xlane.xlu0 %1013
    %v1015 = vsel %vm423, %v987, -inf
    %1016 = vmax.xlane.f32.xlu0 %v1015
    %v1017 = vpop.xlane.xlu0 %1016
    %v1018 = vsel %vm423, %v990, -inf
    %1019 = vmax.xlane.f32.xlu0 %v1018
    %v1020 = vpop.xlane.xlu0 %1019
    %v1021 = vsel %vm423, %v995, -inf
    %1022 = vmax.xlane.f32.xlu0 %v1021
    %v1023 = vpop.xlane.xlu0 %1022
    %v1024 = vsel %vm423, %v998, -inf
    %1025 = vmax.xlane.f32.xlu0 %v1024
    %v1026 = vpop.xlane.xlu0 %1025
    %v1027 = vsel %vm423, %v1003, -inf
    %1028 = vmax.xlane.f32.xlu0 %v1027
    %v1029 = vpop.xlane.xlu0 %1028
    %v1030 = vsel %vm423, %v1006, -inf
    %1031 = vmax.xlane.f32.xlu0 %v1030
    %v1032 = vpop.xlane.xlu0 %1031
    %v1033 = vsub.f32 %v979, %v1011
    %v1034 = vsub.f32 %v982, %v1014
    %v1035 = vsub.f32 %v987, %v1017
    %v1036 = vsub.f32 %v990, %v1020
    %v1037 = vsub.f32 %v995, %v1023
    %v1038 = vsub.f32 %v998, %v1026
    %v1039 = vsub.f32 %v1003, %v1029
    %v1040 = vsub.f32 %v1006, %v1032
    %v1041 = vmul.f32 %v1033, 1.442695
    %v1042 = vpow.pop %v1041
    %v1043 = vmul.f32 %v1034, 1.442695
    %v1044 = vpow.pop %v1043
    %v1045 = vmul.f32 %v1035, 1.442695
    %v1046 = vpow.pop %v1045
    %v1047 = vmul.f32 %v1036, 1.442695
    %v1048 = vpow.pop %v1047
    %v1049 = vmul.f32 %v1037, 1.442695
    %v1050 = vpow.pop %v1049
    %v1051 = vmul.f32 %v1038, 1.442695
    %v1052 = vpow.pop %v1051
    %v1053 = vmul.f32 %v1039, 1.442695
    %v1054 = vpow.pop %v1053
    %v1055 = vmul.f32 %v1040, 1.442695
    %v1056 = vpow.pop %v1055
    %v1057 = vsel %vm423, %v1042, 0.0
    %1058 = vadd.xlane.f32.xlu0 %v1057
    %v1059 = vpop.xlane.xlu0 %1058
    %v1060 = vsel %vm423, %v1044, 0.0
    %1061 = vadd.xlane.f32.xlu0 %v1060
    %v1062 = vpop.xlane.xlu0 %1061
    %v1063 = vsel %vm423, %v1046, 0.0
    %1064 = vadd.xlane.f32.xlu0 %v1063
    %v1065 = vpop.xlane.xlu0 %1064
    %v1066 = vsel %vm423, %v1048, 0.0
    %1067 = vadd.xlane.f32.xlu0 %v1066
    %v1068 = vpop.xlane.xlu0 %1067
    %v1069 = vsel %vm423, %v1050, 0.0
    %1070 = vadd.xlane.f32.xlu0 %v1069
    %v1071 = vpop.xlane.xlu0 %1070
    %v1072 = vsel %vm423, %v1052, 0.0
    %1073 = vadd.xlane.f32.xlu0 %v1072
    %v1074 = vpop.xlane.xlu0 %1073
    %v1075 = vsel %vm423, %v1054, 0.0
    %1076 = vadd.xlane.f32.xlu0 %v1075
    %v1077 = vpop.xlane.xlu0 %1076
    %v1078 = vsel %vm423, %v1056, 0.0
    %1079 = vadd.xlane.f32.xlu0 %v1078
    %v1080 = vpop.xlane.xlu0 %1079
    %v1081 = vrcp.pop %v1059
    %v1082 = vrcp.pop %v1062
    %v1083 = vrcp.pop %v1065
    %v1084 = vrcp.pop %v1068
    %v1085 = vrcp.pop %v1071
    %v1086 = vrcp.pop %v1074
    %v1087 = vrcp.pop %v1077
    %v1088 = vrcp.pop %v1080
    %v1089 = vmul.f32 %v1042, %v1081
    %v1090 = vmul.f32 %v1044, %v1082
    %v1091 = vmul.f32 %v1046, %v1083
    %v1092 = vmul.f32 %v1048, %v1084
    %v1093 = vmul.f32 %v1050, %v1085
    %v1094 = vmul.f32 %v1052, %v1086
    %v1095 = vmul.f32 %v1054, %v1087
    %v1096 = vmul.f32 %v1056, %v1088
    %v1097 = vpack.c.bf16 %v1090, %v1089
    %v1098 = vpack.c.bf16 %v1092, %v1091
    %v1099 = vpack.c.bf16 %v1094, %v1093
    %v1100 = vpack.c.bf16 %v1096, %v1095
    %1105 = vrot.lane.b32.xlu0 %v925, 96
    %v1106 = vpop.permute.xlu0 %1105
    %1107 = vrot.lane.b32.xlu0 %v926, 96
    %v1108 = vpop.permute.xlu0 %1107
    %1109 = vrot.lane.b32.xlu0 %v927, 96
    %v1110 = vpop.permute.xlu0 %1109
    %1111 = vrot.lane.b32.xlu0 %v928, 96
    %v1112 = vpop.permute.xlu0 %1111
    %v1118 = vsel %vm423, %v1097, 0
    %v1121 = vsel %vm423, %v1098, 0
    %v1124 = vsel %vm423, %v1099, 0
    %v1127 = vsel %vm423, %v1100, 0
    %1129 = vmatprep.subr.bf16.mxu0 0
    %1130 = vmatpush1.bf16.msra.mxu0 0
    %1131 = vmatprep.subr.bf16.mxu0 0
    %1132 = vmatpush1.bf16.msra.mxu0 0
    %1133 = vmatprep.subr.bf16.mxu0 0
    %1134 = vmatpush1.bf16.msra.mxu0 0
    %1135 = vmatprep.subr.bf16.mxu0 0
    %1136 = vmatpush1.bf16.msra.mxu0 0
    %1137 = vmatprep.subr.bf16.mxu0 0
    %1138 = vmatpush1.bf16.msra.mxu0 %v1112
    %1139 = vmatprep.subr.bf16.mxu0 0
    %1140 = vmatpush1.bf16.msra.mxu0 %v1110
    %1141 = vmatprep.subr.bf16.mxu0 0
    %1142 = vmatpush1.bf16.msra.mxu0 %v1108
    %1143 = vmatprep.subr.bf16.mxu0 0
    %1144 = vmatpush1.bf16.msra.mxu0 %v1106
    %1145 = vmatprep.subr.bf16.mxu0 0
    %1146 = vmatpush2.bf16.msra.mxu0 0
    %1147 = vmatprep.subr.bf16.mxu0 0
    %1148 = vmatpush2.bf16.msra.mxu0 0
    %1149 = vmatprep.subr.bf16.mxu0 0
    %1150 = vmatpush2.bf16.msra.mxu0 0
    %1151 = vmatprep.subr.bf16.mxu0 0
    %1152 = vmatpush2.bf16.msra.mxu0 0
    %1153 = vmatprep.subr.bf16.mxu0 0
    %1154 = vmatpush2.bf16.msra.mxu0 0
    %1155 = vmatprep.subr.bf16.mxu0 0
    %1156 = vmatpush2.bf16.msra.mxu0 0
    %1157 = vmatprep.subr.bf16.mxu0 0
    %1158 = vmatpush2.bf16.msra.mxu0 0
    %1159 = vmatprep.subr.bf16.mxu0 0
    %1160 = vmatpush2.bf16.msra.mxu0 0
    %1161 = vmatprep.mubr.bf16.mxu0 0
    %1162 = vmatmul.mubr.bf16.gmra.mxu0 %v1118
    %v1163 = vpop.f32.mrf.mxu0
    %v1164 = vadd.f32 0.0, %v1163
    %v1165 = vpop.f32.mrf.mxu0
    %v1166 = vpop.f32.mrf.mxu0
    %v1167 = vadd.f32 0.0, %v1166
    %v1168 = vpop.f32.mrf.mxu0
    %1169 = vmatprep.mubr.bf16.mxu0 0
    %1170 = vmatmul.mubr.bf16.gmra.mxu0 %v1121
    %v1171 = vpop.f32.mrf.mxu0
    %v1172 = vadd.f32 0.0, %v1171
    %v1173 = vpop.f32.mrf.mxu0
    %v1174 = vpop.f32.mrf.mxu0
    %v1175 = vadd.f32 0.0, %v1174
    %v1176 = vpop.f32.mrf.mxu0
    %1177 = vmatprep.mubr.bf16.mxu0 0
    %1178 = vmatmul.mubr.bf16.gmra.mxu0 %v1124
    %v1179 = vpop.f32.mrf.mxu0
    %v1180 = vadd.f32 0.0, %v1179
    %v1181 = vpop.f32.mrf.mxu0
    %v1182 = vpop.f32.mrf.mxu0
    %v1183 = vadd.f32 0.0, %v1182
    %v1184 = vpop.f32.mrf.mxu0
    %1185 = vmatprep.mubr.bf16.mxu0 0
    %1186 = vmatmul.mubr.bf16.gmra.mxu0 %v1127
    %v1187 = vpop.f32.mrf.mxu0
    %v1188 = vadd.f32 0.0, %v1187
    %v1189 = vpop.f32.mrf.mxu0
    %v1190 = vpop.f32.mrf.mxu0
    %v1191 = vadd.f32 0.0, %v1190
    %v1192 = vpop.f32.mrf.mxu0
    %1193 = vdwg.mxu0
    %v1194 = vadd.f32 %v1164, %v1172
    %v1195 = vadd.f32 %v1167, %v1175
    %v1196 = vadd.f32 %v1194, %v1180
    %v1197 = vadd.f32 %v1195, %v1183
    %v1198 = vadd.f32 %v1196, %v1188
    %v1199 = vadd.f32 %v1197, %v1191
    %v1200 = vpack.c.bf16 %v1199, %v1198
    %v1205 = vunpack.c.l.b16 %v868
    %v1206 = vunpack.c.l.b16 %v869
    %v1207 = vunpack.c.l.b16 %v870
    %v1208 = vunpack.c.l.b16 %v871
    %v1209 = vpack.c.b16 %v1206, %v1205
    %v1210 = vpack.c.b16 %v1208, %v1207
    %v1214 = vsel %vm122, %v1200, 0
    %1216 = vmatprep.subr.bf16.mxu0 0
    %1217 = vmatpush1.bf16.msra.mxu0 0
    %1218 = vmatprep.subr.bf16.mxu0 0
    %1219 = vmatpush1.bf16.msra.mxu0 0
    %1220 = vmatprep.subr.bf16.mxu0 0
    %1221 = vmatpush1.bf16.msra.mxu0 0
    %1222 = vmatprep.subr.bf16.mxu0 0
    %1223 = vmatpush1.bf16.msra.mxu0 0
    %1224 = vmatprep.subr.bf16.mxu0 0
    %1225 = vmatpush1.bf16.msra.mxu0 0
    %1226 = vmatprep.subr.bf16.mxu0 0
    %1227 = vmatpush1.bf16.msra.mxu0 0
    %1228 = vmatprep.subr.bf16.mxu0 0
    %1229 = vmatpush1.bf16.msra.mxu0 %v1210
    %1230 = vmatprep.subr.bf16.mxu0 0
    %1231 = vmatpush1.bf16.msra.mxu0 %v1209
    %1232 = vmatprep.subr.bf16.mxu0 0
    %1233 = vmatpush2.bf16.msra.mxu0 0
    %1234 = vmatprep.subr.bf16.mxu0 0
    %1235 = vmatpush2.bf16.msra.mxu0 0
    %1236 = vmatprep.subr.bf16.mxu0 0
    %1237 = vmatpush2.bf16.msra.mxu0 0
    %1238 = vmatprep.subr.bf16.mxu0 0
    %1239 = vmatpush2.bf16.msra.mxu0 0
    %1240 = vmatprep.subr.bf16.mxu0 0
    %1241 = vmatpush2.bf16.msra.mxu0 0
    %1242 = vmatprep.subr.bf16.mxu0 0
    %1243 = vmatpush2.bf16.msra.mxu0 0
    %1244 = vmatprep.subr.bf16.mxu0 0
    %1245 = vmatpush2.bf16.msra.mxu0 0
    %1246 = vmatprep.subr.bf16.mxu0 0
    %1247 = vmatpush2.bf16.msra.mxu0 0
    %1248 = vmatprep.mubr.bf16.mxu0 0
    %1249 = vmatmul.mubr.bf16.gmra.mxu0 %v1214
    %v1250 = vpop.f32.mrf.mxu0
    %v1251 = vadd.f32 0.0, %v1250
    %v1252 = vpop.f32.mrf.mxu0
    %v1253 = vpop.f32.mrf.mxu0
    %v1254 = vadd.f32 0.0, %v1253
    %v1255 = vpop.f32.mrf.mxu0
    %1256 = vdwg.mxu0
    %v1257 = vadd.f32 %v678, %v1251
    %v1258 = vadd.f32 %v679, %v1254
    %v1259 = vlaneseq
    %v1260 = vshrl.u32 %v1259, 7
    %v1261 = vsub.s32 0, %v1260
    %v1262 = vrot.slane %v121, %v1261
    %v1263 = vadd.f32 %v1257, %v1262
    %v1264 = vadd.f32 %v1258, %v1262
    %v1265 = vsel %vm122, %v1263, 0.0
    %1266 = vadd.xlane.f32.xlu0 %v1265
    %v1267 = vpop.xlane.xlu0 %1266
    %v1268 = vsel %vm122, %v1264, 0.0
    %1269 = vadd.xlane.f32.xlu0 %v1268
    %v1270 = vpop.xlane.xlu0 %1269
    %v1271 = vmul.f32 %v1267, %v129
    %v1272 = vmul.f32 %v1270, %v129
    %v1273 = vsub.f32 %v1263, %v1271
    %v1274 = vsub.f32 %v1264, %v1272
    %v1275 = vmul.f32 %v1273, %v1273
    %v1276 = vmul.f32 %v1274, %v1274
    %v1277 = vsel %vm122, %v1275, 0.0
    %1278 = vadd.xlane.f32.xlu0 %v1277
    %v1279 = vpop.xlane.xlu0 %1278
    %v1280 = vsel %vm122, %v1276, 0.0
    %1281 = vadd.xlane.f32.xlu0 %v1280
    %v1282 = vpop.xlane.xlu0 %1281
    %v1283 = vmul.f32 %v1279, 0.032258064
    %v1284 = vmul.f32 %v1282, 0.032258064
    %v1285 = vrsqrt.pop %v1283
    %v1286 = vmul.f32 %v1283, %v1285
    %vm1287 = vcmp.eq.f32.partialorder %v1283, inf
    %v1288 = vsel %vm1287, %v1283, %v1286
    %vm1289 = vcmp.eq.f32.partialorder %v1283, 0.0
    %v1290 = vand.u32 %v1283, 2147483648
    %v1291 = vsel %vm1289, %v1290, %v1288
    %v1292 = vrsqrt.pop %v1284
    %v1293 = vmul.f32 %v1284, %v1292
    %vm1294 = vcmp.eq.f32.partialorder %v1284, inf
    %v1295 = vsel %vm1294, %v1284, %v1293
    %vm1296 = vcmp.eq.f32.partialorder %v1284, 0.0
    %v1297 = vand.u32 %v1284, 2147483648
    %v1298 = vsel %vm1296, %v1297, %v1295
    %v1299 = vlaneseq
    %v1300 = vshrl.u32 %v1299, 7
    %v1301 = vsub.s32 4, %v1300
    %v1302 = vrot.slane %v120, %v1301
    %v1303 = vmul.f32 %v1302, %v1273
    %v1304 = vmul.f32 %v1302, %v1274
    %v1305 = vadd.f32 %v1291, 1e-06
    %v1306 = vadd.f32 %v1298, 1e-06
    %v1307 = vrcp.pop %v1305
    %v1308 = vmul.f32 %v1303, %v1307
    %v1309 = vrcp.pop %v1306
    %v1310 = vmul.f32 %v1304, %v1309
    %v1311 = vlaneseq
    %v1312 = vshrl.u32 %v1311, 7
    %v1313 = vsub.s32 5, %v1312
    %v1314 = vrot.slane %v120, %v1313
    %v1315 = vadd.f32 %v1308, %v1314
    %v1316 = vadd.f32 %v1310, %v1314
    %v1317 = vpack.c.bf16 %v1316, %v1315
    %v1318 = vld [vmem:[%s9] sm:$0xf]
    %v1319 = vld [vmem:[%s9 + $0x4] sm:$0xf]
    %v1320 = vld [vmem:[%s9 + $0x8] sm:$0xf]
    %v1321 = vld [vmem:[%s9 + $0xc] sm:$0xf]
    %v1322 = vld [vmem:[%s13] sm:$0x1]
    %v1324 = vlaneseq
    %v1325 = vshrl.u32 %v1324, 7
    %v1326 = vsub.s32 0, %v1325
    %v1327 = vrot.slane %v1322, %v1326
    %v1333 = vunpack.c.l.b16 %v1318
    %v1334 = vunpack.c.l.b16 %v1319
    %v1335 = vunpack.c.l.b16 %v1320
    %v1336 = vunpack.c.l.b16 %v1321
    %v1337 = vpack.c.b16 %v1334, %v1333
    %v1338 = vpack.c.b16 %v1336, %v1335
    %v1342 = vsel %vm122, %v1317, 0
    %1344 = vmatprep.subr.bf16.mxu0 0
    %1345 = vmatpush1.bf16.msra.mxu0 0
    %1346 = vmatprep.subr.bf16.mxu0 0
    %1347 = vmatpush1.bf16.msra.mxu0 0
    %1348 = vmatprep.subr.bf16.mxu0 0
    %1349 = vmatpush1.bf16.msra.mxu0 0
    %1350 = vmatprep.subr.bf16.mxu0 0
    %1351 = vmatpush1.bf16.msra.mxu0 0
    %1352 = vmatprep.subr.bf16.mxu0 0
    %1353 = vmatpush1.bf16.msra.mxu0 0
    %1354 = vmatprep.subr.bf16.mxu0 0
    %1355 = vmatpush1.bf16.msra.mxu0 0
    %1356 = vmatprep.subr.bf16.mxu0 0
    %1357 = vmatpush1.bf16.msra.mxu0 %v1338
    %1358 = vmatprep.subr.bf16.mxu0 0
    %1359 = vmatpush1.bf16.msra.mxu0 %v1337
    %1360 = vmatprep.subr.bf16.mxu0 0
    %1361 = vmatpush2.bf16.msra.mxu0 0
    %1362 = vmatprep.subr.bf16.mxu0 0
    %1363 = vmatpush2.bf16.msra.mxu0 0
    %1364 = vmatprep.subr.bf16.mxu0 0
    %1365 = vmatpush2.bf16.msra.mxu0 0
    %1366 = vmatprep.subr.bf16.mxu0 0
    %1367 = vmatpush2.bf16.msra.mxu0 0
    %1368 = vmatprep.subr.bf16.mxu0 0
    %1369 = vmatpush2.bf16.msra.mxu0 0
    %1370 = vmatprep.subr.bf16.mxu0 0
    %1371 = vmatpush2.bf16.msra.mxu0 0
    %1372 = vmatprep.subr.bf16.mxu0 0
    %1373 = vmatpush2.bf16.msra.mxu0 0
    %1374 = vmatprep.subr.bf16.mxu0 0
    %1375 = vmatpush2.bf16.msra.mxu0 0
    %1376 = vmatprep.mubr.bf16.mxu0 0
    %1377 = vmatmul.mubr.bf16.gmra.mxu0 %v1342
    %v1378 = vpop.f32.mrf.mxu0
    %v1379 = vadd.f32 %v1327, %v1378
    %v1380 = vpop.f32.mrf.mxu0
    %v1381 = vpop.f32.mrf.mxu0
    %v1382 = vadd.f32 %v1327, %v1381
    %v1383 = vpop.f32.mrf.mxu0
    %1384 = vdwg.mxu0
    %v1385 = vmax.f32 %v1379, 0.0
    %v1386 = vmax.f32 %v1382, 0.0
    %v1387 = vpack.c.bf16 %v1386, %v1385
    %v1388 = vld [vmem:[%s10] sm:$0xf]
    %v1389 = vld [vmem:[%s10 + $0x4] sm:$0xf]
    %v1390 = vld [vmem:[%s10 + $0x8] sm:$0xf]
    %v1391 = vld [vmem:[%s10 + $0xc] sm:$0xf]
    %v1392 = vld [vmem:[%s10 + $0x10] sm:$0xf]
    %v1393 = vld [vmem:[%s10 + $0x14] sm:$0xf]
    %v1394 = vld [vmem:[%s10 + $0x18] sm:$0xf]
    %v1395 = vld [vmem:[%s10 + $0x1c] sm:$0xf]
    %v1404 = vunpack.c.l.b16 %v1388
    %v1405 = vunpack.c.l.b16 %v1389
    %v1406 = vunpack.c.l.b16 %v1390
    %v1407 = vunpack.c.l.b16 %v1391
    %v1408 = vunpack.c.l.b16 %v1392
    %v1409 = vunpack.c.l.b16 %v1393
    %v1410 = vunpack.c.l.b16 %v1394
    %v1411 = vunpack.c.l.b16 %v1395
    %v1412 = vpack.c.b16 %v1405, %v1404
    %v1413 = vpack.c.b16 %v1407, %v1406
    %v1414 = vpack.c.b16 %v1409, %v1408
    %v1415 = vpack.c.b16 %v1411, %v1410
    %v1421 = vsel %vm423, %v1387, 0
    %1423 = vmatprep.subr.bf16.mxu0 0
    %1424 = vmatpush1.bf16.msra.mxu0 0
    %1425 = vmatprep.subr.bf16.mxu0 0
    %1426 = vmatpush1.bf16.msra.mxu0 0
    %1427 = vmatprep.subr.bf16.mxu0 0
    %1428 = vmatpush1.bf16.msra.mxu0 0
    %1429 = vmatprep.subr.bf16.mxu0 0
    %1430 = vmatpush1.bf16.msra.mxu0 0
    %1431 = vmatprep.subr.bf16.mxu0 0
    %1432 = vmatpush1.bf16.msra.mxu0 %v1415
    %1433 = vmatprep.subr.bf16.mxu0 0
    %1434 = vmatpush1.bf16.msra.mxu0 %v1414
    %1435 = vmatprep.subr.bf16.mxu0 0
    %1436 = vmatpush1.bf16.msra.mxu0 %v1413
    %1437 = vmatprep.subr.bf16.mxu0 0
    %1438 = vmatpush1.bf16.msra.mxu0 %v1412
    %1439 = vmatprep.subr.bf16.mxu0 0
    %1440 = vmatpush2.bf16.msra.mxu0 0
    %1441 = vmatprep.subr.bf16.mxu0 0
    %1442 = vmatpush2.bf16.msra.mxu0 0
    %1443 = vmatprep.subr.bf16.mxu0 0
    %1444 = vmatpush2.bf16.msra.mxu0 0
    %1445 = vmatprep.subr.bf16.mxu0 0
    %1446 = vmatpush2.bf16.msra.mxu0 0
    %1447 = vmatprep.subr.bf16.mxu0 0
    %1448 = vmatpush2.bf16.msra.mxu0 0
    %1449 = vmatprep.subr.bf16.mxu0 0
    %1450 = vmatpush2.bf16.msra.mxu0 0
    %1451 = vmatprep.subr.bf16.mxu0 0
    %1452 = vmatpush2.bf16.msra.mxu0 0
    %1453 = vmatprep.subr.bf16.mxu0 0
    %1454 = vmatpush2.bf16.msra.mxu0 0
    %1455 = vmatprep.mubr.bf16.mxu0 0
    %1456 = vmatmul.mubr.bf16.gmra.mxu0 %v1421
    %v1457 = vpop.f32.mrf.mxu0
    %v1458 = vadd.f32 0.0, %v1457
    %v1459 = vpop.f32.mrf.mxu0
    %v1460 = vpop.f32.mrf.mxu0
    %v1461 = vadd.f32 0.0, %v1460
    %v1462 = vpop.f32.mrf.mxu0
    %1463 = vdwg.mxu0
    %v1464 = vadd.f32 %v1263, %v1458
    %v1465 = vadd.f32 %v1264, %v1461
    %v1466 = vlaneseq
    %v1467 = vshrl.u32 %v1466, 7
    %v1468 = vsub.s32 1, %v1467
    %v1469 = vrot.slane %v121, %v1468
    %v1470 = vadd.f32 %v1464, %v1469
    %v1471 = vadd.f32 %v1465, %v1469
    %s1472 = scalar_lea.vmem %s14, 16
    %v1473 = vld [vmem:[%s1472] sm:$0xff]
    %v1474 = vld [vmem:[%s1472 + $0x8] sm:$0x3]
    %v1475 = vsel %vm122, %v1470, 0.0
    %1476 = vadd.xlane.f32.xlu0 %v1475
    %v1477 = vpop.xlane.xlu0 %1476
    %v1478 = vsel %vm122, %v1471, 0.0
    %1479 = vadd.xlane.f32.xlu0 %v1478
    %v1480 = vpop.xlane.xlu0 %1479
    %v1481 = vmul.f32 %v1477, %v129
    %v1482 = vmul.f32 %v1480, %v129
    %v1483 = vsub.f32 %v1470, %v1481
    %v1484 = vsub.f32 %v1471, %v1482
    %v1485 = vmul.f32 %v1483, %v1483
    %v1486 = vmul.f32 %v1484, %v1484
    %v1487 = vsel %vm122, %v1485, 0.0
    %1488 = vadd.xlane.f32.xlu0 %v1487
    %v1489 = vpop.xlane.xlu0 %1488
    %v1490 = vsel %vm122, %v1486, 0.0
    %1491 = vadd.xlane.f32.xlu0 %v1490
    %v1492 = vpop.xlane.xlu0 %1491
    %v1493 = vmul.f32 %v1489, 0.032258064
    %v1494 = vmul.f32 %v1492, 0.032258064
    %v1495 = vrsqrt.pop %v1493
    %v1496 = vmul.f32 %v1493, %v1495
    %vm1497 = vcmp.eq.f32.partialorder %v1493, inf
    %v1498 = vsel %vm1497, %v1493, %v1496
    %vm1499 = vcmp.eq.f32.partialorder %v1493, 0.0
    %v1500 = vand.u32 %v1493, 2147483648
    %v1501 = vsel %vm1499, %v1500, %v1498
    %v1502 = vrsqrt.pop %v1494
    %v1503 = vmul.f32 %v1494, %v1502
    %vm1504 = vcmp.eq.f32.partialorder %v1494, inf
    %v1505 = vsel %vm1504, %v1494, %v1503
    %vm1506 = vcmp.eq.f32.partialorder %v1494, 0.0
    %v1507 = vand.u32 %v1494, 2147483648
    %v1508 = vsel %vm1506, %v1507, %v1505
    %v1509 = vlaneseq
    %v1510 = vshrl.u32 %v1509, 7
    %v1511 = vsub.s32 0, %v1510
    %v1512 = vrot.slane %v1473, %v1511
    %v1513 = vmul.f32 %v1512, %v1483
    %v1514 = vmul.f32 %v1512, %v1484
    %v1515 = vadd.f32 %v1501, 1e-06
    %v1516 = vadd.f32 %v1508, 1e-06
    %v1517 = vrcp.pop %v1515
    %v1518 = vmul.f32 %v1513, %v1517
    %v1519 = vrcp.pop %v1516
    %v1520 = vmul.f32 %v1514, %v1519
    %v1521 = vlaneseq
    %v1522 = vshrl.u32 %v1521, 7
    %v1523 = vsub.s32 1, %v1522
    %v1524 = vrot.slane %v1473, %v1523
    %v1525 = vadd.f32 %v1518, %v1524
    %v1526 = vadd.f32 %v1520, %v1524
    %v1527 = vpack.c.bf16 %v1526, %v1525
    %s1528 = scalar_lea.vmem %s6, 16
    %v1529 = vld [vmem:[%s1528] sm:$0xf]
    %v1530 = vld [vmem:[%s1528 + $0x4] sm:$0xf]
    %v1531 = vld [vmem:[%s1528 + $0x8] sm:$0xf]
    %v1532 = vld [vmem:[%s1528 + $0xc] sm:$0xf]
    %s1533 = scalar_lea.vmem %s11, 1
    %v1534 = vld [vmem:[%s1533] sm:$0x1]
    %v1536 = vlaneseq
    %v1537 = vshrl.u32 %v1536, 7
    %v1538 = vsub.s32 0, %v1537
    %v1539 = vrot.slane %v1534, %v1538
    %v1545 = vunpack.c.l.b16 %v1529
    %v1546 = vunpack.c.l.b16 %v1530
    %v1547 = vunpack.c.l.b16 %v1531
    %v1548 = vunpack.c.l.b16 %v1532
    %v1549 = vpack.c.b16 %v1546, %v1545
    %v1550 = vpack.c.b16 %v1548, %v1547
    %v1554 = vsel %vm122, %v1527, 0
    %1556 = vmatprep.subr.bf16.mxu0 0
    %1557 = vmatpush1.bf16.msra.mxu0 0
    %1558 = vmatprep.subr.bf16.mxu0 0
    %1559 = vmatpush1.bf16.msra.mxu0 0
    %1560 = vmatprep.subr.bf16.mxu0 0
    %1561 = vmatpush1.bf16.msra.mxu0 0
    %1562 = vmatprep.subr.bf16.mxu0 0
    %1563 = vmatpush1.bf16.msra.mxu0 0
    %1564 = vmatprep.subr.bf16.mxu0 0
    %1565 = vmatpush1.bf16.msra.mxu0 0
    %1566 = vmatprep.subr.bf16.mxu0 0
    %1567 = vmatpush1.bf16.msra.mxu0 0
    %1568 = vmatprep.subr.bf16.mxu0 0
    %1569 = vmatpush1.bf16.msra.mxu0 %v1550
    %1570 = vmatprep.subr.bf16.mxu0 0
    %1571 = vmatpush1.bf16.msra.mxu0 %v1549
    %1572 = vmatprep.subr.bf16.mxu0 0
    %1573 = vmatpush2.bf16.msra.mxu0 0
    %1574 = vmatprep.subr.bf16.mxu0 0
    %1575 = vmatpush2.bf16.msra.mxu0 0
    %1576 = vmatprep.subr.bf16.mxu0 0
    %1577 = vmatpush2.bf16.msra.mxu0 0
    %1578 = vmatprep.subr.bf16.mxu0 0
    %1579 = vmatpush2.bf16.msra.mxu0 0
    %1580 = vmatprep.subr.bf16.mxu0 0
    %1581 = vmatpush2.bf16.msra.mxu0 0
    %1582 = vmatprep.subr.bf16.mxu0 0
    %1583 = vmatpush2.bf16.msra.mxu0 0
    %1584 = vmatprep.subr.bf16.mxu0 0
    %1585 = vmatpush2.bf16.msra.mxu0 0
    %1586 = vmatprep.subr.bf16.mxu0 0
    %1587 = vmatpush2.bf16.msra.mxu0 0
    %1588 = vmatprep.mubr.bf16.mxu0 0
    %1589 = vmatmul.mubr.bf16.gmra.mxu0 %v1554
    %v1590 = vpop.f32.mrf.mxu0
    %v1591 = vadd.f32 %v1539, %v1590
    %v1592 = vpop.f32.mrf.mxu0
    %v1593 = vpop.f32.mrf.mxu0
    %v1594 = vadd.f32 %v1539, %v1593
    %v1595 = vpop.f32.mrf.mxu0
    %1596 = vdwg.mxu0
    %v1597 = vmul.f32 %v1591, 0.35355338
    %v1598 = vmul.f32 %v1594, 0.35355338
    %s1599 = scalar_lea.vmem %s7, 48
    %v1600 = vld [vmem:[%s1599] sm:$0xf]
    %v1601 = vld [vmem:[%s1599 + $0x4] sm:$0xf]
    %v1602 = vld [vmem:[%s1599 + $0x8] sm:$0xf]
    %v1603 = vld [vmem:[%s1599 + $0xc] sm:$0xf]
    %v1604 = vpack.c.bf16 %v1598, %v1597
    %v1605 = vmul.f32 %v1591, %v260
    %v1606 = vmul.f32 %v1594, %v262
    %v1607 = vmul.f32 %v1591, %v264
    %v1608 = vmul.f32 %v1594, %v266
    %v1609 = vmul.f32 %v1591, %v268
    %v1610 = vmul.f32 %v1594, %v270
    %v1611 = vmul.f32 %v1591, %v272
    %v1612 = vmul.f32 %v1594, %v274
    %v1613 = vpack.c.bf16 %v1606, %v1605
    %v1614 = vpack.c.bf16 %v1608, %v1607
    %v1615 = vpack.c.bf16 %v1610, %v1609
    %v1616 = vpack.c.bf16 %v1612, %v1611
    %v1617 = vmul.f32 %v1591, %v296
    %v1618 = vmul.f32 %v1594, %v298
    %v1619 = vmul.f32 %v1591, %v300
    %v1620 = vmul.f32 %v1594, %v302
    %v1621 = vmul.f32 %v1591, %v304
    %v1622 = vmul.f32 %v1594, %v306
    %v1623 = vmul.f32 %v1591, %v308
    %v1624 = vmul.f32 %v1594, %v310
    %v1625 = vpack.c.bf16 %v1618, %v1617
    %v1626 = vpack.c.bf16 %v1620, %v1619
    %v1627 = vpack.c.bf16 %v1622, %v1621
    %v1628 = vpack.c.bf16 %v1624, %v1623
    %1633 = vrot.lane.b32.xlu0 %v1613, 96
    %v1634 = vpop.permute.xlu0 %1633
    %1635 = vrot.lane.b32.xlu0 %v1614, 96
    %v1636 = vpop.permute.xlu0 %1635
    %1637 = vrot.lane.b32.xlu0 %v1615, 96
    %v1638 = vpop.permute.xlu0 %1637
    %1639 = vrot.lane.b32.xlu0 %v1616, 96
    %v1640 = vpop.permute.xlu0 %1639
    %v1642 = vsel %vm122, %v1604, 0
    %v1645 = vsel %vm122, %v1634, 0
    %v1648 = vsel %vm122, %v1636, 0
    %v1651 = vsel %vm122, %v1638, 0
    %v1654 = vsel %vm122, %v1640, 0
    %1656 = vmatprep.subr.bf16.mxu0 0
    %1657 = vmatpush1.bf16.xpose.msra.mxu0 0
    %1658 = vmatprep.subr.bf16.mxu0 0
    %1659 = vmatpush1.bf16.xpose.msra.mxu0 0
    %1660 = vmatprep.subr.bf16.mxu0 0
    %1661 = vmatpush1.bf16.xpose.msra.mxu0 0
    %1662 = vmatprep.subr.bf16.mxu0 0
    %1663 = vmatpush1.bf16.xpose.msra.mxu0 0
    %1664 = vmatprep.subr.bf16.mxu0 0
    %1665 = vmatpush1.bf16.xpose.msra.mxu0 %v1654
    %1666 = vmatprep.subr.bf16.mxu0 0
    %1667 = vmatpush1.bf16.xpose.msra.mxu0 %v1651
    %1668 = vmatprep.subr.bf16.mxu0 0
    %1669 = vmatpush1.bf16.xpose.msra.mxu0 %v1648
    %1670 = vmatprep.subr.bf16.mxu0 0
    %1671 = vmatpush1.bf16.xpose.msra.mxu0 %v1645
    %1672 = vmatprep.subr.bf16.mxu0 0
    %1673 = vmatpush2.bf16.xpose.msra.mxu0 0
    %1674 = vmatprep.subr.bf16.mxu0 0
    %1675 = vmatpush2.bf16.xpose.msra.mxu0 0
    %1676 = vmatprep.subr.bf16.mxu0 0
    %1677 = vmatpush2.bf16.xpose.msra.mxu0 0
    %1678 = vmatprep.subr.bf16.mxu0 0
    %1679 = vmatpush2.bf16.xpose.msra.mxu0 0
    %1680 = vmatprep.subr.bf16.mxu0 0
    %1681 = vmatpush2.bf16.xpose.msra.mxu0 0
    %1682 = vmatprep.subr.bf16.mxu0 0
    %1683 = vmatpush2.bf16.xpose.msra.mxu0 0
    %1684 = vmatprep.subr.bf16.mxu0 0
    %1685 = vmatpush2.bf16.xpose.msra.mxu0 0
    %1686 = vmatprep.subr.bf16.mxu0 0
    %1687 = vmatpush2.bf16.xpose.msra.mxu0 0
    %1688 = vmatprep.mubr.bf16.mxu0 0
    %1689 = vmatmul.mubr.bf16.gmra.mxu0 %v1642
    %v1690 = vpop.f32.mrf.mxu0
    %v1691 = vadd.f32 %v88, %v1690
    %v1692 = vpop.f32.mrf.mxu0
    %v1693 = vpop.f32.mrf.mxu0
    %v1694 = vadd.f32 %v89, %v1693
    %v1695 = vpop.f32.mrf.mxu0
    %1696 = vmatprep.mubr.bf16.mxu0 0
    %1697 = vmatmul.mubr.bf16.gmra.mxu0 %v1642
    %v1698 = vpop.f32.mrf.mxu0
    %v1699 = vadd.f32 %v90, %v1698
    %v1700 = vpop.f32.mrf.mxu0
    %v1701 = vpop.f32.mrf.mxu0
    %v1702 = vadd.f32 %v91, %v1701
    %v1703 = vpop.f32.mrf.mxu0
    %1704 = vmatprep.mubr.bf16.mxu0 0
    %1705 = vmatmul.mubr.bf16.gmra.mxu0 %v1642
    %v1706 = vpop.f32.mrf.mxu0
    %v1707 = vadd.f32 %v92, %v1706
    %v1708 = vpop.f32.mrf.mxu0
    %v1709 = vpop.f32.mrf.mxu0
    %v1710 = vadd.f32 %v93, %v1709
    %v1711 = vpop.f32.mrf.mxu0
    %1712 = vmatprep.mubr.bf16.mxu0 0
    %1713 = vmatmul.mubr.bf16.gmra.mxu0 %v1642
    %v1714 = vpop.f32.mrf.mxu0
    %v1715 = vadd.f32 %v94, %v1714
    %v1716 = vpop.f32.mrf.mxu0
    %v1717 = vpop.f32.mrf.mxu0
    %v1718 = vadd.f32 %v95, %v1717
    %v1719 = vpop.f32.mrf.mxu0
    %1720 = vdwg.mxu0
    %v1721 = vsel %vm423, %v1691, -inf
    %1722 = vmax.xlane.f32.xlu0 %v1721
    %v1723 = vpop.xlane.xlu0 %1722
    %v1724 = vsel %vm423, %v1694, -inf
    %1725 = vmax.xlane.f32.xlu0 %v1724
    %v1726 = vpop.xlane.xlu0 %1725
    %v1727 = vsel %vm423, %v1699, -inf
    %1728 = vmax.xlane.f32.xlu0 %v1727
    %v1729 = vpop.xlane.xlu0 %1728
    %v1730 = vsel %vm423, %v1702, -inf
    %1731 = vmax.xlane.f32.xlu0 %v1730
    %v1732 = vpop.xlane.xlu0 %1731
    %v1733 = vsel %vm423, %v1707, -inf
    %1734 = vmax.xlane.f32.xlu0 %v1733
    %v1735 = vpop.xlane.xlu0 %1734
    %v1736 = vsel %vm423, %v1710, -inf
    %1737 = vmax.xlane.f32.xlu0 %v1736
    %v1738 = vpop.xlane.xlu0 %1737
    %v1739 = vsel %vm423, %v1715, -inf
    %1740 = vmax.xlane.f32.xlu0 %v1739
    %v1741 = vpop.xlane.xlu0 %1740
    %v1742 = vsel %vm423, %v1718, -inf
    %1743 = vmax.xlane.f32.xlu0 %v1742
    %v1744 = vpop.xlane.xlu0 %1743
    %v1745 = vsub.f32 %v1691, %v1723
    %v1746 = vsub.f32 %v1694, %v1726
    %v1747 = vsub.f32 %v1699, %v1729
    %v1748 = vsub.f32 %v1702, %v1732
    %v1749 = vsub.f32 %v1707, %v1735
    %v1750 = vsub.f32 %v1710, %v1738
    %v1751 = vsub.f32 %v1715, %v1741
    %v1752 = vsub.f32 %v1718, %v1744
    %v1753 = vmul.f32 %v1745, 1.442695
    %v1754 = vpow.pop %v1753
    %v1755 = vmul.f32 %v1746, 1.442695
    %v1756 = vpow.pop %v1755
    %v1757 = vmul.f32 %v1747, 1.442695
    %v1758 = vpow.pop %v1757
    %v1759 = vmul.f32 %v1748, 1.442695
    %v1760 = vpow.pop %v1759
    %v1761 = vmul.f32 %v1749, 1.442695
    %v1762 = vpow.pop %v1761
    %v1763 = vmul.f32 %v1750, 1.442695
    %v1764 = vpow.pop %v1763
    %v1765 = vmul.f32 %v1751, 1.442695
    %v1766 = vpow.pop %v1765
    %v1767 = vmul.f32 %v1752, 1.442695
    %v1768 = vpow.pop %v1767
    %v1769 = vsel %vm423, %v1754, 0.0
    %1770 = vadd.xlane.f32.xlu0 %v1769
    %v1771 = vpop.xlane.xlu0 %1770
    %v1772 = vsel %vm423, %v1756, 0.0
    %1773 = vadd.xlane.f32.xlu0 %v1772
    %v1774 = vpop.xlane.xlu0 %1773
    %v1775 = vsel %vm423, %v1758, 0.0
    %1776 = vadd.xlane.f32.xlu0 %v1775
    %v1777 = vpop.xlane.xlu0 %1776
    %v1778 = vsel %vm423, %v1760, 0.0
    %1779 = vadd.xlane.f32.xlu0 %v1778
    %v1780 = vpop.xlane.xlu0 %1779
    %v1781 = vsel %vm423, %v1762, 0.0
    %1782 = vadd.xlane.f32.xlu0 %v1781
    %v1783 = vpop.xlane.xlu0 %1782
    %v1784 = vsel %vm423, %v1764, 0.0
    %1785 = vadd.xlane.f32.xlu0 %v1784
    %v1786 = vpop.xlane.xlu0 %1785
    %v1787 = vsel %vm423, %v1766, 0.0
    %1788 = vadd.xlane.f32.xlu0 %v1787
    %v1789 = vpop.xlane.xlu0 %1788
    %v1790 = vsel %vm423, %v1768, 0.0
    %1791 = vadd.xlane.f32.xlu0 %v1790
    %v1792 = vpop.xlane.xlu0 %1791
    %v1793 = vrcp.pop %v1771
    %v1794 = vrcp.pop %v1774
    %v1795 = vrcp.pop %v1777
    %v1796 = vrcp.pop %v1780
    %v1797 = vrcp.pop %v1783
    %v1798 = vrcp.pop %v1786
    %v1799 = vrcp.pop %v1789
    %v1800 = vrcp.pop %v1792
    %v1801 = vmul.f32 %v1754, %v1793
    %v1802 = vmul.f32 %v1756, %v1794
    %v1803 = vmul.f32 %v1758, %v1795
    %v1804 = vmul.f32 %v1760, %v1796
    %v1805 = vmul.f32 %v1762, %v1797
    %v1806 = vmul.f32 %v1764, %v1798
    %v1807 = vmul.f32 %v1766, %v1799
    %v1808 = vmul.f32 %v1768, %v1800
    %v1809 = vpack.c.bf16 %v1802, %v1801
    %v1810 = vpack.c.bf16 %v1804, %v1803
    %v1811 = vpack.c.bf16 %v1806, %v1805
    %v1812 = vpack.c.bf16 %v1808, %v1807
    %1817 = vrot.lane.b32.xlu0 %v1625, 64
    %v1818 = vpop.permute.xlu0 %1817
    %1819 = vrot.lane.b32.xlu0 %v1626, 64
    %v1820 = vpop.permute.xlu0 %1819
    %1821 = vrot.lane.b32.xlu0 %v1627, 64
    %v1822 = vpop.permute.xlu0 %1821
    %1823 = vrot.lane.b32.xlu0 %v1628, 64
    %v1824 = vpop.permute.xlu0 %1823
    %v1830 = vsel %vm423, %v1809, 0
    %v1833 = vsel %vm423, %v1810, 0
    %v1836 = vsel %vm423, %v1811, 0
    %v1839 = vsel %vm423, %v1812, 0
    %1841 = vmatprep.subr.bf16.mxu0 0
    %1842 = vmatpush1.bf16.msra.mxu0 0
    %1843 = vmatprep.subr.bf16.mxu0 0
    %1844 = vmatpush1.bf16.msra.mxu0 0
    %1845 = vmatprep.subr.bf16.mxu0 0
    %1846 = vmatpush1.bf16.msra.mxu0 0
    %1847 = vmatprep.subr.bf16.mxu0 0
    %1848 = vmatpush1.bf16.msra.mxu0 0
    %1849 = vmatprep.subr.bf16.mxu0 0
    %1850 = vmatpush1.bf16.msra.mxu0 %v1824
    %1851 = vmatprep.subr.bf16.mxu0 0
    %1852 = vmatpush1.bf16.msra.mxu0 %v1822
    %1853 = vmatprep.subr.bf16.mxu0 0
    %1854 = vmatpush1.bf16.msra.mxu0 %v1820
    %1855 = vmatprep.subr.bf16.mxu0 0
    %1856 = vmatpush1.bf16.msra.mxu0 %v1818
    %1857 = vmatprep.subr.bf16.mxu0 0
    %1858 = vmatpush2.bf16.msra.mxu0 0
    %1859 = vmatprep.subr.bf16.mxu0 0
    %1860 = vmatpush2.bf16.msra.mxu0 0
    %1861 = vmatprep.subr.bf16.mxu0 0
    %1862 = vmatpush2.bf16.msra.mxu0 0
    %1863 = vmatprep.subr.bf16.mxu0 0
    %1864 = vmatpush2.bf16.msra.mxu0 0
    %1865 = vmatprep.subr.bf16.mxu0 0
    %1866 = vmatpush2.bf16.msra.mxu0 0
    %1867 = vmatprep.subr.bf16.mxu0 0
    %1868 = vmatpush2.bf16.msra.mxu0 0
    %1869 = vmatprep.subr.bf16.mxu0 0
    %1870 = vmatpush2.bf16.msra.mxu0 0
    %1871 = vmatprep.subr.bf16.mxu0 0
    %1872 = vmatpush2.bf16.msra.mxu0 0
    %1873 = vmatprep.mubr.bf16.mxu0 0
    %1874 = vmatmul.mubr.bf16.gmra.mxu0 %v1830
    %v1875 = vpop.f32.mrf.mxu0
    %v1876 = vadd.f32 0.0, %v1875
    %v1877 = vpop.f32.mrf.mxu0
    %v1878 = vpop.f32.mrf.mxu0
    %v1879 = vadd.f32 0.0, %v1878
    %v1880 = vpop.f32.mrf.mxu0
    %1881 = vmatprep.mubr.bf16.mxu0 0
    %1882 = vmatmul.mubr.bf16.gmra.mxu0 %v1833
    %v1883 = vpop.f32.mrf.mxu0
    %v1884 = vadd.f32 0.0, %v1883
    %v1885 = vpop.f32.mrf.mxu0
    %v1886 = vpop.f32.mrf.mxu0
    %v1887 = vadd.f32 0.0, %v1886
    %v1888 = vpop.f32.mrf.mxu0
    %1889 = vmatprep.mubr.bf16.mxu0 0
    %1890 = vmatmul.mubr.bf16.gmra.mxu0 %v1836
    %v1891 = vpop.f32.mrf.mxu0
    %v1892 = vadd.f32 0.0, %v1891
    %v1893 = vpop.f32.mrf.mxu0
    %v1894 = vpop.f32.mrf.mxu0
    %v1895 = vadd.f32 0.0, %v1894
    %v1896 = vpop.f32.mrf.mxu0
    %1897 = vmatprep.mubr.bf16.mxu0 0
    %1898 = vmatmul.mubr.bf16.gmra.mxu0 %v1839
    %v1899 = vpop.f32.mrf.mxu0
    %v1900 = vadd.f32 0.0, %v1899
    %v1901 = vpop.f32.mrf.mxu0
    %v1902 = vpop.f32.mrf.mxu0
    %v1903 = vadd.f32 0.0, %v1902
    %v1904 = vpop.f32.mrf.mxu0
    %1905 = vdwg.mxu0
    %v1906 = vadd.f32 %v1876, %v1884
    %v1907 = vadd.f32 %v1879, %v1887
    %v1908 = vadd.f32 %v1906, %v1892
    %v1909 = vadd.f32 %v1907, %v1895
    %v1910 = vadd.f32 %v1908, %v1900
    %v1911 = vadd.f32 %v1909, %v1903
    %v1912 = vpack.c.bf16 %v1911, %v1910
    %v1917 = vunpack.c.l.b16 %v1600
    %v1918 = vunpack.c.l.b16 %v1601
    %v1919 = vunpack.c.l.b16 %v1602
    %v1920 = vunpack.c.l.b16 %v1603
    %v1921 = vpack.c.b16 %v1918, %v1917
    %v1922 = vpack.c.b16 %v1920, %v1919
    %v1926 = vsel %vm122, %v1912, 0
    %1928 = vmatprep.subr.bf16.mxu0 0
    %1929 = vmatpush1.bf16.msra.mxu0 0
    %1930 = vmatprep.subr.bf16.mxu0 0
    %1931 = vmatpush1.bf16.msra.mxu0 0
    %1932 = vmatprep.subr.bf16.mxu0 0
    %1933 = vmatpush1.bf16.msra.mxu0 0
    %1934 = vmatprep.subr.bf16.mxu0 0
    %1935 = vmatpush1.bf16.msra.mxu0 0
    %1936 = vmatprep.subr.bf16.mxu0 0
    %1937 = vmatpush1.bf16.msra.mxu0 0
    %1938 = vmatprep.subr.bf16.mxu0 0
    %1939 = vmatpush1.bf16.msra.mxu0 0
    %1940 = vmatprep.subr.bf16.mxu0 0
    %1941 = vmatpush1.bf16.msra.mxu0 %v1922
    %1942 = vmatprep.subr.bf16.mxu0 0
    %1943 = vmatpush1.bf16.msra.mxu0 %v1921
    %1944 = vmatprep.subr.bf16.mxu0 0
    %1945 = vmatpush2.bf16.msra.mxu0 0
    %1946 = vmatprep.subr.bf16.mxu0 0
    %1947 = vmatpush2.bf16.msra.mxu0 0
    %1948 = vmatprep.subr.bf16.mxu0 0
    %1949 = vmatpush2.bf16.msra.mxu0 0
    %1950 = vmatprep.subr.bf16.mxu0 0
    %1951 = vmatpush2.bf16.msra.mxu0 0
    %1952 = vmatprep.subr.bf16.mxu0 0
    %1953 = vmatpush2.bf16.msra.mxu0 0
    %1954 = vmatprep.subr.bf16.mxu0 0
    %1955 = vmatpush2.bf16.msra.mxu0 0
    %1956 = vmatprep.subr.bf16.mxu0 0
    %1957 = vmatpush2.bf16.msra.mxu0 0
    %1958 = vmatprep.subr.bf16.mxu0 0
    %1959 = vmatpush2.bf16.msra.mxu0 0
    %1960 = vmatprep.mubr.bf16.mxu0 0
    %1961 = vmatmul.mubr.bf16.gmra.mxu0 %v1926
    %v1962 = vpop.f32.mrf.mxu0
    %v1963 = vadd.f32 0.0, %v1962
    %v1964 = vpop.f32.mrf.mxu0
    %v1965 = vpop.f32.mrf.mxu0
    %v1966 = vadd.f32 0.0, %v1965
    %v1967 = vpop.f32.mrf.mxu0
    %1968 = vdwg.mxu0
    %v1969 = vadd.f32 %v1470, %v1963
    %v1970 = vadd.f32 %v1471, %v1966
    %v1971 = vlaneseq
    %v1972 = vshrl.u32 %v1971, 7
    %v1973 = vsub.s32 6, %v1972
    %v1974 = vrot.slane %v1473, %v1973
    %v1975 = vadd.f32 %v1969, %v1974
    %v1976 = vadd.f32 %v1970, %v1974
    %v1977 = vsel %vm122, %v1975, 0.0
    %1978 = vadd.xlane.f32.xlu0 %v1977
    %v1979 = vpop.xlane.xlu0 %1978
    %v1980 = vsel %vm122, %v1976, 0.0
    %1981 = vadd.xlane.f32.xlu0 %v1980
    %v1982 = vpop.xlane.xlu0 %1981
    %v1983 = vmul.f32 %v1979, %v129
    %v1984 = vmul.f32 %v1982, %v129
    %v1985 = vsub.f32 %v1975, %v1983
    %v1986 = vsub.f32 %v1976, %v1984
    %v1987 = vmul.f32 %v1985, %v1985
    %v1988 = vmul.f32 %v1986, %v1986
    %v1989 = vsel %vm122, %v1987, 0.0
    %1990 = vadd.xlane.f32.xlu0 %v1989
    %v1991 = vpop.xlane.xlu0 %1990
    %v1992 = vsel %vm122, %v1988, 0.0
    %1993 = vadd.xlane.f32.xlu0 %v1992
    %v1994 = vpop.xlane.xlu0 %1993
    %v1995 = vmul.f32 %v1991, 0.032258064
    %v1996 = vmul.f32 %v1994, 0.032258064
    %v1997 = vrsqrt.pop %v1995
    %v1998 = vmul.f32 %v1995, %v1997
    %vm1999 = vcmp.eq.f32.partialorder %v1995, inf
    %v2000 = vsel %vm1999, %v1995, %v1998
    %vm2001 = vcmp.eq.f32.partialorder %v1995, 0.0
    %v2002 = vand.u32 %v1995, 2147483648
    %v2003 = vsel %vm2001, %v2002, %v2000
    %v2004 = vrsqrt.pop %v1996
    %v2005 = vmul.f32 %v1996, %v2004
    %vm2006 = vcmp.eq.f32.partialorder %v1996, inf
    %v2007 = vsel %vm2006, %v1996, %v2005
    %vm2008 = vcmp.eq.f32.partialorder %v1996, 0.0
    %v2009 = vand.u32 %v1996, 2147483648
    %v2010 = vsel %vm2008, %v2009, %v2007
    %v2011 = vlaneseq
    %v2012 = vshrl.u32 %v2011, 7
    %v2013 = vsub.s32 2, %v2012
    %v2014 = vrot.slane %v1473, %v2013
    %v2015 = vmul.f32 %v2014, %v1985
    %v2016 = vmul.f32 %v2014, %v1986
    %v2017 = vadd.f32 %v2003, 1e-06
    %v2018 = vadd.f32 %v2010, 1e-06
    %v2019 = vrcp.pop %v2017
    %v2020 = vmul.f32 %v2015, %v2019
    %v2021 = vrcp.pop %v2018
    %v2022 = vmul.f32 %v2016, %v2021
    %v2023 = vlaneseq
    %v2024 = vshrl.u32 %v2023, 7
    %v2025 = vsub.s32 3, %v2024
    %v2026 = vrot.slane %v1473, %v2025
    %v2027 = vadd.f32 %v2020, %v2026
    %v2028 = vadd.f32 %v2022, %v2026
    %v2029 = vpack.c.bf16 %v2028, %v2027
    %s2030 = scalar_lea.vmem %s7, 64
    %v2031 = vld [vmem:[%s2030] sm:$0xf]
    %v2032 = vld [vmem:[%s2030 + $0x4] sm:$0xf]
    %v2033 = vld [vmem:[%s2030 + $0x8] sm:$0xf]
    %v2034 = vld [vmem:[%s2030 + $0xc] sm:$0xf]
    %v2035 = vlaneseq
    %v2036 = vshrl.u32 %v2035, 7
    %v2037 = vsub.s32 7, %v2036
    %v2038 = vrot.slane %v1473, %v2037
    %v2043 = vunpack.c.l.b16 %v2031
    %v2044 = vunpack.c.l.b16 %v2032
    %v2045 = vunpack.c.l.b16 %v2033
    %v2046 = vunpack.c.l.b16 %v2034
    %v2047 = vpack.c.b16 %v2044, %v2043
    %v2048 = vpack.c.b16 %v2046, %v2045
    %v2052 = vsel %vm122, %v2029, 0
    %2054 = vmatprep.subr.bf16.mxu0 0
    %2055 = vmatpush1.bf16.msra.mxu0 0
    %2056 = vmatprep.subr.bf16.mxu0 0
    %2057 = vmatpush1.bf16.msra.mxu0 0
    %2058 = vmatprep.subr.bf16.mxu0 0
    %2059 = vmatpush1.bf16.msra.mxu0 0
    %2060 = vmatprep.subr.bf16.mxu0 0
    %2061 = vmatpush1.bf16.msra.mxu0 0
    %2062 = vmatprep.subr.bf16.mxu0 0
    %2063 = vmatpush1.bf16.msra.mxu0 0
    %2064 = vmatprep.subr.bf16.mxu0 0
    %2065 = vmatpush1.bf16.msra.mxu0 0
    %2066 = vmatprep.subr.bf16.mxu0 0
    %2067 = vmatpush1.bf16.msra.mxu0 %v2048
    %2068 = vmatprep.subr.bf16.mxu0 0
    %2069 = vmatpush1.bf16.msra.mxu0 %v2047
    %2070 = vmatprep.subr.bf16.mxu0 0
    %2071 = vmatpush2.bf16.msra.mxu0 0
    %2072 = vmatprep.subr.bf16.mxu0 0
    %2073 = vmatpush2.bf16.msra.mxu0 0
    %2074 = vmatprep.subr.bf16.mxu0 0
    %2075 = vmatpush2.bf16.msra.mxu0 0
    %2076 = vmatprep.subr.bf16.mxu0 0
    %2077 = vmatpush2.bf16.msra.mxu0 0
    %2078 = vmatprep.subr.bf16.mxu0 0
    %2079 = vmatpush2.bf16.msra.mxu0 0
    %2080 = vmatprep.subr.bf16.mxu0 0
    %2081 = vmatpush2.bf16.msra.mxu0 0
    %2082 = vmatprep.subr.bf16.mxu0 0
    %2083 = vmatpush2.bf16.msra.mxu0 0
    %2084 = vmatprep.subr.bf16.mxu0 0
    %2085 = vmatpush2.bf16.msra.mxu0 0
    %2086 = vmatprep.mubr.bf16.mxu0 0
    %2087 = vmatmul.mubr.bf16.gmra.mxu0 %v2052
    %v2088 = vpop.f32.mrf.mxu0
    %v2089 = vadd.f32 %v2038, %v2088
    %v2090 = vpop.f32.mrf.mxu0
    %v2091 = vpop.f32.mrf.mxu0
    %v2092 = vadd.f32 %v2038, %v2091
    %v2093 = vpop.f32.mrf.mxu0
    %2094 = vdwg.mxu0
    %s2095 = scalar_lea.vmem %s8, 16
    %v2096 = vld [vmem:[%s2095] sm:$0xf]
    %v2097 = vld [vmem:[%s2095 + $0x4] sm:$0xf]
    %v2098 = vld [vmem:[%s2095 + $0x8] sm:$0xf]
    %v2099 = vld [vmem:[%s2095 + $0xc] sm:$0xf]
    %s2100 = scalar_lea.vmem %s12, 1
    %v2101 = vld [vmem:[%s2100] sm:$0x1]
    %v2103 = vlaneseq
    %v2104 = vshrl.u32 %v2103, 7
    %v2105 = vsub.s32 0, %v2104
    %v2106 = vrot.slane %v2101, %v2105
    %v2112 = vunpack.c.l.b16 %v2096
    %v2113 = vunpack.c.l.b16 %v2097
    %v2114 = vunpack.c.l.b16 %v2098
    %v2115 = vunpack.c.l.b16 %v2099
    %v2116 = vpack.c.b16 %v2113, %v2112
    %v2117 = vpack.c.b16 %v2115, %v2114
    %2120 = vmatprep.subr.bf16.mxu0 0
    %2121 = vmatpush1.bf16.msra.mxu0 0
    %2122 = vmatprep.subr.bf16.mxu0 0
    %2123 = vmatpush1.bf16.msra.mxu0 0
    %2124 = vmatprep.subr.bf16.mxu0 0
    %2125 = vmatpush1.bf16.msra.mxu0 0
    %2126 = vmatprep.subr.bf16.mxu0 0
    %2127 = vmatpush1.bf16.msra.mxu0 0
    %2128 = vmatprep.subr.bf16.mxu0 0
    %2129 = vmatpush1.bf16.msra.mxu0 0
    %2130 = vmatprep.subr.bf16.mxu0 0
    %2131 = vmatpush1.bf16.msra.mxu0 0
    %2132 = vmatprep.subr.bf16.mxu0 0
    %2133 = vmatpush1.bf16.msra.mxu0 %v2117
    %2134 = vmatprep.subr.bf16.mxu0 0
    %2135 = vmatpush1.bf16.msra.mxu0 %v2116
    %2136 = vmatprep.subr.bf16.mxu0 0
    %2137 = vmatpush2.bf16.msra.mxu0 0
    %2138 = vmatprep.subr.bf16.mxu0 0
    %2139 = vmatpush2.bf16.msra.mxu0 0
    %2140 = vmatprep.subr.bf16.mxu0 0
    %2141 = vmatpush2.bf16.msra.mxu0 0
    %2142 = vmatprep.subr.bf16.mxu0 0
    %2143 = vmatpush2.bf16.msra.mxu0 0
    %2144 = vmatprep.subr.bf16.mxu0 0
    %2145 = vmatpush2.bf16.msra.mxu0 0
    %2146 = vmatprep.subr.bf16.mxu0 0
    %2147 = vmatpush2.bf16.msra.mxu0 0
    %2148 = vmatprep.subr.bf16.mxu0 0
    %2149 = vmatpush2.bf16.msra.mxu0 0
    %2150 = vmatprep.subr.bf16.mxu0 0
    %2151 = vmatpush2.bf16.msra.mxu0 0
    %2152 = vmatprep.mubr.bf16.mxu0 0
    %2153 = vmatmul.mubr.bf16.gmra.mxu0 %v822
    %v2154 = vpop.f32.mrf.mxu0
    %v2155 = vadd.f32 %v2106, %v2154
    %v2156 = vpop.f32.mrf.mxu0
    %v2157 = vpop.f32.mrf.mxu0
    %v2158 = vadd.f32 %v2106, %v2157
    %v2159 = vpop.f32.mrf.mxu0
    %2160 = vdwg.mxu0
    %v2161 = vmul.f32 %v2089, 0.35355338
    %v2162 = vmul.f32 %v2092, 0.35355338
    %s2163 = scalar_lea.vmem %s7, 80
    %v2164 = vld [vmem:[%s2163] sm:$0xf]
    %v2165 = vld [vmem:[%s2163 + $0x4] sm:$0xf]
    %v2166 = vld [vmem:[%s2163 + $0x8] sm:$0xf]
    %v2167 = vld [vmem:[%s2163 + $0xc] sm:$0xf]
    %v2168 = vpack.c.bf16 %v2162, %v2161
    %v2169 = vmul.f32 %v2155, %v112
    %v2170 = vmul.f32 %v2158, %v113
    %v2171 = vmul.f32 %v2155, %v114
    %v2172 = vmul.f32 %v2158, %v115
    %v2173 = vmul.f32 %v2155, %v116
    %v2174 = vmul.f32 %v2158, %v117
    %v2175 = vmul.f32 %v2155, %v118
    %v2176 = vmul.f32 %v2158, %v119
    %v2177 = vpack.c.bf16 %v2170, %v2169
    %v2178 = vpack.c.bf16 %v2172, %v2171
    %v2179 = vpack.c.bf16 %v2174, %v2173
    %v2180 = vpack.c.bf16 %v2176, %v2175
    %v2181 = vmul.f32 %v2155, %v894
    %v2182 = vmul.f32 %v2158, %v896
    %v2183 = vmul.f32 %v2155, %v898
    %v2184 = vmul.f32 %v2158, %v900
    %v2185 = vmul.f32 %v2155, %v902
    %v2186 = vmul.f32 %v2158, %v904
    %v2187 = vmul.f32 %v2155, %v906
    %v2188 = vmul.f32 %v2158, %v908
    %v2189 = vpack.c.bf16 %v2182, %v2181
    %v2190 = vpack.c.bf16 %v2184, %v2183
    %v2191 = vpack.c.bf16 %v2186, %v2185
    %v2192 = vpack.c.bf16 %v2188, %v2187
    %v2194 = vsel %vm122, %v2168, 0
    %v2197 = vsel %vm122, %v2177, 0
    %v2200 = vsel %vm122, %v2178, 0
    %v2203 = vsel %vm122, %v2179, 0
    %v2206 = vsel %vm122, %v2180, 0
    %2208 = vmatprep.subr.bf16.mxu0 0
    %2209 = vmatpush1.bf16.xpose.msra.mxu0 0
    %2210 = vmatprep.subr.bf16.mxu0 0
    %2211 = vmatpush1.bf16.xpose.msra.mxu0 0
    %2212 = vmatprep.subr.bf16.mxu0 0
    %2213 = vmatpush1.bf16.xpose.msra.mxu0 0
    %2214 = vmatprep.subr.bf16.mxu0 0
    %2215 = vmatpush1.bf16.xpose.msra.mxu0 0
    %2216 = vmatprep.subr.bf16.mxu0 0
    %2217 = vmatpush1.bf16.xpose.msra.mxu0 %v2206
    %2218 = vmatprep.subr.bf16.mxu0 0
    %2219 = vmatpush1.bf16.xpose.msra.mxu0 %v2203
    %2220 = vmatprep.subr.bf16.mxu0 0
    %2221 = vmatpush1.bf16.xpose.msra.mxu0 %v2200
    %2222 = vmatprep.subr.bf16.mxu0 0
    %2223 = vmatpush1.bf16.xpose.msra.mxu0 %v2197
    %2224 = vmatprep.subr.bf16.mxu0 0
    %2225 = vmatpush2.bf16.xpose.msra.mxu0 0
    %2226 = vmatprep.subr.bf16.mxu0 0
    %2227 = vmatpush2.bf16.xpose.msra.mxu0 0
    %2228 = vmatprep.subr.bf16.mxu0 0
    %2229 = vmatpush2.bf16.xpose.msra.mxu0 0
    %2230 = vmatprep.subr.bf16.mxu0 0
    %2231 = vmatpush2.bf16.xpose.msra.mxu0 0
    %2232 = vmatprep.subr.bf16.mxu0 0
    %2233 = vmatpush2.bf16.xpose.msra.mxu0 0
    %2234 = vmatprep.subr.bf16.mxu0 0
    %2235 = vmatpush2.bf16.xpose.msra.mxu0 0
    %2236 = vmatprep.subr.bf16.mxu0 0
    %2237 = vmatpush2.bf16.xpose.msra.mxu0 0
    %2238 = vmatprep.subr.bf16.mxu0 0
    %2239 = vmatpush2.bf16.xpose.msra.mxu0 0
    %2240 = vmatprep.mubr.bf16.mxu0 0
    %2241 = vmatmul.mubr.bf16.gmra.mxu0 %v2194
    %v2242 = vpop.f32.mrf.mxu0
    %v2243 = vadd.f32 %v96, %v2242
    %v2244 = vpop.f32.mrf.mxu0
    %v2245 = vpop.f32.mrf.mxu0
    %v2246 = vadd.f32 %v97, %v2245
    %v2247 = vpop.f32.mrf.mxu0
    %2248 = vmatprep.mubr.bf16.mxu0 0
    %2249 = vmatmul.mubr.bf16.gmra.mxu0 %v2194
    %v2250 = vpop.f32.mrf.mxu0
    %v2251 = vadd.f32 %v98, %v2250
    %v2252 = vpop.f32.mrf.mxu0
    %v2253 = vpop.f32.mrf.mxu0
    %v2254 = vadd.f32 %v99, %v2253
    %v2255 = vpop.f32.mrf.mxu0
    %2256 = vmatprep.mubr.bf16.mxu0 0
    %2257 = vmatmul.mubr.bf16.gmra.mxu0 %v2194
    %v2258 = vpop.f32.mrf.mxu0
    %v2259 = vadd.f32 %v100, %v2258
    %v2260 = vpop.f32.mrf.mxu0
    %v2261 = vpop.f32.mrf.mxu0
    %v2262 = vadd.f32 %v101, %v2261
    %v2263 = vpop.f32.mrf.mxu0
    %2264 = vmatprep.mubr.bf16.mxu0 0
    %2265 = vmatmul.mubr.bf16.gmra.mxu0 %v2194
    %v2266 = vpop.f32.mrf.mxu0
    %v2267 = vadd.f32 %v102, %v2266
    %v2268 = vpop.f32.mrf.mxu0
    %v2269 = vpop.f32.mrf.mxu0
    %v2270 = vadd.f32 %v103, %v2269
    %v2271 = vpop.f32.mrf.mxu0
    %2272 = vdwg.mxu0
    %v2273 = vsel %vm423, %v2243, -inf
    %2274 = vmax.xlane.f32.xlu0 %v2273
    %v2275 = vpop.xlane.xlu0 %2274
    %v2276 = vsel %vm423, %v2246, -inf
    %2277 = vmax.xlane.f32.xlu0 %v2276
    %v2278 = vpop.xlane.xlu0 %2277
    %v2279 = vsel %vm423, %v2251, -inf
    %2280 = vmax.xlane.f32.xlu0 %v2279
    %v2281 = vpop.xlane.xlu0 %2280
    %v2282 = vsel %vm423, %v2254, -inf
    %2283 = vmax.xlane.f32.xlu0 %v2282
    %v2284 = vpop.xlane.xlu0 %2283
    %v2285 = vsel %vm423, %v2259, -inf
    %2286 = vmax.xlane.f32.xlu0 %v2285
    %v2287 = vpop.xlane.xlu0 %2286
    %v2288 = vsel %vm423, %v2262, -inf
    %2289 = vmax.xlane.f32.xlu0 %v2288
    %v2290 = vpop.xlane.xlu0 %2289
    %v2291 = vsel %vm423, %v2267, -inf
    %2292 = vmax.xlane.f32.xlu0 %v2291
    %v2293 = vpop.xlane.xlu0 %2292
    %v2294 = vsel %vm423, %v2270, -inf
    %2295 = vmax.xlane.f32.xlu0 %v2294
    %v2296 = vpop.xlane.xlu0 %2295
    %v2297 = vsub.f32 %v2243, %v2275
    %v2298 = vsub.f32 %v2246, %v2278
    %v2299 = vsub.f32 %v2251, %v2281
    %v2300 = vsub.f32 %v2254, %v2284
    %v2301 = vsub.f32 %v2259, %v2287
    %v2302 = vsub.f32 %v2262, %v2290
    %v2303 = vsub.f32 %v2267, %v2293
    %v2304 = vsub.f32 %v2270, %v2296
    %v2305 = vmul.f32 %v2297, 1.442695
    %v2306 = vpow.pop %v2305
    %v2307 = vmul.f32 %v2298, 1.442695
    %v2308 = vpow.pop %v2307
    %v2309 = vmul.f32 %v2299, 1.442695
    %v2310 = vpow.pop %v2309
    %v2311 = vmul.f32 %v2300, 1.442695
    %v2312 = vpow.pop %v2311
    %v2313 = vmul.f32 %v2301, 1.442695
    %v2314 = vpow.pop %v2313
    %v2315 = vmul.f32 %v2302, 1.442695
    %v2316 = vpow.pop %v2315
    %v2317 = vmul.f32 %v2303, 1.442695
    %v2318 = vpow.pop %v2317
    %v2319 = vmul.f32 %v2304, 1.442695
    %v2320 = vpow.pop %v2319
    %v2321 = vsel %vm423, %v2306, 0.0
    %2322 = vadd.xlane.f32.xlu0 %v2321
    %v2323 = vpop.xlane.xlu0 %2322
    %v2324 = vsel %vm423, %v2308, 0.0
    %2325 = vadd.xlane.f32.xlu0 %v2324
    %v2326 = vpop.xlane.xlu0 %2325
    %v2327 = vsel %vm423, %v2310, 0.0
    %2328 = vadd.xlane.f32.xlu0 %v2327
    %v2329 = vpop.xlane.xlu0 %2328
    %v2330 = vsel %vm423, %v2312, 0.0
    %2331 = vadd.xlane.f32.xlu0 %v2330
    %v2332 = vpop.xlane.xlu0 %2331
    %v2333 = vsel %vm423, %v2314, 0.0
    %2334 = vadd.xlane.f32.xlu0 %v2333
    %v2335 = vpop.xlane.xlu0 %2334
    %v2336 = vsel %vm423, %v2316, 0.0
    %2337 = vadd.xlane.f32.xlu0 %v2336
    %v2338 = vpop.xlane.xlu0 %2337
    %v2339 = vsel %vm423, %v2318, 0.0
    %2340 = vadd.xlane.f32.xlu0 %v2339
    %v2341 = vpop.xlane.xlu0 %2340
    %v2342 = vsel %vm423, %v2320, 0.0
    %2343 = vadd.xlane.f32.xlu0 %v2342
    %v2344 = vpop.xlane.xlu0 %2343
    %v2345 = vrcp.pop %v2323
    %v2346 = vrcp.pop %v2326
    %v2347 = vrcp.pop %v2329
    %v2348 = vrcp.pop %v2332
    %v2349 = vrcp.pop %v2335
    %v2350 = vrcp.pop %v2338
    %v2351 = vrcp.pop %v2341
    %v2352 = vrcp.pop %v2344
    %v2353 = vmul.f32 %v2306, %v2345
    %v2354 = vmul.f32 %v2308, %v2346
    %v2355 = vmul.f32 %v2310, %v2347
    %v2356 = vmul.f32 %v2312, %v2348
    %v2357 = vmul.f32 %v2314, %v2349
    %v2358 = vmul.f32 %v2316, %v2350
    %v2359 = vmul.f32 %v2318, %v2351
    %v2360 = vmul.f32 %v2320, %v2352
    %v2361 = vpack.c.bf16 %v2354, %v2353
    %v2362 = vpack.c.bf16 %v2356, %v2355
    %v2363 = vpack.c.bf16 %v2358, %v2357
    %v2364 = vpack.c.bf16 %v2360, %v2359
    %2369 = vrot.lane.b32.xlu0 %v2189, 96
    %v2370 = vpop.permute.xlu0 %2369
    %2371 = vrot.lane.b32.xlu0 %v2190, 96
    %v2372 = vpop.permute.xlu0 %2371
    %2373 = vrot.lane.b32.xlu0 %v2191, 96
    %v2374 = vpop.permute.xlu0 %2373
    %2375 = vrot.lane.b32.xlu0 %v2192, 96
    %v2376 = vpop.permute.xlu0 %2375
    %v2382 = vsel %vm423, %v2361, 0
    %v2385 = vsel %vm423, %v2362, 0
    %v2388 = vsel %vm423, %v2363, 0
    %v2391 = vsel %vm423, %v2364, 0
    %2393 = vmatprep.subr.bf16.mxu0 0
    %2394 = vmatpush1.bf16.msra.mxu0 0
    %2395 = vmatprep.subr.bf16.mxu0 0
    %2396 = vmatpush1.bf16.msra.mxu0 0
    %2397 = vmatprep.subr.bf16.mxu0 0
    %2398 = vmatpush1.bf16.msra.mxu0 0
    %2399 = vmatprep.subr.bf16.mxu0 0
    %2400 = vmatpush1.bf16.msra.mxu0 0
    %2401 = vmatprep.subr.bf16.mxu0 0
    %2402 = vmatpush1.bf16.msra.mxu0 %v2376
    %2403 = vmatprep.subr.bf16.mxu0 0
    %2404 = vmatpush1.bf16.msra.mxu0 %v2374
    %2405 = vmatprep.subr.bf16.mxu0 0
    %2406 = vmatpush1.bf16.msra.mxu0 %v2372
    %2407 = vmatprep.subr.bf16.mxu0 0
    %2408 = vmatpush1.bf16.msra.mxu0 %v2370
    %2409 = vmatprep.subr.bf16.mxu0 0
    %2410 = vmatpush2.bf16.msra.mxu0 0
    %2411 = vmatprep.subr.bf16.mxu0 0
    %2412 = vmatpush2.bf16.msra.mxu0 0
    %2413 = vmatprep.subr.bf16.mxu0 0
    %2414 = vmatpush2.bf16.msra.mxu0 0
    %2415 = vmatprep.subr.bf16.mxu0 0
    %2416 = vmatpush2.bf16.msra.mxu0 0
    %2417 = vmatprep.subr.bf16.mxu0 0
    %2418 = vmatpush2.bf16.msra.mxu0 0
    %2419 = vmatprep.subr.bf16.mxu0 0
    %2420 = vmatpush2.bf16.msra.mxu0 0
    %2421 = vmatprep.subr.bf16.mxu0 0
    %2422 = vmatpush2.bf16.msra.mxu0 0
    %2423 = vmatprep.subr.bf16.mxu0 0
    %2424 = vmatpush2.bf16.msra.mxu0 0
    %2425 = vmatprep.mubr.bf16.mxu0 0
    %2426 = vmatmul.mubr.bf16.gmra.mxu0 %v2382
    %v2427 = vpop.f32.mrf.mxu0
    %v2428 = vadd.f32 0.0, %v2427
    %v2429 = vpop.f32.mrf.mxu0
    %v2430 = vpop.f32.mrf.mxu0
    %v2431 = vadd.f32 0.0, %v2430
    %v2432 = vpop.f32.mrf.mxu0
    %2433 = vmatprep.mubr.bf16.mxu0 0
    %2434 = vmatmul.mubr.bf16.gmra.mxu0 %v2385
    %v2435 = vpop.f32.mrf.mxu0
    %v2436 = vadd.f32 0.0, %v2435
    %v2437 = vpop.f32.mrf.mxu0
    %v2438 = vpop.f32.mrf.mxu0
    %v2439 = vadd.f32 0.0, %v2438
    %v2440 = vpop.f32.mrf.mxu0
    %2441 = vmatprep.mubr.bf16.mxu0 0
    %2442 = vmatmul.mubr.bf16.gmra.mxu0 %v2388
    %v2443 = vpop.f32.mrf.mxu0
    %v2444 = vadd.f32 0.0, %v2443
    %v2445 = vpop.f32.mrf.mxu0
    %v2446 = vpop.f32.mrf.mxu0
    %v2447 = vadd.f32 0.0, %v2446
    %v2448 = vpop.f32.mrf.mxu0
    %2449 = vmatprep.mubr.bf16.mxu0 0
    %2450 = vmatmul.mubr.bf16.gmra.mxu0 %v2391
    %v2451 = vpop.f32.mrf.mxu0
    %v2452 = vadd.f32 0.0, %v2451
    %v2453 = vpop.f32.mrf.mxu0
    %v2454 = vpop.f32.mrf.mxu0
    %v2455 = vadd.f32 0.0, %v2454
    %v2456 = vpop.f32.mrf.mxu0
    %2457 = vdwg.mxu0
    %v2458 = vadd.f32 %v2428, %v2436
    %v2459 = vadd.f32 %v2431, %v2439
    %v2460 = vadd.f32 %v2458, %v2444
    %v2461 = vadd.f32 %v2459, %v2447
    %v2462 = vadd.f32 %v2460, %v2452
    %v2463 = vadd.f32 %v2461, %v2455
    %v2464 = vpack.c.bf16 %v2463, %v2462
    %v2469 = vunpack.c.l.b16 %v2164
    %v2470 = vunpack.c.l.b16 %v2165
    %v2471 = vunpack.c.l.b16 %v2166
    %v2472 = vunpack.c.l.b16 %v2167
    %v2473 = vpack.c.b16 %v2470, %v2469
    %v2474 = vpack.c.b16 %v2472, %v2471
    %v2478 = vsel %vm122, %v2464, 0
    %2480 = vmatprep.subr.bf16.mxu0 0
    %2481 = vmatpush1.bf16.msra.mxu0 0
    %2482 = vmatprep.subr.bf16.mxu0 0
    %2483 = vmatpush1.bf16.msra.mxu0 0
    %2484 = vmatprep.subr.bf16.mxu0 0
    %2485 = vmatpush1.bf16.msra.mxu0 0
    %2486 = vmatprep.subr.bf16.mxu0 0
    %2487 = vmatpush1.bf16.msra.mxu0 0
    %2488 = vmatprep.subr.bf16.mxu0 0
    %2489 = vmatpush1.bf16.msra.mxu0 0
    %2490 = vmatprep.subr.bf16.mxu0 0
    %2491 = vmatpush1.bf16.msra.mxu0 0
    %2492 = vmatprep.subr.bf16.mxu0 0
    %2493 = vmatpush1.bf16.msra.mxu0 %v2474
    %2494 = vmatprep.subr.bf16.mxu0 0
    %2495 = vmatpush1.bf16.msra.mxu0 %v2473
    %2496 = vmatprep.subr.bf16.mxu0 0
    %2497 = vmatpush2.bf16.msra.mxu0 0
    %2498 = vmatprep.subr.bf16.mxu0 0
    %2499 = vmatpush2.bf16.msra.mxu0 0
    %2500 = vmatprep.subr.bf16.mxu0 0
    %2501 = vmatpush2.bf16.msra.mxu0 0
    %2502 = vmatprep.subr.bf16.mxu0 0
    %2503 = vmatpush2.bf16.msra.mxu0 0
    %2504 = vmatprep.subr.bf16.mxu0 0
    %2505 = vmatpush2.bf16.msra.mxu0 0
    %2506 = vmatprep.subr.bf16.mxu0 0
    %2507 = vmatpush2.bf16.msra.mxu0 0
    %2508 = vmatprep.subr.bf16.mxu0 0
    %2509 = vmatpush2.bf16.msra.mxu0 0
    %2510 = vmatprep.subr.bf16.mxu0 0
    %2511 = vmatpush2.bf16.msra.mxu0 0
    %2512 = vmatprep.mubr.bf16.mxu0 0
    %2513 = vmatmul.mubr.bf16.gmra.mxu0 %v2478
    %v2514 = vpop.f32.mrf.mxu0
    %v2515 = vadd.f32 0.0, %v2514
    %v2516 = vpop.f32.mrf.mxu0
    %v2517 = vpop.f32.mrf.mxu0
    %v2518 = vadd.f32 0.0, %v2517
    %v2519 = vpop.f32.mrf.mxu0
    %2520 = vdwg.mxu0
    %v2521 = vadd.f32 %v1975, %v2515
    %v2522 = vadd.f32 %v1976, %v2518
    %v2523 = vlaneseq
    %v2524 = vshrl.u32 %v2523, 7
    %v2525 = vsub.s32 0, %v2524
    %v2526 = vrot.slane %v1474, %v2525
    %v2527 = vadd.f32 %v2521, %v2526
    %v2528 = vadd.f32 %v2522, %v2526
    %v2529 = vsel %vm122, %v2527, 0.0
    %2530 = vadd.xlane.f32.xlu0 %v2529
    %v2531 = vpop.xlane.xlu0 %2530
    %v2532 = vsel %vm122, %v2528, 0.0
    %2533 = vadd.xlane.f32.xlu0 %v2532
    %v2534 = vpop.xlane.xlu0 %2533
    %v2535 = vmul.f32 %v2531, %v129
    %v2536 = vmul.f32 %v2534, %v129
    %v2537 = vsub.f32 %v2527, %v2535
    %v2538 = vsub.f32 %v2528, %v2536
    %v2539 = vmul.f32 %v2537, %v2537
    %v2540 = vmul.f32 %v2538, %v2538
    %v2541 = vsel %vm122, %v2539, 0.0
    %2542 = vadd.xlane.f32.xlu0 %v2541
    %v2543 = vpop.xlane.xlu0 %2542
    %v2544 = vsel %vm122, %v2540, 0.0
    %2545 = vadd.xlane.f32.xlu0 %v2544
    %v2546 = vpop.xlane.xlu0 %2545
    %v2547 = vmul.f32 %v2543, 0.032258064
    %v2548 = vmul.f32 %v2546, 0.032258064
    %v2549 = vrsqrt.pop %v2547
    %v2550 = vmul.f32 %v2547, %v2549
    %vm2551 = vcmp.eq.f32.partialorder %v2547, inf
    %v2552 = vsel %vm2551, %v2547, %v2550
    %vm2553 = vcmp.eq.f32.partialorder %v2547, 0.0
    %v2554 = vand.u32 %v2547, 2147483648
    %v2555 = vsel %vm2553, %v2554, %v2552
    %v2556 = vrsqrt.pop %v2548
    %v2557 = vmul.f32 %v2548, %v2556
    %vm2558 = vcmp.eq.f32.partialorder %v2548, inf
    %v2559 = vsel %vm2558, %v2548, %v2557
    %vm2560 = vcmp.eq.f32.partialorder %v2548, 0.0
    %v2561 = vand.u32 %v2548, 2147483648
    %v2562 = vsel %vm2560, %v2561, %v2559
    %v2563 = vlaneseq
    %v2564 = vshrl.u32 %v2563, 7
    %v2565 = vsub.s32 4, %v2564
    %v2566 = vrot.slane %v1473, %v2565
    %v2567 = vmul.f32 %v2566, %v2537
    %v2568 = vmul.f32 %v2566, %v2538
    %v2569 = vadd.f32 %v2555, 1e-06
    %v2570 = vadd.f32 %v2562, 1e-06
    %v2571 = vrcp.pop %v2569
    %v2572 = vmul.f32 %v2567, %v2571
    %v2573 = vrcp.pop %v2570
    %v2574 = vmul.f32 %v2568, %v2573
    %v2575 = vlaneseq
    %v2576 = vshrl.u32 %v2575, 7
    %v2577 = vsub.s32 5, %v2576
    %v2578 = vrot.slane %v1473, %v2577
    %v2579 = vadd.f32 %v2572, %v2578
    %v2580 = vadd.f32 %v2574, %v2578
    %v2581 = vpack.c.bf16 %v2580, %v2579
    %s2582 = scalar_lea.vmem %s9, 16
    %v2583 = vld [vmem:[%s2582] sm:$0xf]
    %v2584 = vld [vmem:[%s2582 + $0x4] sm:$0xf]
    %v2585 = vld [vmem:[%s2582 + $0x8] sm:$0xf]
    %v2586 = vld [vmem:[%s2582 + $0xc] sm:$0xf]
    %s2587 = scalar_lea.vmem %s13, 1
    %v2588 = vld [vmem:[%s2587] sm:$0x1]
    %v2590 = vlaneseq
    %v2591 = vshrl.u32 %v2590, 7
    %v2592 = vsub.s32 0, %v2591
    %v2593 = vrot.slane %v2588, %v2592
    %v2599 = vunpack.c.l.b16 %v2583
    %v2600 = vunpack.c.l.b16 %v2584
    %v2601 = vunpack.c.l.b16 %v2585
    %v2602 = vunpack.c.l.b16 %v2586
    %v2603 = vpack.c.b16 %v2600, %v2599
    %v2604 = vpack.c.b16 %v2602, %v2601
    %v2608 = vsel %vm122, %v2581, 0
    %2610 = vmatprep.subr.bf16.mxu0 0
    %2611 = vmatpush1.bf16.msra.mxu0 0
    %2612 = vmatprep.subr.bf16.mxu0 0
    %2613 = vmatpush1.bf16.msra.mxu0 0
    %2614 = vmatprep.subr.bf16.mxu0 0
    %2615 = vmatpush1.bf16.msra.mxu0 0
    %2616 = vmatprep.subr.bf16.mxu0 0
    %2617 = vmatpush1.bf16.msra.mxu0 0
    %2618 = vmatprep.subr.bf16.mxu0 0
    %2619 = vmatpush1.bf16.msra.mxu0 0
    %2620 = vmatprep.subr.bf16.mxu0 0
    %2621 = vmatpush1.bf16.msra.mxu0 0
    %2622 = vmatprep.subr.bf16.mxu0 0
    %2623 = vmatpush1.bf16.msra.mxu0 %v2604
    %2624 = vmatprep.subr.bf16.mxu0 0
    %2625 = vmatpush1.bf16.msra.mxu0 %v2603
    %2626 = vmatprep.subr.bf16.mxu0 0
    %2627 = vmatpush2.bf16.msra.mxu0 0
    %2628 = vmatprep.subr.bf16.mxu0 0
    %2629 = vmatpush2.bf16.msra.mxu0 0
    %2630 = vmatprep.subr.bf16.mxu0 0
    %2631 = vmatpush2.bf16.msra.mxu0 0
    %2632 = vmatprep.subr.bf16.mxu0 0
    %2633 = vmatpush2.bf16.msra.mxu0 0
    %2634 = vmatprep.subr.bf16.mxu0 0
    %2635 = vmatpush2.bf16.msra.mxu0 0
    %2636 = vmatprep.subr.bf16.mxu0 0
    %2637 = vmatpush2.bf16.msra.mxu0 0
    %2638 = vmatprep.subr.bf16.mxu0 0
    %2639 = vmatpush2.bf16.msra.mxu0 0
    %2640 = vmatprep.subr.bf16.mxu0 0
    %2641 = vmatpush2.bf16.msra.mxu0 0
    %2642 = vmatprep.mubr.bf16.mxu0 0
    %2643 = vmatmul.mubr.bf16.gmra.mxu0 %v2608
    %v2644 = vpop.f32.mrf.mxu0
    %v2645 = vadd.f32 %v2593, %v2644
    %v2646 = vpop.f32.mrf.mxu0
    %v2647 = vpop.f32.mrf.mxu0
    %v2648 = vadd.f32 %v2593, %v2647
    %v2649 = vpop.f32.mrf.mxu0
    %2650 = vdwg.mxu0
    %v2651 = vmax.f32 %v2645, 0.0
    %v2652 = vmax.f32 %v2648, 0.0
    %v2653 = vpack.c.bf16 %v2652, %v2651
    %s2654 = scalar_lea.vmem %s10, 32
    %v2655 = vld [vmem:[%s2654] sm:$0xf]
    %v2656 = vld [vmem:[%s2654 + $0x4] sm:$0xf]
    %v2657 = vld [vmem:[%s2654 + $0x8] sm:$0xf]
    %v2658 = vld [vmem:[%s2654 + $0xc] sm:$0xf]
    %v2659 = vld [vmem:[%s2654 + $0x10] sm:$0xf]
    %v2660 = vld [vmem:[%s2654 + $0x14] sm:$0xf]
    %v2661 = vld [vmem:[%s2654 + $0x18] sm:$0xf]
    %v2662 = vld [vmem:[%s2654 + $0x1c] sm:$0xf]
    %v2671 = vunpack.c.l.b16 %v2655
    %v2672 = vunpack.c.l.b16 %v2656
    %v2673 = vunpack.c.l.b16 %v2657
    %v2674 = vunpack.c.l.b16 %v2658
    %v2675 = vunpack.c.l.b16 %v2659
    %v2676 = vunpack.c.l.b16 %v2660
    %v2677 = vunpack.c.l.b16 %v2661
    %v2678 = vunpack.c.l.b16 %v2662
    %v2679 = vpack.c.b16 %v2672, %v2671
    %v2680 = vpack.c.b16 %v2674, %v2673
    %v2681 = vpack.c.b16 %v2676, %v2675
    %v2682 = vpack.c.b16 %v2678, %v2677
    %v2688 = vsel %vm423, %v2653, 0
    %2690 = vmatprep.subr.bf16.mxu0 0
    %2691 = vmatpush1.bf16.msra.mxu0 0
    %2692 = vmatprep.subr.bf16.mxu0 0
    %2693 = vmatpush1.bf16.msra.mxu0 0
    %2694 = vmatprep.subr.bf16.mxu0 0
    %2695 = vmatpush1.bf16.msra.mxu0 0
    %2696 = vmatprep.subr.bf16.mxu0 0
    %2697 = vmatpush1.bf16.msra.mxu0 0
    %2698 = vmatprep.subr.bf16.mxu0 0
    %2699 = vmatpush1.bf16.msra.mxu0 %v2682
    %2700 = vmatprep.subr.bf16.mxu0 0
    %2701 = vmatpush1.bf16.msra.mxu0 %v2681
    %2702 = vmatprep.subr.bf16.mxu0 0
    %2703 = vmatpush1.bf16.msra.mxu0 %v2680
    %2704 = vmatprep.subr.bf16.mxu0 0
    %2705 = vmatpush1.bf16.msra.mxu0 %v2679
    %2706 = vmatprep.subr.bf16.mxu0 0
    %2707 = vmatpush2.bf16.msra.mxu0 0
    %2708 = vmatprep.subr.bf16.mxu0 0
    %2709 = vmatpush2.bf16.msra.mxu0 0
    %2710 = vmatprep.subr.bf16.mxu0 0
    %2711 = vmatpush2.bf16.msra.mxu0 0
    %2712 = vmatprep.subr.bf16.mxu0 0
    %2713 = vmatpush2.bf16.msra.mxu0 0
    %2714 = vmatprep.subr.bf16.mxu0 0
    %2715 = vmatpush2.bf16.msra.mxu0 0
    %2716 = vmatprep.subr.bf16.mxu0 0
    %2717 = vmatpush2.bf16.msra.mxu0 0
    %2718 = vmatprep.subr.bf16.mxu0 0
    %2719 = vmatpush2.bf16.msra.mxu0 0
    %2720 = vmatprep.subr.bf16.mxu0 0
    %2721 = vmatpush2.bf16.msra.mxu0 0
    %2722 = vmatprep.mubr.bf16.mxu0 0
    %2723 = vmatmul.mubr.bf16.gmra.mxu0 %v2688
    %v2724 = vpop.f32.mrf.mxu0
    %v2725 = vadd.f32 0.0, %v2724
    %v2726 = vpop.f32.mrf.mxu0
    %v2727 = vpop.f32.mrf.mxu0
    %v2728 = vadd.f32 0.0, %v2727
    %v2729 = vpop.f32.mrf.mxu0
    %2730 = vdwg.mxu0
    %v2731 = vadd.f32 %v2527, %v2725
    %v2732 = vadd.f32 %v2528, %v2728
    %v2733 = vlaneseq
    %v2734 = vshrl.u32 %v2733, 7
    %v2735 = vsub.s32 1, %v2734
    %v2736 = vrot.slane %v1474, %v2735
    %v2737 = vadd.f32 %v2731, %v2736
    %v2738 = vadd.f32 %v2732, %v2736
    %v2739 = vld [vmem:[%s15] sm:$0x3]
    %v2740 = vsel %vm122, %v2737, 0.0
    %2741 = vadd.xlane.f32.xlu0 %v2740
    %v2742 = vpop.xlane.xlu0 %2741
    %v2743 = vsel %vm122, %v2738, 0.0
    %2744 = vadd.xlane.f32.xlu0 %v2743
    %v2745 = vpop.xlane.xlu0 %2744
    %v2746 = vmul.f32 %v2742, %v129
    %v2747 = vmul.f32 %v2745, %v129
    %v2748 = vsub.f32 %v2737, %v2746
    %v2749 = vsub.f32 %v2738, %v2747
    %v2750 = vmul.f32 %v2748, %v2748
    %v2751 = vmul.f32 %v2749, %v2749
    %v2752 = vsel %vm122, %v2750, 0.0
    %2753 = vadd.xlane.f32.xlu0 %v2752
    %v2754 = vpop.xlane.xlu0 %2753
    %v2755 = vsel %vm122, %v2751, 0.0
    %2756 = vadd.xlane.f32.xlu0 %v2755
    %v2757 = vpop.xlane.xlu0 %2756
    %v2758 = vmul.f32 %v2754, 0.032258064
    %v2759 = vmul.f32 %v2757, 0.032258064
    %v2760 = vrsqrt.pop %v2758
    %v2761 = vmul.f32 %v2758, %v2760
    %vm2762 = vcmp.eq.f32.partialorder %v2758, inf
    %v2763 = vsel %vm2762, %v2758, %v2761
    %vm2764 = vcmp.eq.f32.partialorder %v2758, 0.0
    %v2765 = vand.u32 %v2758, 2147483648
    %v2766 = vsel %vm2764, %v2765, %v2763
    %v2767 = vrsqrt.pop %v2759
    %v2768 = vmul.f32 %v2759, %v2767
    %vm2769 = vcmp.eq.f32.partialorder %v2759, inf
    %v2770 = vsel %vm2769, %v2759, %v2768
    %vm2771 = vcmp.eq.f32.partialorder %v2759, 0.0
    %v2772 = vand.u32 %v2759, 2147483648
    %v2773 = vsel %vm2771, %v2772, %v2770
    %v2774 = vlaneseq
    %v2775 = vshrl.u32 %v2774, 7
    %v2776 = vsub.s32 0, %v2775
    %v2777 = vrot.slane %v2739, %v2776
    %v2778 = vmul.f32 %v2777, %v2748
    %v2779 = vmul.f32 %v2777, %v2749
    %v2780 = vadd.f32 %v2766, 1e-06
    %v2781 = vadd.f32 %v2773, 1e-06
    %v2782 = vrcp.pop %v2780
    %v2783 = vmul.f32 %v2778, %v2782
    %v2784 = vrcp.pop %v2781
    %v2785 = vmul.f32 %v2779, %v2784
    %v2786 = vlaneseq
    %v2787 = vshrl.u32 %v2786, 7
    %v2788 = vsub.s32 1, %v2787
    %v2789 = vrot.slane %v2739, %v2788
    %v2790 = vadd.f32 %v2783, %v2789
    %v2791 = vadd.f32 %v2785, %v2789
    %2792 = vst.msk [vmem:[#allocation7] sm:$0xff] %vm122, %v2790
    %2793 = vst.msk [vmem:[#allocation7 + $0x8] sm:$0xff] %vm122, %v2791
    // Predicated region
    $region74: #{tpu_custom_call.1} parent=1 // pred_check
      _
    $region75: #{tpu_custom_call.1} parent=1 // pred_check_branch
      %2795 = sbr.rel (0) target = $region77
    $region76: #{tpu_custom_call.1} parent=1 // pred_region
      %s2797 = ssub.s32 256, 256
      %2798 = vsyncadd [#allocation4], %s2797
      %s2799 = sshll.u32 [#allocation7], 4
      %s2800 = int_to_ptr.vmem [resolvable:$true] %s2799
      %2805 = dma.vmem_to_hbm [thread:$0]  %s2800, 256, %s16, [#allocation4], 128, 128, 8
    $region77: #{tpu_custom_call.1} parent=1 // pred_fallthru
      _
    // Predicated region
    $region78: #{tpu_custom_call.1} parent=1 // pred_check
      _
    $region79: #{tpu_custom_call.1} parent=1 // pred_check_branch
      %2807 = sbr.rel (0) target = $region81
    $region80: #{tpu_custom_call.1} parent=1 // pred_region
      %2808 = dma.done [#allocation4], 256
    $region81: #{tpu_custom_call.1} parent=1 // pred_fallthru
      _
    %2809 = vsyncpa [#allocation3], 1
    %2810 = vsyncpa [#allocation6], 1
    %2811 = vsyncpa [#allocation4], 1

</llo_original>
